<compile_context>
chip_gen: v7x
topology: tpu7x:2x2x1
jax: 0.10.0
libtpu: 0.0.40
codegen_flags: <defaults>
</compile_context>

<pallas_src>
import functools

import jax
import jax.numpy as jnp
from jax.experimental import pallas as pl
from jax.experimental.pallas import tpu as pltpu


# ----------------------------- Pallas kernel ---------------------------------
def contrastive_kernel(xp_ref, wc_ref, bc_ref, w1_ref, b1_ref, w2_ref, b2_ref,
                       o_ref, *, B, C, H, W):
    # xp_ref: (B, H+2, W+2, C) f32   zero-padded NHWC input
    # wc_ref: (9, C, D)        bf16  conv taps (t = kh*3 + kw), wc[t,c,d]=W[d,c,kh,kw]
    # bc_ref: (1, D)           f32   conv bias
    # w1_ref: (D, D)  bf16, b1_ref: (1, D)  f32   -- head layer 1
    # w2_ref: (D, F)  bf16, b2_ref: (1, F)  f32   -- head layer 2
    # o_ref : (B, F)           f32   L2-normalized features
    S = H * W
    M = B * S
    D = wc_ref.shape[2]

    # --- backbone conv: im2col fused in-kernel as 9 accumulated shifted matmuls ---
    acc = jnp.zeros((M, D), jnp.float32)
    for t in range(9):                       # static unroll (3x3 taps)
        kh, kw = t // 3, t % 3
        tap = xp_ref[:, kh:kh + H, kw:kw + W, :]            # (B, H, W, C) static slice
        tap = tap.reshape(M, C).astype(jnp.bfloat16)        # flat rows -> single 2-D dot
        acc = acc + jnp.dot(tap, wc_ref[t],
                            preferred_element_type=jnp.float32)
    conv = jnp.maximum(acc + bc_ref[...], 0.0)              # bias + ReLU, f32 (VPU)

    # --- global average pool on the MXU: feat = pool @ conv, pool[b,m]=1/S iff m in batch b ---
    b_idx = jax.lax.broadcasted_iota(jnp.int32, (B, M), 0)
    m_idx = jax.lax.broadcasted_iota(jnp.int32, (B, M), 1)
    lo = b_idx * S
    in_row = (m_idx >= lo) & (m_idx < lo + S)
    pool = jnp.where(in_row, 1.0 / S, 0.0).astype(jnp.bfloat16)   # 1/S exact in bf16 (pow2)
    feat = jnp.dot(pool, conv.astype(jnp.bfloat16),
                   preferred_element_type=jnp.float32)            # (B, D) f32

    # --- contrastive head: Linear -> ReLU -> Linear (bf16 operands, f32 accum) ---
    h = jnp.dot(feat.astype(jnp.bfloat16), w1_ref[...],
                preferred_element_type=jnp.float32) + b1_ref[...]
    h = jnp.maximum(h, 0.0)
    z = jnp.dot(h.astype(jnp.bfloat16), w2_ref[...],
                preferred_element_type=jnp.float32) + b2_ref[...]

    # --- F.normalize(dim=1): z * rsqrt(max(sum(z^2), eps^2)), eps = 1e-12 ---
    ss = jnp.sum(z * z, axis=1, keepdims=True)
    o_ref[...] = (z * jax.lax.rsqrt(jnp.maximum(ss, 1e-24))).astype(o_ref.dtype)


# ------------------------------- wrapper --------------------------------------
def contrastive_forward(x, params):
    """Full forward of ContrastiveModel (conv backbone + mlp head + normalize)."""
    B, C, H, W = x.shape
    D = params['wconv'].shape[0]
    F_dim = params['w2'].shape[1]

    # Only wrapper glue: NCHW -> NHWC + zero pad (no 9x im2col expansion in HBM).
    xp = jnp.pad(jnp.transpose(x, (0, 2, 3, 1)),
                 ((0, 0), (1, 1), (1, 1), (0, 0))).astype(jnp.float32)

    # Weight prep: OIHW (D,C,3,3) -> 9 taps (9,C,D); MXU operands in bf16, biases f32.
    wc = jnp.transpose(params['wconv'], (2, 3, 1, 0)).reshape(9, C, D)
    wc = wc.astype(jnp.bfloat16)
    w1 = params['w1'].astype(jnp.bfloat16)
    w2 = params['w2'].astype(jnp.bfloat16)
    bc = params['bc'].astype(jnp.float32)
    b1 = params['b1'].astype(jnp.float32)
    b2 = params['b2'].astype(jnp.float32)

    kernel = functools.partial(contrastive_kernel, B=B, C=C, H=H, W=W)
    vmem = pl.BlockSpec(memory_space=pltpu.MemorySpace.VMEM)  # full arrays resident
    # Gridless: whole problem is a few hundred KiB of VMEM. If B / H*W grow,
    # add grid=(B//bm,) with batch-tiled BlockSpecs and dimension_semantics=("parallel",).
    return pl.pallas_call(
        kernel,
        out_shape=jax.ShapeDtypeStruct((B, F_dim), jnp.float32),
        in_specs=[vmem] * 7,
        out_specs=vmem,
    )(xp, wc, bc, w1, b1, w2, b2)


# --------------------------- pure-JAX reference --------------------------------
def reference_forward(x, params):
    """f32 reference using a real convolution (independent of the kernel's im2col)."""
    conv = jax.lax.conv_general_dilated(
        x, params['wconv'], window_strides=(1, 1), padding=((1, 1), (1, 1)),
        dimension_numbers=('NCHW', 'OIHW', 'NCHW'))
    conv = jnp.maximum(conv + params['bc'].reshape(1, -1, 1, 1), 0.0)
    feat = jnp.mean(conv, axis=(2, 3))                       # global average pool
    h = jnp.maximum(feat @ params['w1'] + params['b1'][0], 0.0)
    z = h @ params['w2'] + params['b2'][0]
    nrm = jnp.sqrt(jnp.sum(z * z, axis=1, keepdims=True))
    return z / jnp.maximum(nrm, 1e-12)


# --------------------------------- main ----------------------------------------
if __name__ == "__main__":
    # Small shapes consistent with the module's forward.
    B, C, H, W = 2, 4, 16, 16        # input x: NCHW
    D = 32                           # backbone_dim
    F_DIM = 128                      # features_dim (PyTorch default; lane-dense output)

    key = jax.random.PRNGKey(0)
    k_x, k_wc, k_bc, k_w1, k_b1, k_w2, k_b2 = jax.random.split(key, 7)

    x = jax.random.normal(k_x, (B, C, H, W), dtype=jnp.float32)

    # Conv weight kept in PyTorch OIHW layout; Linear weights stored as (in, out).
    params = {
        'wconv': 0.1 * jax.random.normal(k_wc, (D, C, 3, 3), dtype=jnp.float32),
        'bc':    0.1 * jax.random.normal(k_bc, (1, D), dtype=jnp.float32),
        'w1':    0.1 * jax.random.normal(k_w1, (D, D), dtype=jnp.float32),
        'b1':    0.1 * jax.random.normal(k_b1, (1, D), dtype=jnp.float32),
        'w2':    0.1 * jax.random.normal(k_w2, (D, F_DIM), dtype=jnp.float32),
        'b2':    0.1 * jax.random.normal(k_b2, (1, F_DIM), dtype=jnp.float32),
    }

    out = jax.block_until_ready(contrastive_forward(x, params))
    ref = jax.block_until_ready(reference_forward(x, params))

    assert out.shape == (B, F_DIM)
    # Kernel uses bf16 MXU operands (f32 accumulation) -> loosened tolerance vs f32 ref.
    assert jnp.allclose(out, ref, atol=2e-2, rtol=2e-2), "mismatch vs f32 reference"
    # rows are unit-norm (normalize runs fully in f32)
    assert jnp.allclose(jnp.linalg.norm(out, axis=1), 1.0, atol=1e-4)

    print("KERNEL_OK")
</pallas_src>

<mosaic_0001>
module attributes {stable_mosaic.version = 11 : i64} {
  func.func @contrastive_kernel(%arg0: memref<2x18x18x4xf32, #tpu.memory_space<vmem>>, %arg1: memref<9x4x32xbf16, #tpu.memory_space<vmem>>, %arg2: memref<1x32xf32, #tpu.memory_space<vmem>>, %arg3: memref<32x32xbf16, #tpu.memory_space<vmem>>, %arg4: memref<1x32xf32, #tpu.memory_space<vmem>>, %arg5: memref<32x128xbf16, #tpu.memory_space<vmem>>, %arg6: memref<1x128xf32, #tpu.memory_space<vmem>>, %arg7: memref<2x128xf32, #tpu.memory_space<vmem>>) attributes {dimension_semantics = [], scalar_prefetch = 0 : i64, scratch_operands = 0 : i64, tpu.core_type = #tpu.core_type<tc>} {
    %cst = arith.constant 0.000000e+00 : f32
    %0 = vector.broadcast %cst : f32 to vector<512x32xf32>
    %c0 = arith.constant 0 : index
    %c0_0 = arith.constant 0 : index
    %c0_1 = arith.constant 0 : index
    %c0_2 = arith.constant 0 : index
    %1 = vector.load %arg0[%c0, %c0_0, %c0_1, %c0_2] : memref<2x18x18x4xf32, #tpu.memory_space<vmem>>, vector<2x16x16x4xf32>
    %2 = vector.shape_cast %1 : vector<2x16x16x4xf32> to vector<512x4xf32>
    %3 = arith.truncf %2 : vector<512x4xf32> to vector<512x4xbf16>
    %c0_3 = arith.constant 0 : index
    %c0_4 = arith.constant 0 : index
    %c0_5 = arith.constant 0 : index
    %4 = vector.load %arg1[%c0_3, %c0_4, %c0_5] : memref<9x4x32xbf16, #tpu.memory_space<vmem>>, vector<1x4x32xbf16>
    %5 = vector.shape_cast %4 : vector<1x4x32xbf16> to vector<4x32xbf16>
    %cst_6 = arith.constant dense<0.000000e+00> : vector<512x32xf32>
    %6 = tpu.matmul %3, %5, %cst_6 {dimension_numbers = #tpu.dot_dimension_numbers<[1], [0], [0], [1], [0, 0, 1, 1], [], []>} : vector<512x4xbf16>, vector<4x32xbf16>, vector<512x32xf32> -> vector<512x32xf32>
    %7 = arith.addf %0, %6 : vector<512x32xf32>
    %c0_7 = arith.constant 0 : index
    %c0_8 = arith.constant 0 : index
    %c1 = arith.constant 1 : index
    %c0_9 = arith.constant 0 : index
    %8 = vector.load %arg0[%c0_7, %c0_8, %c1, %c0_9] : memref<2x18x18x4xf32, #tpu.memory_space<vmem>>, vector<2x16x16x4xf32>
    %9 = vector.shape_cast %8 : vector<2x16x16x4xf32> to vector<512x4xf32>
    %10 = arith.truncf %9 : vector<512x4xf32> to vector<512x4xbf16>
    %c1_10 = arith.constant 1 : index
    %c0_11 = arith.constant 0 : index
    %c0_12 = arith.constant 0 : index
    %11 = vector.load %arg1[%c1_10, %c0_11, %c0_12] : memref<9x4x32xbf16, #tpu.memory_space<vmem>>, vector<1x4x32xbf16>
    %12 = vector.shape_cast %11 : vector<1x4x32xbf16> to vector<4x32xbf16>
    %cst_13 = arith.constant dense<0.000000e+00> : vector<512x32xf32>
    %13 = tpu.matmul %10, %12, %cst_13 {dimension_numbers = #tpu.dot_dimension_numbers<[1], [0], [0], [1], [0, 0, 1, 1], [], []>} : vector<512x4xbf16>, vector<4x32xbf16>, vector<512x32xf32> -> vector<512x32xf32>
    %14 = arith.addf %7, %13 : vector<512x32xf32>
    %c0_14 = arith.constant 0 : index
    %c0_15 = arith.constant 0 : index
    %c2 = arith.constant 2 : index
    %c0_16 = arith.constant 0 : index
    %15 = vector.load %arg0[%c0_14, %c0_15, %c2, %c0_16] : memref<2x18x18x4xf32, #tpu.memory_space<vmem>>, vector<2x16x16x4xf32>
    %16 = vector.shape_cast %15 : vector<2x16x16x4xf32> to vector<512x4xf32>
    %17 = arith.truncf %16 : vector<512x4xf32> to vector<512x4xbf16>
    %c2_17 = arith.constant 2 : index
    %c0_18 = arith.constant 0 : index
    %c0_19 = arith.constant 0 : index
    %18 = vector.load %arg1[%c2_17, %c0_18, %c0_19] : memref<9x4x32xbf16, #tpu.memory_space<vmem>>, vector<1x4x32xbf16>
    %19 = vector.shape_cast %18 : vector<1x4x32xbf16> to vector<4x32xbf16>
    %cst_20 = arith.constant dense<0.000000e+00> : vector<512x32xf32>
    %20 = tpu.matmul %17, %19, %cst_20 {dimension_numbers = #tpu.dot_dimension_numbers<[1], [0], [0], [1], [0, 0, 1, 1], [], []>} : vector<512x4xbf16>, vector<4x32xbf16>, vector<512x32xf32> -> vector<512x32xf32>
    %21 = arith.addf %14, %20 : vector<512x32xf32>
    %c0_21 = arith.constant 0 : index
    %c1_22 = arith.constant 1 : index
    %c0_23 = arith.constant 0 : index
    %c0_24 = arith.constant 0 : index
    %22 = vector.load %arg0[%c0_21, %c1_22, %c0_23, %c0_24] : memref<2x18x18x4xf32, #tpu.memory_space<vmem>>, vector<2x16x16x4xf32>
    %23 = vector.shape_cast %22 : vector<2x16x16x4xf32> to vector<512x4xf32>
    %24 = arith.truncf %23 : vector<512x4xf32> to vector<512x4xbf16>
    %c3 = arith.constant 3 : index
    %c0_25 = arith.constant 0 : index
    %c0_26 = arith.constant 0 : index
    %25 = vector.load %arg1[%c3, %c0_25, %c0_26] : memref<9x4x32xbf16, #tpu.memory_space<vmem>>, vector<1x4x32xbf16>
    %26 = vector.shape_cast %25 : vector<1x4x32xbf16> to vector<4x32xbf16>
    %cst_27 = arith.constant dense<0.000000e+00> : vector<512x32xf32>
    %27 = tpu.matmul %24, %26, %cst_27 {dimension_numbers = #tpu.dot_dimension_numbers<[1], [0], [0], [1], [0, 0, 1, 1], [], []>} : vector<512x4xbf16>, vector<4x32xbf16>, vector<512x32xf32> -> vector<512x32xf32>
    %28 = arith.addf %21, %27 : vector<512x32xf32>
    %c0_28 = arith.constant 0 : index
    %c1_29 = arith.constant 1 : index
    %c1_30 = arith.constant 1 : index
    %c0_31 = arith.constant 0 : index
    %29 = vector.load %arg0[%c0_28, %c1_29, %c1_30, %c0_31] : memref<2x18x18x4xf32, #tpu.memory_space<vmem>>, vector<2x16x16x4xf32>
    %30 = vector.shape_cast %29 : vector<2x16x16x4xf32> to vector<512x4xf32>
    %31 = arith.truncf %30 : vector<512x4xf32> to vector<512x4xbf16>
    %c4 = arith.constant 4 : index
    %c0_32 = arith.constant 0 : index
    %c0_33 = arith.constant 0 : index
    %32 = vector.load %arg1[%c4, %c0_32, %c0_33] : memref<9x4x32xbf16, #tpu.memory_space<vmem>>, vector<1x4x32xbf16>
    %33 = vector.shape_cast %32 : vector<1x4x32xbf16> to vector<4x32xbf16>
    %cst_34 = arith.constant dense<0.000000e+00> : vector<512x32xf32>
    %34 = tpu.matmul %31, %33, %cst_34 {dimension_numbers = #tpu.dot_dimension_numbers<[1], [0], [0], [1], [0, 0, 1, 1], [], []>} : vector<512x4xbf16>, vector<4x32xbf16>, vector<512x32xf32> -> vector<512x32xf32>
    %35 = arith.addf %28, %34 : vector<512x32xf32>
    %c0_35 = arith.constant 0 : index
    %c1_36 = arith.constant 1 : index
    %c2_37 = arith.constant 2 : index
    %c0_38 = arith.constant 0 : index
    %36 = vector.load %arg0[%c0_35, %c1_36, %c2_37, %c0_38] : memref<2x18x18x4xf32, #tpu.memory_space<vmem>>, vector<2x16x16x4xf32>
    %37 = vector.shape_cast %36 : vector<2x16x16x4xf32> to vector<512x4xf32>
    %38 = arith.truncf %37 : vector<512x4xf32> to vector<512x4xbf16>
    %c5 = arith.constant 5 : index
    %c0_39 = arith.constant 0 : index
    %c0_40 = arith.constant 0 : index
    %39 = vector.load %arg1[%c5, %c0_39, %c0_40] : memref<9x4x32xbf16, #tpu.memory_space<vmem>>, vector<1x4x32xbf16>
    %40 = vector.shape_cast %39 : vector<1x4x32xbf16> to vector<4x32xbf16>
    %cst_41 = arith.constant dense<0.000000e+00> : vector<512x32xf32>
    %41 = tpu.matmul %38, %40, %cst_41 {dimension_numbers = #tpu.dot_dimension_numbers<[1], [0], [0], [1], [0, 0, 1, 1], [], []>} : vector<512x4xbf16>, vector<4x32xbf16>, vector<512x32xf32> -> vector<512x32xf32>
    %42 = arith.addf %35, %41 : vector<512x32xf32>
    %c0_42 = arith.constant 0 : index
    %c2_43 = arith.constant 2 : index
    %c0_44 = arith.constant 0 : index
    %c0_45 = arith.constant 0 : index
    %43 = vector.load %arg0[%c0_42, %c2_43, %c0_44, %c0_45] : memref<2x18x18x4xf32, #tpu.memory_space<vmem>>, vector<2x16x16x4xf32>
    %44 = vector.shape_cast %43 : vector<2x16x16x4xf32> to vector<512x4xf32>
    %45 = arith.truncf %44 : vector<512x4xf32> to vector<512x4xbf16>
    %c6 = arith.constant 6 : index
    %c0_46 = arith.constant 0 : index
    %c0_47 = arith.constant 0 : index
    %46 = vector.load %arg1[%c6, %c0_46, %c0_47] : memref<9x4x32xbf16, #tpu.memory_space<vmem>>, vector<1x4x32xbf16>
    %47 = vector.shape_cast %46 : vector<1x4x32xbf16> to vector<4x32xbf16>
    %cst_48 = arith.constant dense<0.000000e+00> : vector<512x32xf32>
    %48 = tpu.matmul %45, %47, %cst_48 {dimension_numbers = #tpu.dot_dimension_numbers<[1], [0], [0], [1], [0, 0, 1, 1], [], []>} : vector<512x4xbf16>, vector<4x32xbf16>, vector<512x32xf32> -> vector<512x32xf32>
    %49 = arith.addf %42, %48 : vector<512x32xf32>
    %c0_49 = arith.constant 0 : index
    %c2_50 = arith.constant 2 : index
    %c1_51 = arith.constant 1 : index
    %c0_52 = arith.constant 0 : index
    %50 = vector.load %arg0[%c0_49, %c2_50, %c1_51, %c0_52] : memref<2x18x18x4xf32, #tpu.memory_space<vmem>>, vector<2x16x16x4xf32>
    %51 = vector.shape_cast %50 : vector<2x16x16x4xf32> to vector<512x4xf32>
    %52 = arith.truncf %51 : vector<512x4xf32> to vector<512x4xbf16>
    %c7 = arith.constant 7 : index
    %c0_53 = arith.constant 0 : index
    %c0_54 = arith.constant 0 : index
    %53 = vector.load %arg1[%c7, %c0_53, %c0_54] : memref<9x4x32xbf16, #tpu.memory_space<vmem>>, vector<1x4x32xbf16>
    %54 = vector.shape_cast %53 : vector<1x4x32xbf16> to vector<4x32xbf16>
    %cst_55 = arith.constant dense<0.000000e+00> : vector<512x32xf32>
    %55 = tpu.matmul %52, %54, %cst_55 {dimension_numbers = #tpu.dot_dimension_numbers<[1], [0], [0], [1], [0, 0, 1, 1], [], []>} : vector<512x4xbf16>, vector<4x32xbf16>, vector<512x32xf32> -> vector<512x32xf32>
    %56 = arith.addf %49, %55 : vector<512x32xf32>
    %c0_56 = arith.constant 0 : index
    %c2_57 = arith.constant 2 : index
    %c2_58 = arith.constant 2 : index
    %c0_59 = arith.constant 0 : index
    %57 = vector.load %arg0[%c0_56, %c2_57, %c2_58, %c0_59] : memref<2x18x18x4xf32, #tpu.memory_space<vmem>>, vector<2x16x16x4xf32>
    %58 = vector.shape_cast %57 : vector<2x16x16x4xf32> to vector<512x4xf32>
    %59 = arith.truncf %58 : vector<512x4xf32> to vector<512x4xbf16>
    %c8 = arith.constant 8 : index
    %c0_60 = arith.constant 0 : index
    %c0_61 = arith.constant 0 : index
    %60 = vector.load %arg1[%c8, %c0_60, %c0_61] : memref<9x4x32xbf16, #tpu.memory_space<vmem>>, vector<1x4x32xbf16>
    %61 = vector.shape_cast %60 : vector<1x4x32xbf16> to vector<4x32xbf16>
    %cst_62 = arith.constant dense<0.000000e+00> : vector<512x32xf32>
    %62 = tpu.matmul %59, %61, %cst_62 {dimension_numbers = #tpu.dot_dimension_numbers<[1], [0], [0], [1], [0, 0, 1, 1], [], []>} : vector<512x4xbf16>, vector<4x32xbf16>, vector<512x32xf32> -> vector<512x32xf32>
    %63 = arith.addf %56, %62 : vector<512x32xf32>
    %c0_63 = arith.constant 0 : index
    %c0_64 = arith.constant 0 : index
    %64 = vector.load %arg2[%c0_63, %c0_64] : memref<1x32xf32, #tpu.memory_space<vmem>>, vector<1x32xf32>
    %65 = vector.broadcast %64 : vector<1x32xf32> to vector<512x32xf32>
    %66 = arith.addf %63, %65 : vector<512x32xf32>
    %cst_65 = arith.constant 0.000000e+00 : f32
    %67 = vector.broadcast %cst_65 : f32 to vector<512x32xf32>
    %68 = arith.maximumf %66, %67 : vector<512x32xf32>
    %69 = tpu.iota {dimensions = array<i32: 0>} : vector<2x512xi32>
    %70 = tpu.iota {dimensions = array<i32: 1>} : vector<2x512xi32>
    %c256_i32 = arith.constant 256 : i32
    %71 = vector.broadcast %c256_i32 : i32 to vector<2x512xi32>
    %72 = arith.muli %69, %71 : vector<2x512xi32>
    %73 = arith.cmpi sge, %70, %72 : vector<2x512xi32>
    %c256_i32_66 = arith.constant 256 : i32
    %74 = vector.broadcast %c256_i32_66 : i32 to vector<2x512xi32>
    %75 = arith.addi %72, %74 : vector<2x512xi32>
    %76 = arith.cmpi slt, %70, %75 : vector<2x512xi32>
    %77 = arith.andi %73, %76 : vector<2x512xi1>
    %cst_67 = arith.constant 3.906250e-03 : f32
    %cst_68 = arith.constant 0.000000e+00 : f32
    %78 = vector.broadcast %cst_67 : f32 to vector<2x512xf32>
    %79 = vector.broadcast %cst_68 : f32 to vector<2x512xf32>
    %80 = arith.select %77, %78, %79 : vector<2x512xi1>, vector<2x512xf32>
    %81 = arith.truncf %80 : vector<2x512xf32> to vector<2x512xbf16>
    %82 = arith.truncf %68 : vector<512x32xf32> to vector<512x32xbf16>
    %cst_69 = arith.constant dense<0.000000e+00> : vector<2x32xf32>
    %83 = tpu.matmul %81, %82, %cst_69 {dimension_numbers = #tpu.dot_dimension_numbers<[1], [0], [0], [1], [0, 0, 1, 1], [], []>} : vector<2x512xbf16>, vector<512x32xbf16>, vector<2x32xf32> -> vector<2x32xf32>
    %84 = arith.truncf %83 : vector<2x32xf32> to vector<2x32xbf16>
    %c0_70 = arith.constant 0 : index
    %c0_71 = arith.constant 0 : index
    %85 = vector.load %arg3[%c0_70, %c0_71] : memref<32x32xbf16, #tpu.memory_space<vmem>>, vector<32x32xbf16>
    %cst_72 = arith.constant dense<0.000000e+00> : vector<2x32xf32>
    %86 = tpu.matmul %84, %85, %cst_72 {dimension_numbers = #tpu.dot_dimension_numbers<[1], [0], [0], [1], [0, 0, 1, 1], [], []>} : vector<2x32xbf16>, vector<32x32xbf16>, vector<2x32xf32> -> vector<2x32xf32>
    %c0_73 = arith.constant 0 : index
    %c0_74 = arith.constant 0 : index
    %87 = vector.load %arg4[%c0_73, %c0_74] : memref<1x32xf32, #tpu.memory_space<vmem>>, vector<1x32xf32>
    %88 = vector.broadcast %87 : vector<1x32xf32> to vector<2x32xf32>
    %89 = arith.addf %86, %88 : vector<2x32xf32>
    %cst_75 = arith.constant 0.000000e+00 : f32
    %90 = vector.broadcast %cst_75 : f32 to vector<2x32xf32>
    %91 = arith.maximumf %89, %90 : vector<2x32xf32>
    %92 = arith.truncf %91 : vector<2x32xf32> to vector<2x32xbf16>
    %c0_76 = arith.constant 0 : index
    %c0_77 = arith.constant 0 : index
    %93 = vector.load %arg5[%c0_76, %c0_77] : memref<32x128xbf16, #tpu.memory_space<vmem>>, vector<32x128xbf16>
    %cst_78 = arith.constant dense<0.000000e+00> : vector<2x128xf32>
    %94 = tpu.matmul %92, %93, %cst_78 {dimension_numbers = #tpu.dot_dimension_numbers<[1], [0], [0], [1], [0, 0, 1, 1], [], []>} : vector<2x32xbf16>, vector<32x128xbf16>, vector<2x128xf32> -> vector<2x128xf32>
    %c0_79 = arith.constant 0 : index
    %c0_80 = arith.constant 0 : index
    %95 = vector.load %arg6[%c0_79, %c0_80] : memref<1x128xf32, #tpu.memory_space<vmem>>, vector<1x128xf32>
    %96 = vector.broadcast %95 : vector<1x128xf32> to vector<2x128xf32>
    %97 = arith.addf %94, %96 : vector<2x128xf32>
    %98 = arith.mulf %97, %97 : vector<2x128xf32>
    %cst_81 = arith.constant dense<0.000000e+00> : vector<2xf32>
    %99 = vector.multi_reduction <add>, %98, %cst_81 [1] : vector<2x128xf32> to vector<2xf32>
    %100 = vector.shape_cast %99 : vector<2xf32> to vector<2x1xf32>
    %cst_82 = arith.constant 1.000000e-24 : f32
    %101 = vector.broadcast %cst_82 : f32 to vector<2x1xf32>
    %102 = arith.maximumf %100, %101 : vector<2x1xf32>
    %103 = math.rsqrt %102 : vector<2x1xf32>
    %104 = vector.broadcast %103 : vector<2x1xf32> to vector<2x128xf32>
    %105 = arith.mulf %97, %104 : vector<2x128xf32>
    %c0_83 = arith.constant 0 : index
    %c0_84 = arith.constant 0 : index
    %106 = vector.load %arg7[%c0_83, %c0_84] : memref<2x128xf32, #tpu.memory_space<vmem>>, vector<2x128xf32>
    tpu.vector_store %arg7[%c0_83, %c0_84], %105 {strides = array<i32>} : memref<2x128xf32, #tpu.memory_space<vmem>>, vector<2x128xf32>,
    return
  }
}

</mosaic_0001>

<llo_original>
// kernel: tpu_custom_call.1
$region0: #{tpu_custom_call.1}
  #allocation0 [shape = 'u32[]', space=smem, size = 0x4, offset = 0x4, fixed_abs, tag = 'smem constant byte address 0x4 - core index']
  #allocation1 [shape = 'u32[144,128]{1,0:T(1,128)}', space=vmem, size = 0x12000, scoped, tag = 'internal scratch']
  %s0 = inlined_call_operand.vmem [shape: f32[2,18,18,4], index: 0, kind: input, shape index: {}]
  %s1 = inlined_call_operand.vmem [shape: bf16[9,4,32], index: 1, kind: input, shape index: {}]
  %s2 = inlined_call_operand.vmem [shape: f32[1,32], index: 2, kind: input, shape index: {}]
  %s3 = inlined_call_operand.vmem [shape: bf16[32,32], index: 3, kind: input, shape index: {}]
  %s4 = inlined_call_operand.vmem [shape: f32[1,32], index: 4, kind: input, shape index: {}]
  %s5 = inlined_call_operand.vmem [shape: bf16[32,128], index: 5, kind: input, shape index: {}]
  %s6 = inlined_call_operand.vmem [shape: f32[1,128], index: 6, kind: input, shape index: {}]
  %s7 = inlined_call_operand.hbm [shape: f32[2,128], index: 7, kind: output, shape index: {}]
  %s8 = sld [smem:[#allocation0]]
  $region38: #{tpu_custom_call.1} parent=0
    _
  %s10 = ssub.s32 1, %s8
  %s11 = scalar_select 0, %s10, %s8
  $region1: #{tpu_custom_call.1} parent=0
    #allocation2 [shape = 'u8[1024]{0}', space=vmem, size = 0x400, scoped, tag = 'output window, operand 0, single buffered']
    #allocation3 [shape = 's32[1]{0}', space=sflag, size = 0x4, scoped, tag = 'scoped memory for tpu_custom_call.1']
    %12 = vsyncpa [#allocation3], 0
    // Predicated region
    $region2: #{tpu_custom_call.1} parent=1 // pred_check
      _
    $region3: #{tpu_custom_call.1} parent=1 // pred_check_branch
      %14 = sbr.rel (0) target = $region5
    $region4: #{tpu_custom_call.1} parent=1 // pred_region
      _
    $region5: #{tpu_custom_call.1} parent=1 // pred_fallthru
      _
    // Predicated region
    $region6: #{tpu_custom_call.1} parent=1 // pred_check
      _
    $region7: #{tpu_custom_call.1} parent=1 // pred_check_branch
      %16 = sbr.rel (0) target = $region9
    $region8: #{tpu_custom_call.1} parent=1 // pred_region
      _
    $region9: #{tpu_custom_call.1} parent=1 // pred_fallthru
      _
    // Predicated region
    $region10: #{tpu_custom_call.1} parent=1 // pred_check
      _
    $region11: #{tpu_custom_call.1} parent=1 // pred_check_branch
      %18 = sbr.rel (0) target = $region13
    $region12: #{tpu_custom_call.1} parent=1 // pred_region
      _
    $region13: #{tpu_custom_call.1} parent=1 // pred_fallthru
      _
    // Predicated region
    $region14: #{tpu_custom_call.1} parent=1 // pred_check
      _
    $region15: #{tpu_custom_call.1} parent=1 // pred_check_branch
      %20 = sbr.rel (0) target = $region17
    $region16: #{tpu_custom_call.1} parent=1 // pred_region
      _
    $region17: #{tpu_custom_call.1} parent=1 // pred_fallthru
      _
    // Predicated region
    $region18: #{tpu_custom_call.1} parent=1 // pred_check
      _
    $region19: #{tpu_custom_call.1} parent=1 // pred_check_branch
      %22 = sbr.rel (0) target = $region21
    $region20: #{tpu_custom_call.1} parent=1 // pred_region
      _
    $region21: #{tpu_custom_call.1} parent=1 // pred_fallthru
      _
    // Predicated region
    $region22: #{tpu_custom_call.1} parent=1 // pred_check
      _
    $region23: #{tpu_custom_call.1} parent=1 // pred_check_branch
      %24 = sbr.rel (0) target = $region25
    $region24: #{tpu_custom_call.1} parent=1 // pred_region
      _
    $region25: #{tpu_custom_call.1} parent=1 // pred_fallthru
      _
    // Predicated region
    $region26: #{tpu_custom_call.1} parent=1 // pred_check
      _
    $region27: #{tpu_custom_call.1} parent=1 // pred_check_branch
      %26 = sbr.rel (0) target = $region29
    $region28: #{tpu_custom_call.1} parent=1 // pred_region
      _
    $region29: #{tpu_custom_call.1} parent=1 // pred_fallthru
      _
    %v28 = vld [vmem:[%s0] sm:$0xff]
    %v29 = vld [vmem:[%s0 + $0x8] sm:$0xff]
    %v30 = vld [vmem:[%s0 + $0x18] sm:$0xff]
    %v31 = vld [vmem:[%s0 + $0x20] sm:$0xff]
    %v32 = vld [vmem:[%s0 + $0x30] sm:$0xff]
    %v33 = vld [vmem:[%s0 + $0x38] sm:$0xff]
    %v34 = vld [vmem:[%s0 + $0x48] sm:$0xff]
    %v35 = vld [vmem:[%s0 + $0x50] sm:$0xff]
    %v36 = vld [vmem:[%s0 + $0x60] sm:$0xff]
    %v37 = vld [vmem:[%s0 + $0x68] sm:$0xff]
    %v38 = vld [vmem:[%s0 + $0x78] sm:$0xff]
    %v39 = vld [vmem:[%s0 + $0x80] sm:$0xff]
    %v40 = vld [vmem:[%s0 + $0x90] sm:$0xff]
    %v41 = vld [vmem:[%s0 + $0x98] sm:$0xff]
    %v42 = vld [vmem:[%s0 + $0xa8] sm:$0xff]
    %v43 = vld [vmem:[%s0 + $0xb0] sm:$0xff]
    %v44 = vld [vmem:[%s0 + $0xc0] sm:$0xff]
    %v45 = vld [vmem:[%s0 + $0xc8] sm:$0xff]
    %v46 = vld [vmem:[%s0 + $0xd8] sm:$0xff]
    %v47 = vld [vmem:[%s0 + $0xe0] sm:$0xff]
    %v48 = vld [vmem:[%s0 + $0xf0] sm:$0xff]
    %v49 = vld [vmem:[%s0 + $0xf8] sm:$0xff]
    %v50 = vld [vmem:[%s0 + $0x108] sm:$0xff]
    %v51 = vld [vmem:[%s0 + $0x110] sm:$0xff]
    %v52 = vld [vmem:[%s0 + $0x120] sm:$0xff]
    %v53 = vld [vmem:[%s0 + $0x128] sm:$0xff]
    %v54 = vld [vmem:[%s0 + $0x138] sm:$0xff]
    %v55 = vld [vmem:[%s0 + $0x140] sm:$0xff]
    %v56 = vld [vmem:[%s0 + $0x150] sm:$0xff]
    %v57 = vld [vmem:[%s0 + $0x158] sm:$0xff]
    %v58 = vld [vmem:[%s0 + $0x168] sm:$0xff]
    %v59 = vld [vmem:[%s0 + $0x170] sm:$0xff]
    %v60 = vld [vmem:[%s0 + $0x1b0] sm:$0xff]
    %v61 = vld [vmem:[%s0 + $0x1b8] sm:$0xff]
    %v62 = vld [vmem:[%s0 + $0x1c8] sm:$0xff]
    %v63 = vld [vmem:[%s0 + $0x1d0] sm:$0xff]
    %v64 = vld [vmem:[%s0 + $0x1e0] sm:$0xff]
    %v65 = vld [vmem:[%s0 + $0x1e8] sm:$0xff]
    %v66 = vld [vmem:[%s0 + $0x1f8] sm:$0xff]
    %v67 = vld [vmem:[%s0 + $0x200] sm:$0xff]
    %v68 = vld [vmem:[%s0 + $0x210] sm:$0xff]
    %v69 = vld [vmem:[%s0 + $0x218] sm:$0xff]
    %v70 = vld [vmem:[%s0 + $0x228] sm:$0xff]
    %v71 = vld [vmem:[%s0 + $0x230] sm:$0xff]
    %v72 = vld [vmem:[%s0 + $0x240] sm:$0xff]
    %v73 = vld [vmem:[%s0 + $0x248] sm:$0xff]
    %v74 = vld [vmem:[%s0 + $0x258] sm:$0xff]
    %v75 = vld [vmem:[%s0 + $0x260] sm:$0xff]
    %v76 = vld [vmem:[%s0 + $0x270] sm:$0xff]
    %v77 = vld [vmem:[%s0 + $0x278] sm:$0xff]
    %v78 = vld [vmem:[%s0 + $0x288] sm:$0xff]
    %v79 = vld [vmem:[%s0 + $0x290] sm:$0xff]
    %v80 = vld [vmem:[%s0 + $0x2a0] sm:$0xff]
    %v81 = vld [vmem:[%s0 + $0x2a8] sm:$0xff]
    %v82 = vld [vmem:[%s0 + $0x2b8] sm:$0xff]
    %v83 = vld [vmem:[%s0 + $0x2c0] sm:$0xff]
    %v84 = vld [vmem:[%s0 + $0x2d0] sm:$0xff]
    %v85 = vld [vmem:[%s0 + $0x2d8] sm:$0xff]
    %v86 = vld [vmem:[%s0 + $0x2e8] sm:$0xff]
    %v87 = vld [vmem:[%s0 + $0x2f0] sm:$0xff]
    %v88 = vld [vmem:[%s0 + $0x300] sm:$0xff]
    %v89 = vld [vmem:[%s0 + $0x308] sm:$0xff]
    %v90 = vld [vmem:[%s0 + $0x318] sm:$0xff]
    %v91 = vld [vmem:[%s0 + $0x320] sm:$0xff]
    %v92 = vpack.c.bf16 %v29, %v28
    %v93 = vpack.c.bf16 %v31, %v30
    %v94 = vpack.c.bf16 %v33, %v32
    %v95 = vpack.c.bf16 %v35, %v34
    %v96 = vpack.c.bf16 %v37, %v36
    %v97 = vpack.c.bf16 %v39, %v38
    %v98 = vpack.c.bf16 %v41, %v40
    %v99 = vpack.c.bf16 %v43, %v42
    %v100 = vpack.c.bf16 %v45, %v44
    %v101 = vpack.c.bf16 %v47, %v46
    %v102 = vpack.c.bf16 %v49, %v48
    %v103 = vpack.c.bf16 %v51, %v50
    %v104 = vpack.c.bf16 %v53, %v52
    %v105 = vpack.c.bf16 %v55, %v54
    %v106 = vpack.c.bf16 %v57, %v56
    %v107 = vpack.c.bf16 %v59, %v58
    %v108 = vpack.c.bf16 %v61, %v60
    %v109 = vpack.c.bf16 %v63, %v62
    %v110 = vpack.c.bf16 %v65, %v64
    %v111 = vpack.c.bf16 %v67, %v66
    %v112 = vpack.c.bf16 %v69, %v68
    %v113 = vpack.c.bf16 %v71, %v70
    %v114 = vpack.c.bf16 %v73, %v72
    %v115 = vpack.c.bf16 %v75, %v74
    %v116 = vpack.c.bf16 %v77, %v76
    %v117 = vpack.c.bf16 %v79, %v78
    %v118 = vpack.c.bf16 %v81, %v80
    %v119 = vpack.c.bf16 %v83, %v82
    %v120 = vpack.c.bf16 %v85, %v84
    %v121 = vpack.c.bf16 %v87, %v86
    %v122 = vpack.c.bf16 %v89, %v88
    %v123 = vpack.c.bf16 %v91, %v90
    %v124 = vld [vmem:[%s1] sm:$0x3]
    %v125 = vld [vmem:[%s0 + $0x1] sm:$0xff]
    %v126 = vld [vmem:[%s0 + $0x9] sm:$0xff]
    %v127 = vld [vmem:[%s0 + $0x19] sm:$0xff]
    %v128 = vld [vmem:[%s0 + $0x21] sm:$0xff]
    %v129 = vld [vmem:[%s0 + $0x31] sm:$0xff]
    %v130 = vld [vmem:[%s0 + $0x39] sm:$0xff]
    %v131 = vld [vmem:[%s0 + $0x49] sm:$0xff]
    %v132 = vld [vmem:[%s0 + $0x51] sm:$0xff]
    %v133 = vld [vmem:[%s0 + $0x61] sm:$0xff]
    %v134 = vld [vmem:[%s0 + $0x69] sm:$0xff]
    %v135 = vld [vmem:[%s0 + $0x79] sm:$0xff]
    %v136 = vld [vmem:[%s0 + $0x81] sm:$0xff]
    %v137 = vld [vmem:[%s0 + $0x91] sm:$0xff]
    %v138 = vld [vmem:[%s0 + $0x99] sm:$0xff]
    %v139 = vld [vmem:[%s0 + $0xa9] sm:$0xff]
    %v140 = vld [vmem:[%s0 + $0xb1] sm:$0xff]
    %v141 = vld [vmem:[%s0 + $0xc1] sm:$0xff]
    %v142 = vld [vmem:[%s0 + $0xc9] sm:$0xff]
    %v143 = vld [vmem:[%s0 + $0xd9] sm:$0xff]
    %v144 = vld [vmem:[%s0 + $0xe1] sm:$0xff]
    %v145 = vld [vmem:[%s0 + $0xf1] sm:$0xff]
    %v146 = vld [vmem:[%s0 + $0xf9] sm:$0xff]
    %v147 = vld [vmem:[%s0 + $0x109] sm:$0xff]
    %v148 = vld [vmem:[%s0 + $0x111] sm:$0xff]
    %v149 = vld [vmem:[%s0 + $0x121] sm:$0xff]
    %v150 = vld [vmem:[%s0 + $0x129] sm:$0xff]
    %v151 = vld [vmem:[%s0 + $0x139] sm:$0xff]
    %v152 = vld [vmem:[%s0 + $0x141] sm:$0xff]
    %v153 = vld [vmem:[%s0 + $0x151] sm:$0xff]
    %v154 = vld [vmem:[%s0 + $0x159] sm:$0xff]
    %v155 = vld [vmem:[%s0 + $0x169] sm:$0xff]
    %v156 = vld [vmem:[%s0 + $0x171] sm:$0xff]
    %v157 = vld [vmem:[%s0 + $0x1b1] sm:$0xff]
    %v158 = vld [vmem:[%s0 + $0x1b9] sm:$0xff]
    %v159 = vld [vmem:[%s0 + $0x1c9] sm:$0xff]
    %v160 = vld [vmem:[%s0 + $0x1d1] sm:$0xff]
    %v161 = vld [vmem:[%s0 + $0x1e1] sm:$0xff]
    %v162 = vld [vmem:[%s0 + $0x1e9] sm:$0xff]
    %v163 = vld [vmem:[%s0 + $0x1f9] sm:$0xff]
    %v164 = vld [vmem:[%s0 + $0x201] sm:$0xff]
    %v165 = vld [vmem:[%s0 + $0x211] sm:$0xff]
    %v166 = vld [vmem:[%s0 + $0x219] sm:$0xff]
    %v167 = vld [vmem:[%s0 + $0x229] sm:$0xff]
    %v168 = vld [vmem:[%s0 + $0x231] sm:$0xff]
    %v169 = vld [vmem:[%s0 + $0x241] sm:$0xff]
    %v170 = vld [vmem:[%s0 + $0x249] sm:$0xff]
    %v171 = vld [vmem:[%s0 + $0x259] sm:$0xff]
    %v172 = vld [vmem:[%s0 + $0x261] sm:$0xff]
    %v173 = vld [vmem:[%s0 + $0x271] sm:$0xff]
    %v174 = vld [vmem:[%s0 + $0x279] sm:$0xff]
    %v175 = vld [vmem:[%s0 + $0x289] sm:$0xff]
    %v176 = vld [vmem:[%s0 + $0x291] sm:$0xff]
    %v177 = vld [vmem:[%s0 + $0x2a1] sm:$0xff]
    %v178 = vld [vmem:[%s0 + $0x2a9] sm:$0xff]
    %v179 = vld [vmem:[%s0 + $0x2b9] sm:$0xff]
    %v180 = vld [vmem:[%s0 + $0x2c1] sm:$0xff]
    %v181 = vld [vmem:[%s0 + $0x2d1] sm:$0xff]
    %v182 = vld [vmem:[%s0 + $0x2d9] sm:$0xff]
    %v183 = vld [vmem:[%s0 + $0x2e9] sm:$0xff]
    %v184 = vld [vmem:[%s0 + $0x2f1] sm:$0xff]
    %v185 = vld [vmem:[%s0 + $0x301] sm:$0xff]
    %v186 = vld [vmem:[%s0 + $0x309] sm:$0xff]
    %v187 = vld [vmem:[%s0 + $0x319] sm:$0xff]
    %v188 = vld [vmem:[%s0 + $0x321] sm:$0xff]
    %v189 = vpack.c.bf16 %v126, %v125
    %v190 = vpack.c.bf16 %v128, %v127
    %v191 = vpack.c.bf16 %v130, %v129
    %v192 = vpack.c.bf16 %v132, %v131
    %v193 = vpack.c.bf16 %v134, %v133
    %v194 = vpack.c.bf16 %v136, %v135
    %v195 = vpack.c.bf16 %v138, %v137
    %v196 = vpack.c.bf16 %v140, %v139
    %v197 = vpack.c.bf16 %v142, %v141
    %v198 = vpack.c.bf16 %v144, %v143
    %v199 = vpack.c.bf16 %v146, %v145
    %v200 = vpack.c.bf16 %v148, %v147
    %v201 = vpack.c.bf16 %v150, %v149
    %v202 = vpack.c.bf16 %v152, %v151
    %v203 = vpack.c.bf16 %v154, %v153
    %v204 = vpack.c.bf16 %v156, %v155
    %v205 = vpack.c.bf16 %v158, %v157
    %v206 = vpack.c.bf16 %v160, %v159
    %v207 = vpack.c.bf16 %v162, %v161
    %v208 = vpack.c.bf16 %v164, %v163
    %v209 = vpack.c.bf16 %v166, %v165
    %v210 = vpack.c.bf16 %v168, %v167
    %v211 = vpack.c.bf16 %v170, %v169
    %v212 = vpack.c.bf16 %v172, %v171
    %v213 = vpack.c.bf16 %v174, %v173
    %v214 = vpack.c.bf16 %v176, %v175
    %v215 = vpack.c.bf16 %v178, %v177
    %v216 = vpack.c.bf16 %v180, %v179
    %v217 = vpack.c.bf16 %v182, %v181
    %v218 = vpack.c.bf16 %v184, %v183
    %v219 = vpack.c.bf16 %v186, %v185
    %v220 = vpack.c.bf16 %v188, %v187
    %s221 = scalar_lea.vmem %s1, 2
    %v222 = vld [vmem:[%s221] sm:$0x3]
    %vm223 = vcmask 31744
    %v225 = vsel %vm223, %v189, 0
    %v228 = vsel %vm223, %v190, 0
    %v231 = vsel %vm223, %v191, 0
    %v234 = vsel %vm223, %v192, 0
    %v237 = vsel %vm223, %v193, 0
    %v240 = vsel %vm223, %v194, 0
    %v243 = vsel %vm223, %v195, 0
    %v246 = vsel %vm223, %v196, 0
    %v249 = vsel %vm223, %v197, 0
    %v252 = vsel %vm223, %v198, 0
    %v255 = vsel %vm223, %v199, 0
    %v258 = vsel %vm223, %v200, 0
    %v261 = vsel %vm223, %v201, 0
    %v264 = vsel %vm223, %v202, 0
    %v267 = vsel %vm223, %v203, 0
    %v270 = vsel %vm223, %v204, 0
    %v273 = vsel %vm223, %v205, 0
    %v276 = vsel %vm223, %v206, 0
    %v279 = vsel %vm223, %v207, 0
    %v282 = vsel %vm223, %v208, 0
    %v285 = vsel %vm223, %v209, 0
    %v288 = vsel %vm223, %v210, 0
    %v291 = vsel %vm223, %v211, 0
    %v294 = vsel %vm223, %v212, 0
    %v297 = vsel %vm223, %v213, 0
    %v300 = vsel %vm223, %v214, 0
    %v303 = vsel %vm223, %v215, 0
    %v306 = vsel %vm223, %v216, 0
    %v309 = vsel %vm223, %v217, 0
    %v312 = vsel %vm223, %v218, 0
    %v315 = vsel %vm223, %v219, 0
    %v318 = vsel %vm223, %v220, 0
    %vm320 = vcmask 1041408
    %v322 = vsel %vm320, %v222, 0
    %324 = vmatprep.subr.bf16.mxu0 0
    %325 = vmatpush1.bf16.msra.mxu0 %v322
    %326 = vmatprep.subr.bf16.mxu0 0
    %327 = vmatpush1.bf16.msra.mxu0 0
    %328 = vmatprep.subr.bf16.mxu0 0
    %329 = vmatpush1.bf16.msra.mxu0 0
    %330 = vmatprep.subr.bf16.mxu0 0
    %331 = vmatpush1.bf16.msra.mxu0 0
    %332 = vmatprep.subr.bf16.mxu0 0
    %333 = vmatpush1.bf16.msra.mxu0 0
    %334 = vmatprep.subr.bf16.mxu0 0
    %335 = vmatpush1.bf16.msra.mxu0 0
    %336 = vmatprep.subr.bf16.mxu0 0
    %337 = vmatpush1.bf16.msra.mxu0 0
    %338 = vmatprep.subr.bf16.mxu0 0
    %339 = vmatpush1.bf16.msra.mxu0 0
    %340 = vmatprep.subr.bf16.mxu0 0
    %341 = vmatpush1.bf16.msra.mxu0 0
    %342 = vmatprep.subr.bf16.mxu0 0
    %343 = vmatpush1.bf16.msra.mxu0 0
    %344 = vmatprep.subr.bf16.mxu0 0
    %345 = vmatpush1.bf16.msra.mxu0 0
    %346 = vmatprep.subr.bf16.mxu0 0
    %347 = vmatpush1.bf16.msra.mxu0 0
    %348 = vmatprep.subr.bf16.mxu0 0
    %349 = vmatpush1.bf16.msra.mxu0 0
    %350 = vmatprep.subr.bf16.mxu0 0
    %351 = vmatpush1.bf16.msra.mxu0 0
    %352 = vmatprep.subr.bf16.mxu0 0
    %353 = vmatpush1.bf16.msra.mxu0 0
    %354 = vmatprep.subr.bf16.mxu0 0
    %355 = vmatpush1.bf16.msra.mxu0 0
    %356 = vmatprep.mubr.bf16.mxu0 0
    %357 = vmatmul.mubr.bf16.gmra.mrb[0].mxu0 %v225
    %v358 = vpop.f32.mrb[0].mxu0
    %v359 = vadd.f32 0.0, %v358
    %v360 = vpop.f32.mrb[0].mxu0
    %v361 = vpop.f32.mrb[0].mxu0
    %v362 = vadd.f32 0.0, %v361
    %v363 = vpop.f32.mrb[0].mxu0
    %364 = vmatprep.mubr.bf16.mxu0 0
    %365 = vmatmul.mubr.bf16.gmra.mrb[0].mxu0 %v228
    %v366 = vpop.f32.mrb[0].mxu0
    %v367 = vadd.f32 0.0, %v366
    %v368 = vpop.f32.mrb[0].mxu0
    %v369 = vpop.f32.mrb[0].mxu0
    %v370 = vadd.f32 0.0, %v369
    %v371 = vpop.f32.mrb[0].mxu0
    %372 = vmatprep.mubr.bf16.mxu0 0
    %373 = vmatmul.mubr.bf16.gmra.mrb[0].mxu0 %v231
    %v374 = vpop.f32.mrb[0].mxu0
    %v375 = vadd.f32 0.0, %v374
    %v376 = vpop.f32.mrb[0].mxu0
    %v377 = vpop.f32.mrb[0].mxu0
    %v378 = vadd.f32 0.0, %v377
    %v379 = vpop.f32.mrb[0].mxu0
    %380 = vmatprep.mubr.bf16.mxu0 0
    %381 = vmatmul.mubr.bf16.gmra.mrb[0].mxu0 %v234
    %v382 = vpop.f32.mrb[0].mxu0
    %v383 = vadd.f32 0.0, %v382
    %v384 = vpop.f32.mrb[0].mxu0
    %v385 = vpop.f32.mrb[0].mxu0
    %v386 = vadd.f32 0.0, %v385
    %v387 = vpop.f32.mrb[0].mxu0
    %388 = vmatprep.mubr.bf16.mxu0 0
    %389 = vmatmul.mubr.bf16.gmra.mrb[0].mxu0 %v237
    %v390 = vpop.f32.mrb[0].mxu0
    %v391 = vadd.f32 0.0, %v390
    %v392 = vpop.f32.mrb[0].mxu0
    %v393 = vpop.f32.mrb[0].mxu0
    %v394 = vadd.f32 0.0, %v393
    %v395 = vpop.f32.mrb[0].mxu0
    %396 = vmatprep.mubr.bf16.mxu0 0
    %397 = vmatmul.mubr.bf16.gmra.mrb[0].mxu0 %v240
    %v398 = vpop.f32.mrb[0].mxu0
    %v399 = vadd.f32 0.0, %v398
    %v400 = vpop.f32.mrb[0].mxu0
    %v401 = vpop.f32.mrb[0].mxu0
    %v402 = vadd.f32 0.0, %v401
    %v403 = vpop.f32.mrb[0].mxu0
    %404 = vmatprep.mubr.bf16.mxu0 0
    %405 = vmatmul.mubr.bf16.gmra.mrb[0].mxu0 %v243
    %v406 = vpop.f32.mrb[0].mxu0
    %v407 = vadd.f32 0.0, %v406
    %v408 = vpop.f32.mrb[0].mxu0
    %v409 = vpop.f32.mrb[0].mxu0
    %v410 = vadd.f32 0.0, %v409
    %v411 = vpop.f32.mrb[0].mxu0
    %412 = vmatprep.mubr.bf16.mxu0 0
    %413 = vmatmul.mubr.bf16.gmra.mrb[0].mxu0 %v246
    %v414 = vpop.f32.mrb[0].mxu0
    %v415 = vadd.f32 0.0, %v414
    %v416 = vpop.f32.mrb[0].mxu0
    %v417 = vpop.f32.mrb[0].mxu0
    %v418 = vadd.f32 0.0, %v417
    %v419 = vpop.f32.mrb[0].mxu0
    %420 = vmatprep.mubr.bf16.mxu0 0
    %421 = vmatmul.mubr.bf16.gmra.mrb[0].mxu0 %v249
    %v422 = vpop.f32.mrb[0].mxu0
    %v423 = vadd.f32 0.0, %v422
    %v424 = vpop.f32.mrb[0].mxu0
    %v425 = vpop.f32.mrb[0].mxu0
    %v426 = vadd.f32 0.0, %v425
    %v427 = vpop.f32.mrb[0].mxu0
    %428 = vmatprep.mubr.bf16.mxu0 0
    %429 = vmatmul.mubr.bf16.gmra.mrb[0].mxu0 %v252
    %v430 = vpop.f32.mrb[0].mxu0
    %v431 = vadd.f32 0.0, %v430
    %v432 = vpop.f32.mrb[0].mxu0
    %v433 = vpop.f32.mrb[0].mxu0
    %v434 = vadd.f32 0.0, %v433
    %v435 = vpop.f32.mrb[0].mxu0
    %436 = vmatprep.mubr.bf16.mxu0 0
    %437 = vmatmul.mubr.bf16.gmra.mrb[0].mxu0 %v255
    %v438 = vpop.f32.mrb[0].mxu0
    %v439 = vadd.f32 0.0, %v438
    %v440 = vpop.f32.mrb[0].mxu0
    %v441 = vpop.f32.mrb[0].mxu0
    %v442 = vadd.f32 0.0, %v441
    %v443 = vpop.f32.mrb[0].mxu0
    %444 = vmatprep.mubr.bf16.mxu0 0
    %445 = vmatmul.mubr.bf16.gmra.mrb[0].mxu0 %v258
    %v446 = vpop.f32.mrb[0].mxu0
    %v447 = vadd.f32 0.0, %v446
    %v448 = vpop.f32.mrb[0].mxu0
    %v449 = vpop.f32.mrb[0].mxu0
    %v450 = vadd.f32 0.0, %v449
    %v451 = vpop.f32.mrb[0].mxu0
    %452 = vmatprep.mubr.bf16.mxu0 0
    %453 = vmatmul.mubr.bf16.gmra.mrb[0].mxu0 %v261
    %v454 = vpop.f32.mrb[0].mxu0
    %v455 = vadd.f32 0.0, %v454
    %v456 = vpop.f32.mrb[0].mxu0
    %v457 = vpop.f32.mrb[0].mxu0
    %v458 = vadd.f32 0.0, %v457
    %v459 = vpop.f32.mrb[0].mxu0
    %460 = vmatprep.mubr.bf16.mxu0 0
    %461 = vmatmul.mubr.bf16.gmra.mrb[0].mxu0 %v264
    %v462 = vpop.f32.mrb[0].mxu0
    %v463 = vadd.f32 0.0, %v462
    %v464 = vpop.f32.mrb[0].mxu0
    %v465 = vpop.f32.mrb[0].mxu0
    %v466 = vadd.f32 0.0, %v465
    %v467 = vpop.f32.mrb[0].mxu0
    %468 = vmatprep.mubr.bf16.mxu0 0
    %469 = vmatmul.mubr.bf16.gmra.mrb[0].mxu0 %v267
    %v470 = vpop.f32.mrb[0].mxu0
    %v471 = vadd.f32 0.0, %v470
    %v472 = vpop.f32.mrb[0].mxu0
    %v473 = vpop.f32.mrb[0].mxu0
    %v474 = vadd.f32 0.0, %v473
    %v475 = vpop.f32.mrb[0].mxu0
    %476 = vmatprep.mubr.bf16.mxu0 0
    %477 = vmatmul.mubr.bf16.gmra.mrb[0].mxu0 %v270
    %v478 = vpop.f32.mrb[0].mxu0
    %v479 = vadd.f32 0.0, %v478
    %v480 = vpop.f32.mrb[0].mxu0
    %v481 = vpop.f32.mrb[0].mxu0
    %v482 = vadd.f32 0.0, %v481
    %v483 = vpop.f32.mrb[0].mxu0
    %484 = vmatprep.mubr.bf16.mxu0 0
    %485 = vmatmul.mubr.bf16.gmra.mrb[0].mxu0 %v273
    %v486 = vpop.f32.mrb[0].mxu0
    %v487 = vadd.f32 0.0, %v486
    %v488 = vpop.f32.mrb[0].mxu0
    %v489 = vpop.f32.mrb[0].mxu0
    %v490 = vadd.f32 0.0, %v489
    %v491 = vpop.f32.mrb[0].mxu0
    %492 = vmatprep.mubr.bf16.mxu0 0
    %493 = vmatmul.mubr.bf16.gmra.mrb[0].mxu0 %v276
    %v494 = vpop.f32.mrb[0].mxu0
    %v495 = vadd.f32 0.0, %v494
    %v496 = vpop.f32.mrb[0].mxu0
    %v497 = vpop.f32.mrb[0].mxu0
    %v498 = vadd.f32 0.0, %v497
    %v499 = vpop.f32.mrb[0].mxu0
    %500 = vmatprep.mubr.bf16.mxu0 0
    %501 = vmatmul.mubr.bf16.gmra.mrb[0].mxu0 %v279
    %v502 = vpop.f32.mrb[0].mxu0
    %v503 = vadd.f32 0.0, %v502
    %v504 = vpop.f32.mrb[0].mxu0
    %v505 = vpop.f32.mrb[0].mxu0
    %v506 = vadd.f32 0.0, %v505
    %v507 = vpop.f32.mrb[0].mxu0
    %508 = vmatprep.mubr.bf16.mxu0 0
    %509 = vmatmul.mubr.bf16.gmra.mrb[0].mxu0 %v282
    %v510 = vpop.f32.mrb[0].mxu0
    %v511 = vadd.f32 0.0, %v510
    %v512 = vpop.f32.mrb[0].mxu0
    %v513 = vpop.f32.mrb[0].mxu0
    %v514 = vadd.f32 0.0, %v513
    %v515 = vpop.f32.mrb[0].mxu0
    %516 = vmatprep.mubr.bf16.mxu0 0
    %517 = vmatmul.mubr.bf16.gmra.mrb[0].mxu0 %v285
    %v518 = vpop.f32.mrb[0].mxu0
    %v519 = vadd.f32 0.0, %v518
    %v520 = vpop.f32.mrb[0].mxu0
    %v521 = vpop.f32.mrb[0].mxu0
    %v522 = vadd.f32 0.0, %v521
    %v523 = vpop.f32.mrb[0].mxu0
    %524 = vmatprep.mubr.bf16.mxu0 0
    %525 = vmatmul.mubr.bf16.gmra.mrb[0].mxu0 %v288
    %v526 = vpop.f32.mrb[0].mxu0
    %v527 = vadd.f32 0.0, %v526
    %v528 = vpop.f32.mrb[0].mxu0
    %v529 = vpop.f32.mrb[0].mxu0
    %v530 = vadd.f32 0.0, %v529
    %v531 = vpop.f32.mrb[0].mxu0
    %532 = vmatprep.mubr.bf16.mxu0 0
    %533 = vmatmul.mubr.bf16.gmra.mrb[0].mxu0 %v291
    %v534 = vpop.f32.mrb[0].mxu0
    %v535 = vadd.f32 0.0, %v534
    %v536 = vpop.f32.mrb[0].mxu0
    %v537 = vpop.f32.mrb[0].mxu0
    %v538 = vadd.f32 0.0, %v537
    %v539 = vpop.f32.mrb[0].mxu0
    %540 = vmatprep.mubr.bf16.mxu0 0
    %541 = vmatmul.mubr.bf16.gmra.mrb[0].mxu0 %v294
    %v542 = vpop.f32.mrb[0].mxu0
    %v543 = vadd.f32 0.0, %v542
    %v544 = vpop.f32.mrb[0].mxu0
    %v545 = vpop.f32.mrb[0].mxu0
    %v546 = vadd.f32 0.0, %v545
    %v547 = vpop.f32.mrb[0].mxu0
    %548 = vmatprep.mubr.bf16.mxu0 0
    %549 = vmatmul.mubr.bf16.gmra.mrb[0].mxu0 %v297
    %v550 = vpop.f32.mrb[0].mxu0
    %v551 = vadd.f32 0.0, %v550
    %v552 = vpop.f32.mrb[0].mxu0
    %v553 = vpop.f32.mrb[0].mxu0
    %v554 = vadd.f32 0.0, %v553
    %v555 = vpop.f32.mrb[0].mxu0
    %556 = vmatprep.mubr.bf16.mxu0 0
    %557 = vmatmul.mubr.bf16.gmra.mrb[0].mxu0 %v300
    %v558 = vpop.f32.mrb[0].mxu0
    %v559 = vadd.f32 0.0, %v558
    %v560 = vpop.f32.mrb[0].mxu0
    %v561 = vpop.f32.mrb[0].mxu0
    %v562 = vadd.f32 0.0, %v561
    %v563 = vpop.f32.mrb[0].mxu0
    %564 = vmatprep.mubr.bf16.mxu0 0
    %565 = vmatmul.mubr.bf16.gmra.mrb[0].mxu0 %v303
    %v566 = vpop.f32.mrb[0].mxu0
    %v567 = vadd.f32 0.0, %v566
    %v568 = vpop.f32.mrb[0].mxu0
    %v569 = vpop.f32.mrb[0].mxu0
    %v570 = vadd.f32 0.0, %v569
    %v571 = vpop.f32.mrb[0].mxu0
    %572 = vmatprep.mubr.bf16.mxu0 0
    %573 = vmatmul.mubr.bf16.gmra.mrb[0].mxu0 %v306
    %v574 = vpop.f32.mrb[0].mxu0
    %v575 = vadd.f32 0.0, %v574
    %v576 = vpop.f32.mrb[0].mxu0
    %v577 = vpop.f32.mrb[0].mxu0
    %v578 = vadd.f32 0.0, %v577
    %v579 = vpop.f32.mrb[0].mxu0
    %580 = vmatprep.mubr.bf16.mxu0 0
    %581 = vmatmul.mubr.bf16.gmra.mrb[0].mxu0 %v309
    %v582 = vpop.f32.mrb[0].mxu0
    %v583 = vadd.f32 0.0, %v582
    %v584 = vpop.f32.mrb[0].mxu0
    %v585 = vpop.f32.mrb[0].mxu0
    %v586 = vadd.f32 0.0, %v585
    %v587 = vpop.f32.mrb[0].mxu0
    %588 = vmatprep.mubr.bf16.mxu0 0
    %589 = vmatmul.mubr.bf16.gmra.mrb[0].mxu0 %v312
    %v590 = vpop.f32.mrb[0].mxu0
    %v591 = vadd.f32 0.0, %v590
    %v592 = vpop.f32.mrb[0].mxu0
    %v593 = vpop.f32.mrb[0].mxu0
    %v594 = vadd.f32 0.0, %v593
    %v595 = vpop.f32.mrb[0].mxu0
    %596 = vmatprep.mubr.bf16.mxu0 0
    %597 = vmatmul.mubr.bf16.gmra.mrb[0].mxu0 %v315
    %v598 = vpop.f32.mrb[0].mxu0
    %v599 = vadd.f32 0.0, %v598
    %v600 = vpop.f32.mrb[0].mxu0
    %v601 = vpop.f32.mrb[0].mxu0
    %v602 = vadd.f32 0.0, %v601
    %v603 = vpop.f32.mrb[0].mxu0
    %604 = vmatprep.mubr.bf16.mxu0 0
    %605 = vmatmul.mubr.bf16.gmra.mrb[0].mxu0 %v318
    %v606 = vpop.f32.mrb[0].mxu0
    %v607 = vadd.f32 0.0, %v606
    %v608 = vpop.f32.mrb[0].mxu0
    %v609 = vpop.f32.mrb[0].mxu0
    %v610 = vadd.f32 0.0, %v609
    %v611 = vpop.f32.mrb[0].mxu0
    %612 = vdwg.mxu0
    %v614 = vsel %vm223, %v92, 0
    %v617 = vsel %vm223, %v93, 0
    %v620 = vsel %vm223, %v94, 0
    %v623 = vsel %vm223, %v95, 0
    %v626 = vsel %vm223, %v96, 0
    %v629 = vsel %vm223, %v97, 0
    %v632 = vsel %vm223, %v98, 0
    %v635 = vsel %vm223, %v99, 0
    %v638 = vsel %vm223, %v100, 0
    %v641 = vsel %vm223, %v101, 0
    %v644 = vsel %vm223, %v102, 0
    %v647 = vsel %vm223, %v103, 0
    %v650 = vsel %vm223, %v104, 0
    %v653 = vsel %vm223, %v105, 0
    %v656 = vsel %vm223, %v106, 0
    %v659 = vsel %vm223, %v107, 0
    %v662 = vsel %vm223, %v108, 0
    %v665 = vsel %vm223, %v109, 0
    %v668 = vsel %vm223, %v110, 0
    %v671 = vsel %vm223, %v111, 0
    %v674 = vsel %vm223, %v112, 0
    %v677 = vsel %vm223, %v113, 0
    %v680 = vsel %vm223, %v114, 0
    %v683 = vsel %vm223, %v115, 0
    %v686 = vsel %vm223, %v116, 0
    %v689 = vsel %vm223, %v117, 0
    %v692 = vsel %vm223, %v118, 0
    %v695 = vsel %vm223, %v119, 0
    %v698 = vsel %vm223, %v120, 0
    %v701 = vsel %vm223, %v121, 0
    %v704 = vsel %vm223, %v122, 0
    %v707 = vsel %vm223, %v123, 0
    %v710 = vsel %vm320, %v124, 0
    %712 = vmatprep.subr.bf16.mxu0 0
    %713 = vmatpush1.bf16.msra.mxu0 %v710
    %714 = vmatprep.subr.bf16.mxu0 0
    %715 = vmatpush1.bf16.msra.mxu0 0
    %716 = vmatprep.subr.bf16.mxu0 0
    %717 = vmatpush1.bf16.msra.mxu0 0
    %718 = vmatprep.subr.bf16.mxu0 0
    %719 = vmatpush1.bf16.msra.mxu0 0
    %720 = vmatprep.subr.bf16.mxu0 0
    %721 = vmatpush1.bf16.msra.mxu0 0
    %722 = vmatprep.subr.bf16.mxu0 0
    %723 = vmatpush1.bf16.msra.mxu0 0
    %724 = vmatprep.subr.bf16.mxu0 0
    %725 = vmatpush1.bf16.msra.mxu0 0
    %726 = vmatprep.subr.bf16.mxu0 0
    %727 = vmatpush1.bf16.msra.mxu0 0
    %728 = vmatprep.subr.bf16.mxu0 0
    %729 = vmatpush1.bf16.msra.mxu0 0
    %730 = vmatprep.subr.bf16.mxu0 0
    %731 = vmatpush1.bf16.msra.mxu0 0
    %732 = vmatprep.subr.bf16.mxu0 0
    %733 = vmatpush1.bf16.msra.mxu0 0
    %734 = vmatprep.subr.bf16.mxu0 0
    %735 = vmatpush1.bf16.msra.mxu0 0
    %736 = vmatprep.subr.bf16.mxu0 0
    %737 = vmatpush1.bf16.msra.mxu0 0
    %738 = vmatprep.subr.bf16.mxu0 0
    %739 = vmatpush1.bf16.msra.mxu0 0
    %740 = vmatprep.subr.bf16.mxu0 0
    %741 = vmatpush1.bf16.msra.mxu0 0
    %742 = vmatprep.subr.bf16.mxu0 0
    %743 = vmatpush1.bf16.msra.mxu0 0
    %744 = vmatprep.mubr.bf16.mxu0 0
    %745 = vmatmul.mubr.bf16.gmra.mrb[0].mxu0 %v614
    %v746 = vpop.f32.mrb[0].mxu0
    %v747 = vadd.f32 %v359, %v746
    %v748 = vpop.f32.mrb[0].mxu0
    %v749 = vpop.f32.mrb[0].mxu0
    %v750 = vadd.f32 %v362, %v749
    %v751 = vpop.f32.mrb[0].mxu0
    %752 = vmatprep.mubr.bf16.mxu0 0
    %753 = vmatmul.mubr.bf16.gmra.mrb[0].mxu0 %v617
    %v754 = vpop.f32.mrb[0].mxu0
    %v755 = vadd.f32 %v367, %v754
    %v756 = vpop.f32.mrb[0].mxu0
    %v757 = vpop.f32.mrb[0].mxu0
    %v758 = vadd.f32 %v370, %v757
    %v759 = vpop.f32.mrb[0].mxu0
    %760 = vmatprep.mubr.bf16.mxu0 0
    %761 = vmatmul.mubr.bf16.gmra.mrb[0].mxu0 %v620
    %v762 = vpop.f32.mrb[0].mxu0
    %v763 = vadd.f32 %v375, %v762
    %v764 = vpop.f32.mrb[0].mxu0
    %v765 = vpop.f32.mrb[0].mxu0
    %v766 = vadd.f32 %v378, %v765
    %v767 = vpop.f32.mrb[0].mxu0
    %768 = vmatprep.mubr.bf16.mxu0 0
    %769 = vmatmul.mubr.bf16.gmra.mrb[0].mxu0 %v623
    %v770 = vpop.f32.mrb[0].mxu0
    %v771 = vadd.f32 %v383, %v770
    %v772 = vpop.f32.mrb[0].mxu0
    %v773 = vpop.f32.mrb[0].mxu0
    %v774 = vadd.f32 %v386, %v773
    %v775 = vpop.f32.mrb[0].mxu0
    %776 = vmatprep.mubr.bf16.mxu0 0
    %777 = vmatmul.mubr.bf16.gmra.mrb[0].mxu0 %v626
    %v778 = vpop.f32.mrb[0].mxu0
    %v779 = vadd.f32 %v391, %v778
    %v780 = vpop.f32.mrb[0].mxu0
    %v781 = vpop.f32.mrb[0].mxu0
    %v782 = vadd.f32 %v394, %v781
    %v783 = vpop.f32.mrb[0].mxu0
    %784 = vmatprep.mubr.bf16.mxu0 0
    %785 = vmatmul.mubr.bf16.gmra.mrb[0].mxu0 %v629
    %v786 = vpop.f32.mrb[0].mxu0
    %v787 = vadd.f32 %v399, %v786
    %v788 = vpop.f32.mrb[0].mxu0
    %v789 = vpop.f32.mrb[0].mxu0
    %v790 = vadd.f32 %v402, %v789
    %v791 = vpop.f32.mrb[0].mxu0
    %792 = vmatprep.mubr.bf16.mxu0 0
    %793 = vmatmul.mubr.bf16.gmra.mrb[0].mxu0 %v632
    %v794 = vpop.f32.mrb[0].mxu0
    %v795 = vadd.f32 %v407, %v794
    %v796 = vpop.f32.mrb[0].mxu0
    %v797 = vpop.f32.mrb[0].mxu0
    %v798 = vadd.f32 %v410, %v797
    %v799 = vpop.f32.mrb[0].mxu0
    %800 = vmatprep.mubr.bf16.mxu0 0
    %801 = vmatmul.mubr.bf16.gmra.mrb[0].mxu0 %v635
    %v802 = vpop.f32.mrb[0].mxu0
    %v803 = vadd.f32 %v415, %v802
    %v804 = vpop.f32.mrb[0].mxu0
    %v805 = vpop.f32.mrb[0].mxu0
    %v806 = vadd.f32 %v418, %v805
    %v807 = vpop.f32.mrb[0].mxu0
    %808 = vmatprep.mubr.bf16.mxu0 0
    %809 = vmatmul.mubr.bf16.gmra.mrb[0].mxu0 %v638
    %v810 = vpop.f32.mrb[0].mxu0
    %v811 = vadd.f32 %v423, %v810
    %v812 = vpop.f32.mrb[0].mxu0
    %v813 = vpop.f32.mrb[0].mxu0
    %v814 = vadd.f32 %v426, %v813
    %v815 = vpop.f32.mrb[0].mxu0
    %816 = vmatprep.mubr.bf16.mxu0 0
    %817 = vmatmul.mubr.bf16.gmra.mrb[0].mxu0 %v641
    %v818 = vpop.f32.mrb[0].mxu0
    %v819 = vadd.f32 %v431, %v818
    %v820 = vpop.f32.mrb[0].mxu0
    %v821 = vpop.f32.mrb[0].mxu0
    %v822 = vadd.f32 %v434, %v821
    %v823 = vpop.f32.mrb[0].mxu0
    %824 = vmatprep.mubr.bf16.mxu0 0
    %825 = vmatmul.mubr.bf16.gmra.mrb[0].mxu0 %v644
    %v826 = vpop.f32.mrb[0].mxu0
    %v827 = vadd.f32 %v439, %v826
    %v828 = vpop.f32.mrb[0].mxu0
    %v829 = vpop.f32.mrb[0].mxu0
    %v830 = vadd.f32 %v442, %v829
    %v831 = vpop.f32.mrb[0].mxu0
    %832 = vmatprep.mubr.bf16.mxu0 0
    %833 = vmatmul.mubr.bf16.gmra.mrb[0].mxu0 %v647
    %v834 = vpop.f32.mrb[0].mxu0
    %v835 = vadd.f32 %v447, %v834
    %v836 = vpop.f32.mrb[0].mxu0
    %v837 = vpop.f32.mrb[0].mxu0
    %v838 = vadd.f32 %v450, %v837
    %v839 = vpop.f32.mrb[0].mxu0
    %840 = vmatprep.mubr.bf16.mxu0 0
    %841 = vmatmul.mubr.bf16.gmra.mrb[0].mxu0 %v650
    %v842 = vpop.f32.mrb[0].mxu0
    %v843 = vadd.f32 %v455, %v842
    %v844 = vpop.f32.mrb[0].mxu0
    %v845 = vpop.f32.mrb[0].mxu0
    %v846 = vadd.f32 %v458, %v845
    %v847 = vpop.f32.mrb[0].mxu0
    %848 = vmatprep.mubr.bf16.mxu0 0
    %849 = vmatmul.mubr.bf16.gmra.mrb[0].mxu0 %v653
    %v850 = vpop.f32.mrb[0].mxu0
    %v851 = vadd.f32 %v463, %v850
    %v852 = vpop.f32.mrb[0].mxu0
    %v853 = vpop.f32.mrb[0].mxu0
    %v854 = vadd.f32 %v466, %v853
    %v855 = vpop.f32.mrb[0].mxu0
    %856 = vmatprep.mubr.bf16.mxu0 0
    %857 = vmatmul.mubr.bf16.gmra.mrb[0].mxu0 %v656
    %v858 = vpop.f32.mrb[0].mxu0
    %v859 = vadd.f32 %v471, %v858
    %v860 = vpop.f32.mrb[0].mxu0
    %v861 = vpop.f32.mrb[0].mxu0
    %v862 = vadd.f32 %v474, %v861
    %v863 = vpop.f32.mrb[0].mxu0
    %864 = vmatprep.mubr.bf16.mxu0 0
    %865 = vmatmul.mubr.bf16.gmra.mrb[0].mxu0 %v659
    %v866 = vpop.f32.mrb[0].mxu0
    %v867 = vadd.f32 %v479, %v866
    %v868 = vpop.f32.mrb[0].mxu0
    %v869 = vpop.f32.mrb[0].mxu0
    %v870 = vadd.f32 %v482, %v869
    %v871 = vpop.f32.mrb[0].mxu0
    %872 = vmatprep.mubr.bf16.mxu0 0
    %873 = vmatmul.mubr.bf16.gmra.mrb[0].mxu0 %v662
    %v874 = vpop.f32.mrb[0].mxu0
    %v875 = vadd.f32 %v487, %v874
    %v876 = vpop.f32.mrb[0].mxu0
    %v877 = vpop.f32.mrb[0].mxu0
    %v878 = vadd.f32 %v490, %v877
    %v879 = vpop.f32.mrb[0].mxu0
    %880 = vmatprep.mubr.bf16.mxu0 0
    %881 = vmatmul.mubr.bf16.gmra.mrb[0].mxu0 %v665
    %v882 = vpop.f32.mrb[0].mxu0
    %v883 = vadd.f32 %v495, %v882
    %v884 = vpop.f32.mrb[0].mxu0
    %v885 = vpop.f32.mrb[0].mxu0
    %v886 = vadd.f32 %v498, %v885
    %v887 = vpop.f32.mrb[0].mxu0
    %888 = vmatprep.mubr.bf16.mxu0 0
    %889 = vmatmul.mubr.bf16.gmra.mrb[0].mxu0 %v668
    %v890 = vpop.f32.mrb[0].mxu0
    %v891 = vadd.f32 %v503, %v890
    %v892 = vpop.f32.mrb[0].mxu0
    %v893 = vpop.f32.mrb[0].mxu0
    %v894 = vadd.f32 %v506, %v893
    %v895 = vpop.f32.mrb[0].mxu0
    %896 = vmatprep.mubr.bf16.mxu0 0
    %897 = vmatmul.mubr.bf16.gmra.mrb[0].mxu0 %v671
    %v898 = vpop.f32.mrb[0].mxu0
    %v899 = vadd.f32 %v511, %v898
    %v900 = vpop.f32.mrb[0].mxu0
    %v901 = vpop.f32.mrb[0].mxu0
    %v902 = vadd.f32 %v514, %v901
    %v903 = vpop.f32.mrb[0].mxu0
    %904 = vmatprep.mubr.bf16.mxu0 0
    %905 = vmatmul.mubr.bf16.gmra.mrb[0].mxu0 %v674
    %v906 = vpop.f32.mrb[0].mxu0
    %v907 = vadd.f32 %v519, %v906
    %v908 = vpop.f32.mrb[0].mxu0
    %v909 = vpop.f32.mrb[0].mxu0
    %v910 = vadd.f32 %v522, %v909
    %v911 = vpop.f32.mrb[0].mxu0
    %912 = vmatprep.mubr.bf16.mxu0 0
    %913 = vmatmul.mubr.bf16.gmra.mrb[0].mxu0 %v677
    %v914 = vpop.f32.mrb[0].mxu0
    %v915 = vadd.f32 %v527, %v914
    %v916 = vpop.f32.mrb[0].mxu0
    %v917 = vpop.f32.mrb[0].mxu0
    %v918 = vadd.f32 %v530, %v917
    %v919 = vpop.f32.mrb[0].mxu0
    %920 = vmatprep.mubr.bf16.mxu0 0
    %921 = vmatmul.mubr.bf16.gmra.mrb[0].mxu0 %v680
    %v922 = vpop.f32.mrb[0].mxu0
    %v923 = vadd.f32 %v535, %v922
    %v924 = vpop.f32.mrb[0].mxu0
    %v925 = vpop.f32.mrb[0].mxu0
    %v926 = vadd.f32 %v538, %v925
    %v927 = vpop.f32.mrb[0].mxu0
    %928 = vmatprep.mubr.bf16.mxu0 0
    %929 = vmatmul.mubr.bf16.gmra.mrb[0].mxu0 %v683
    %v930 = vpop.f32.mrb[0].mxu0
    %v931 = vadd.f32 %v543, %v930
    %v932 = vpop.f32.mrb[0].mxu0
    %v933 = vpop.f32.mrb[0].mxu0
    %v934 = vadd.f32 %v546, %v933
    %v935 = vpop.f32.mrb[0].mxu0
    %936 = vmatprep.mubr.bf16.mxu0 0
    %937 = vmatmul.mubr.bf16.gmra.mrb[0].mxu0 %v686
    %v938 = vpop.f32.mrb[0].mxu0
    %v939 = vadd.f32 %v551, %v938
    %v940 = vpop.f32.mrb[0].mxu0
    %v941 = vpop.f32.mrb[0].mxu0
    %v942 = vadd.f32 %v554, %v941
    %v943 = vpop.f32.mrb[0].mxu0
    %944 = vmatprep.mubr.bf16.mxu0 0
    %945 = vmatmul.mubr.bf16.gmra.mrb[0].mxu0 %v689
    %v946 = vpop.f32.mrb[0].mxu0
    %v947 = vadd.f32 %v559, %v946
    %v948 = vpop.f32.mrb[0].mxu0
    %v949 = vpop.f32.mrb[0].mxu0
    %v950 = vadd.f32 %v562, %v949
    %v951 = vpop.f32.mrb[0].mxu0
    %952 = vmatprep.mubr.bf16.mxu0 0
    %953 = vmatmul.mubr.bf16.gmra.mrb[0].mxu0 %v692
    %v954 = vpop.f32.mrb[0].mxu0
    %v955 = vadd.f32 %v567, %v954
    %v956 = vpop.f32.mrb[0].mxu0
    %v957 = vpop.f32.mrb[0].mxu0
    %v958 = vadd.f32 %v570, %v957
    %v959 = vpop.f32.mrb[0].mxu0
    %960 = vmatprep.mubr.bf16.mxu0 0
    %961 = vmatmul.mubr.bf16.gmra.mrb[0].mxu0 %v695
    %v962 = vpop.f32.mrb[0].mxu0
    %v963 = vadd.f32 %v575, %v962
    %v964 = vpop.f32.mrb[0].mxu0
    %v965 = vpop.f32.mrb[0].mxu0
    %v966 = vadd.f32 %v578, %v965
    %v967 = vpop.f32.mrb[0].mxu0
    %968 = vmatprep.mubr.bf16.mxu0 0
    %969 = vmatmul.mubr.bf16.gmra.mrb[0].mxu0 %v698
    %v970 = vpop.f32.mrb[0].mxu0
    %v971 = vadd.f32 %v583, %v970
    %v972 = vpop.f32.mrb[0].mxu0
    %v973 = vpop.f32.mrb[0].mxu0
    %v974 = vadd.f32 %v586, %v973
    %v975 = vpop.f32.mrb[0].mxu0
    %976 = vmatprep.mubr.bf16.mxu0 0
    %977 = vmatmul.mubr.bf16.gmra.mrb[0].mxu0 %v701
    %v978 = vpop.f32.mrb[0].mxu0
    %v979 = vadd.f32 %v591, %v978
    %v980 = vpop.f32.mrb[0].mxu0
    %v981 = vpop.f32.mrb[0].mxu0
    %v982 = vadd.f32 %v594, %v981
    %v983 = vpop.f32.mrb[0].mxu0
    %984 = vmatprep.mubr.bf16.mxu0 0
    %985 = vmatmul.mubr.bf16.gmra.mrb[0].mxu0 %v704
    %v986 = vpop.f32.mrb[0].mxu0
    %v987 = vadd.f32 %v599, %v986
    %v988 = vpop.f32.mrb[0].mxu0
    %v989 = vpop.f32.mrb[0].mxu0
    %v990 = vadd.f32 %v602, %v989
    %v991 = vpop.f32.mrb[0].mxu0
    %992 = vmatprep.mubr.bf16.mxu0 0
    %993 = vmatmul.mubr.bf16.gmra.mrb[0].mxu0 %v707
    %v994 = vpop.f32.mrb[0].mxu0
    %v995 = vadd.f32 %v607, %v994
    %v996 = vpop.f32.mrb[0].mxu0
    %v997 = vpop.f32.mrb[0].mxu0
    %v998 = vadd.f32 %v610, %v997
    %v999 = vpop.f32.mrb[0].mxu0
    %1000 = vdwg.mxu0
    %v1001 = vld [vmem:[%s0 + $0x2] sm:$0xff]
    %v1002 = vld [vmem:[%s0 + $0xa] sm:$0xff]
    %v1003 = vld [vmem:[%s0 + $0x1a] sm:$0xff]
    %v1004 = vld [vmem:[%s0 + $0x22] sm:$0xff]
    %v1005 = vld [vmem:[%s0 + $0x32] sm:$0xff]
    %v1006 = vld [vmem:[%s0 + $0x3a] sm:$0xff]
    %v1007 = vld [vmem:[%s0 + $0x4a] sm:$0xff]
    %v1008 = vld [vmem:[%s0 + $0x52] sm:$0xff]
    %v1009 = vld [vmem:[%s0 + $0x62] sm:$0xff]
    %v1010 = vld [vmem:[%s0 + $0x6a] sm:$0xff]
    %v1011 = vld [vmem:[%s0 + $0x7a] sm:$0xff]
    %v1012 = vld [vmem:[%s0 + $0x82] sm:$0xff]
    %v1013 = vld [vmem:[%s0 + $0x92] sm:$0xff]
    %v1014 = vld [vmem:[%s0 + $0x9a] sm:$0xff]
    %v1015 = vld [vmem:[%s0 + $0xaa] sm:$0xff]
    %v1016 = vld [vmem:[%s0 + $0xb2] sm:$0xff]
    %v1017 = vld [vmem:[%s0 + $0xc2] sm:$0xff]
    %v1018 = vld [vmem:[%s0 + $0xca] sm:$0xff]
    %v1019 = vld [vmem:[%s0 + $0xda] sm:$0xff]
    %v1020 = vld [vmem:[%s0 + $0xe2] sm:$0xff]
    %v1021 = vld [vmem:[%s0 + $0xf2] sm:$0xff]
    %v1022 = vld [vmem:[%s0 + $0xfa] sm:$0xff]
    %v1023 = vld [vmem:[%s0 + $0x10a] sm:$0xff]
    %v1024 = vld [vmem:[%s0 + $0x112] sm:$0xff]
    %v1025 = vld [vmem:[%s0 + $0x122] sm:$0xff]
    %v1026 = vld [vmem:[%s0 + $0x12a] sm:$0xff]
    %v1027 = vld [vmem:[%s0 + $0x13a] sm:$0xff]
    %v1028 = vld [vmem:[%s0 + $0x142] sm:$0xff]
    %v1029 = vld [vmem:[%s0 + $0x152] sm:$0xff]
    %v1030 = vld [vmem:[%s0 + $0x15a] sm:$0xff]
    %v1031 = vld [vmem:[%s0 + $0x16a] sm:$0xff]
    %v1032 = vld [vmem:[%s0 + $0x172] sm:$0xff]
    %v1033 = vld [vmem:[%s0 + $0x1b2] sm:$0xff]
    %v1034 = vld [vmem:[%s0 + $0x1ba] sm:$0xff]
    %v1035 = vld [vmem:[%s0 + $0x1ca] sm:$0xff]
    %v1036 = vld [vmem:[%s0 + $0x1d2] sm:$0xff]
    %v1037 = vld [vmem:[%s0 + $0x1e2] sm:$0xff]
    %v1038 = vld [vmem:[%s0 + $0x1ea] sm:$0xff]
    %v1039 = vld [vmem:[%s0 + $0x1fa] sm:$0xff]
    %v1040 = vld [vmem:[%s0 + $0x202] sm:$0xff]
    %v1041 = vld [vmem:[%s0 + $0x212] sm:$0xff]
    %v1042 = vld [vmem:[%s0 + $0x21a] sm:$0xff]
    %v1043 = vld [vmem:[%s0 + $0x22a] sm:$0xff]
    %v1044 = vld [vmem:[%s0 + $0x232] sm:$0xff]
    %v1045 = vld [vmem:[%s0 + $0x242] sm:$0xff]
    %v1046 = vld [vmem:[%s0 + $0x24a] sm:$0xff]
    %v1047 = vld [vmem:[%s0 + $0x25a] sm:$0xff]
    %v1048 = vld [vmem:[%s0 + $0x262] sm:$0xff]
    %v1049 = vld [vmem:[%s0 + $0x272] sm:$0xff]
    %v1050 = vld [vmem:[%s0 + $0x27a] sm:$0xff]
    %v1051 = vld [vmem:[%s0 + $0x28a] sm:$0xff]
    %v1052 = vld [vmem:[%s0 + $0x292] sm:$0xff]
    %v1053 = vld [vmem:[%s0 + $0x2a2] sm:$0xff]
    %v1054 = vld [vmem:[%s0 + $0x2aa] sm:$0xff]
    %v1055 = vld [vmem:[%s0 + $0x2ba] sm:$0xff]
    %v1056 = vld [vmem:[%s0 + $0x2c2] sm:$0xff]
    %v1057 = vld [vmem:[%s0 + $0x2d2] sm:$0xff]
    %v1058 = vld [vmem:[%s0 + $0x2da] sm:$0xff]
    %v1059 = vld [vmem:[%s0 + $0x2ea] sm:$0xff]
    %v1060 = vld [vmem:[%s0 + $0x2f2] sm:$0xff]
    %v1061 = vld [vmem:[%s0 + $0x302] sm:$0xff]
    %v1062 = vld [vmem:[%s0 + $0x30a] sm:$0xff]
    %v1063 = vld [vmem:[%s0 + $0x31a] sm:$0xff]
    %v1064 = vld [vmem:[%s0 + $0x322] sm:$0xff]
    %v1065 = vpack.c.bf16 %v1002, %v1001
    %v1066 = vpack.c.bf16 %v1004, %v1003
    %v1067 = vpack.c.bf16 %v1006, %v1005
    %v1068 = vpack.c.bf16 %v1008, %v1007
    %v1069 = vpack.c.bf16 %v1010, %v1009
    %v1070 = vpack.c.bf16 %v1012, %v1011
    %v1071 = vpack.c.bf16 %v1014, %v1013
    %v1072 = vpack.c.bf16 %v1016, %v1015
    %v1073 = vpack.c.bf16 %v1018, %v1017
    %v1074 = vpack.c.bf16 %v1020, %v1019
    %v1075 = vpack.c.bf16 %v1022, %v1021
    %v1076 = vpack.c.bf16 %v1024, %v1023
    %v1077 = vpack.c.bf16 %v1026, %v1025
    %v1078 = vpack.c.bf16 %v1028, %v1027
    %v1079 = vpack.c.bf16 %v1030, %v1029
    %v1080 = vpack.c.bf16 %v1032, %v1031
    %v1081 = vpack.c.bf16 %v1034, %v1033
    %v1082 = vpack.c.bf16 %v1036, %v1035
    %v1083 = vpack.c.bf16 %v1038, %v1037
    %v1084 = vpack.c.bf16 %v1040, %v1039
    %v1085 = vpack.c.bf16 %v1042, %v1041
    %v1086 = vpack.c.bf16 %v1044, %v1043
    %v1087 = vpack.c.bf16 %v1046, %v1045
    %v1088 = vpack.c.bf16 %v1048, %v1047
    %v1089 = vpack.c.bf16 %v1050, %v1049
    %v1090 = vpack.c.bf16 %v1052, %v1051
    %v1091 = vpack.c.bf16 %v1054, %v1053
    %v1092 = vpack.c.bf16 %v1056, %v1055
    %v1093 = vpack.c.bf16 %v1058, %v1057
    %v1094 = vpack.c.bf16 %v1060, %v1059
    %v1095 = vpack.c.bf16 %v1062, %v1061
    %v1096 = vpack.c.bf16 %v1064, %v1063
    %s1097 = scalar_lea.vmem %s1, 4
    %v1098 = vld [vmem:[%s1097] sm:$0x3]
    %v1100 = vsel %vm223, %v1065, 0
    %v1103 = vsel %vm223, %v1066, 0
    %v1106 = vsel %vm223, %v1067, 0
    %v1109 = vsel %vm223, %v1068, 0
    %v1112 = vsel %vm223, %v1069, 0
    %v1115 = vsel %vm223, %v1070, 0
    %v1118 = vsel %vm223, %v1071, 0
    %v1121 = vsel %vm223, %v1072, 0
    %v1124 = vsel %vm223, %v1073, 0
    %v1127 = vsel %vm223, %v1074, 0
    %v1130 = vsel %vm223, %v1075, 0
    %v1133 = vsel %vm223, %v1076, 0
    %v1136 = vsel %vm223, %v1077, 0
    %v1139 = vsel %vm223, %v1078, 0
    %v1142 = vsel %vm223, %v1079, 0
    %v1145 = vsel %vm223, %v1080, 0
    %v1148 = vsel %vm223, %v1081, 0
    %v1151 = vsel %vm223, %v1082, 0
    %v1154 = vsel %vm223, %v1083, 0
    %v1157 = vsel %vm223, %v1084, 0
    %v1160 = vsel %vm223, %v1085, 0
    %v1163 = vsel %vm223, %v1086, 0
    %v1166 = vsel %vm223, %v1087, 0
    %v1169 = vsel %vm223, %v1088, 0
    %v1172 = vsel %vm223, %v1089, 0
    %v1175 = vsel %vm223, %v1090, 0
    %v1178 = vsel %vm223, %v1091, 0
    %v1181 = vsel %vm223, %v1092, 0
    %v1184 = vsel %vm223, %v1093, 0
    %v1187 = vsel %vm223, %v1094, 0
    %v1190 = vsel %vm223, %v1095, 0
    %v1193 = vsel %vm223, %v1096, 0
    %v1196 = vsel %vm320, %v1098, 0
    %1198 = vmatprep.subr.bf16.mxu0 0
    %1199 = vmatpush1.bf16.msra.mxu0 %v1196
    %1200 = vmatprep.subr.bf16.mxu0 0
    %1201 = vmatpush1.bf16.msra.mxu0 0
    %1202 = vmatprep.subr.bf16.mxu0 0
    %1203 = vmatpush1.bf16.msra.mxu0 0
    %1204 = vmatprep.subr.bf16.mxu0 0
    %1205 = vmatpush1.bf16.msra.mxu0 0
    %1206 = vmatprep.subr.bf16.mxu0 0
    %1207 = vmatpush1.bf16.msra.mxu0 0
    %1208 = vmatprep.subr.bf16.mxu0 0
    %1209 = vmatpush1.bf16.msra.mxu0 0
    %1210 = vmatprep.subr.bf16.mxu0 0
    %1211 = vmatpush1.bf16.msra.mxu0 0
    %1212 = vmatprep.subr.bf16.mxu0 0
    %1213 = vmatpush1.bf16.msra.mxu0 0
    %1214 = vmatprep.subr.bf16.mxu0 0
    %1215 = vmatpush1.bf16.msra.mxu0 0
    %1216 = vmatprep.subr.bf16.mxu0 0
    %1217 = vmatpush1.bf16.msra.mxu0 0
    %1218 = vmatprep.subr.bf16.mxu0 0
    %1219 = vmatpush1.bf16.msra.mxu0 0
    %1220 = vmatprep.subr.bf16.mxu0 0
    %1221 = vmatpush1.bf16.msra.mxu0 0
    %1222 = vmatprep.subr.bf16.mxu0 0
    %1223 = vmatpush1.bf16.msra.mxu0 0
    %1224 = vmatprep.subr.bf16.mxu0 0
    %1225 = vmatpush1.bf16.msra.mxu0 0
    %1226 = vmatprep.subr.bf16.mxu0 0
    %1227 = vmatpush1.bf16.msra.mxu0 0
    %1228 = vmatprep.subr.bf16.mxu0 0
    %1229 = vmatpush1.bf16.msra.mxu0 0
    %1230 = vmatprep.mubr.bf16.mxu0 0
    %1231 = vmatmul.mubr.bf16.gmra.mrb[0].mxu0 %v1100
    %v1232 = vpop.f32.mrb[0].mxu0
    %v1233 = vadd.f32 0.0, %v1232
    %v1234 = vpop.f32.mrb[0].mxu0
    %v1235 = vpop.f32.mrb[0].mxu0
    %v1236 = vadd.f32 0.0, %v1235
    %v1237 = vpop.f32.mrb[0].mxu0
    %1238 = vmatprep.mubr.bf16.mxu0 0
    %1239 = vmatmul.mubr.bf16.gmra.mrb[0].mxu0 %v1103
    %v1240 = vpop.f32.mrb[0].mxu0
    %v1241 = vadd.f32 0.0, %v1240
    %v1242 = vpop.f32.mrb[0].mxu0
    %v1243 = vpop.f32.mrb[0].mxu0
    %v1244 = vadd.f32 0.0, %v1243
    %v1245 = vpop.f32.mrb[0].mxu0
    %1246 = vmatprep.mubr.bf16.mxu0 0
    %1247 = vmatmul.mubr.bf16.gmra.mrb[0].mxu0 %v1106
    %v1248 = vpop.f32.mrb[0].mxu0
    %v1249 = vadd.f32 0.0, %v1248
    %v1250 = vpop.f32.mrb[0].mxu0
    %v1251 = vpop.f32.mrb[0].mxu0
    %v1252 = vadd.f32 0.0, %v1251
    %v1253 = vpop.f32.mrb[0].mxu0
    %1254 = vmatprep.mubr.bf16.mxu0 0
    %1255 = vmatmul.mubr.bf16.gmra.mrb[0].mxu0 %v1109
    %v1256 = vpop.f32.mrb[0].mxu0
    %v1257 = vadd.f32 0.0, %v1256
    %v1258 = vpop.f32.mrb[0].mxu0
    %v1259 = vpop.f32.mrb[0].mxu0
    %v1260 = vadd.f32 0.0, %v1259
    %v1261 = vpop.f32.mrb[0].mxu0
    %1262 = vmatprep.mubr.bf16.mxu0 0
    %1263 = vmatmul.mubr.bf16.gmra.mrb[0].mxu0 %v1112
    %v1264 = vpop.f32.mrb[0].mxu0
    %v1265 = vadd.f32 0.0, %v1264
    %v1266 = vpop.f32.mrb[0].mxu0
    %v1267 = vpop.f32.mrb[0].mxu0
    %v1268 = vadd.f32 0.0, %v1267
    %v1269 = vpop.f32.mrb[0].mxu0
    %1270 = vmatprep.mubr.bf16.mxu0 0
    %1271 = vmatmul.mubr.bf16.gmra.mrb[0].mxu0 %v1115
    %v1272 = vpop.f32.mrb[0].mxu0
    %v1273 = vadd.f32 0.0, %v1272
    %v1274 = vpop.f32.mrb[0].mxu0
    %v1275 = vpop.f32.mrb[0].mxu0
    %v1276 = vadd.f32 0.0, %v1275
    %v1277 = vpop.f32.mrb[0].mxu0
    %1278 = vmatprep.mubr.bf16.mxu0 0
    %1279 = vmatmul.mubr.bf16.gmra.mrb[0].mxu0 %v1118
    %v1280 = vpop.f32.mrb[0].mxu0
    %v1281 = vadd.f32 0.0, %v1280
    %v1282 = vpop.f32.mrb[0].mxu0
    %v1283 = vpop.f32.mrb[0].mxu0
    %v1284 = vadd.f32 0.0, %v1283
    %v1285 = vpop.f32.mrb[0].mxu0
    %1286 = vmatprep.mubr.bf16.mxu0 0
    %1287 = vmatmul.mubr.bf16.gmra.mrb[0].mxu0 %v1121
    %v1288 = vpop.f32.mrb[0].mxu0
    %v1289 = vadd.f32 0.0, %v1288
    %v1290 = vpop.f32.mrb[0].mxu0
    %v1291 = vpop.f32.mrb[0].mxu0
    %v1292 = vadd.f32 0.0, %v1291
    %v1293 = vpop.f32.mrb[0].mxu0
    %1294 = vmatprep.mubr.bf16.mxu0 0
    %1295 = vmatmul.mubr.bf16.gmra.mrb[0].mxu0 %v1124
    %v1296 = vpop.f32.mrb[0].mxu0
    %v1297 = vadd.f32 0.0, %v1296
    %v1298 = vpop.f32.mrb[0].mxu0
    %v1299 = vpop.f32.mrb[0].mxu0
    %v1300 = vadd.f32 0.0, %v1299
    %v1301 = vpop.f32.mrb[0].mxu0
    %1302 = vmatprep.mubr.bf16.mxu0 0
    %1303 = vmatmul.mubr.bf16.gmra.mrb[0].mxu0 %v1127
    %v1304 = vpop.f32.mrb[0].mxu0
    %v1305 = vadd.f32 0.0, %v1304
    %v1306 = vpop.f32.mrb[0].mxu0
    %v1307 = vpop.f32.mrb[0].mxu0
    %v1308 = vadd.f32 0.0, %v1307
    %v1309 = vpop.f32.mrb[0].mxu0
    %1310 = vmatprep.mubr.bf16.mxu0 0
    %1311 = vmatmul.mubr.bf16.gmra.mrb[0].mxu0 %v1130
    %v1312 = vpop.f32.mrb[0].mxu0
    %v1313 = vadd.f32 0.0, %v1312
    %v1314 = vpop.f32.mrb[0].mxu0
    %v1315 = vpop.f32.mrb[0].mxu0
    %v1316 = vadd.f32 0.0, %v1315
    %v1317 = vpop.f32.mrb[0].mxu0
    %1318 = vmatprep.mubr.bf16.mxu0 0
    %1319 = vmatmul.mubr.bf16.gmra.mrb[0].mxu0 %v1133
    %v1320 = vpop.f32.mrb[0].mxu0
    %v1321 = vadd.f32 0.0, %v1320
    %v1322 = vpop.f32.mrb[0].mxu0
    %v1323 = vpop.f32.mrb[0].mxu0
    %v1324 = vadd.f32 0.0, %v1323
    %v1325 = vpop.f32.mrb[0].mxu0
    %1326 = vmatprep.mubr.bf16.mxu0 0
    %1327 = vmatmul.mubr.bf16.gmra.mrb[0].mxu0 %v1136
    %v1328 = vpop.f32.mrb[0].mxu0
    %v1329 = vadd.f32 0.0, %v1328
    %v1330 = vpop.f32.mrb[0].mxu0
    %v1331 = vpop.f32.mrb[0].mxu0
    %v1332 = vadd.f32 0.0, %v1331
    %v1333 = vpop.f32.mrb[0].mxu0
    %1334 = vmatprep.mubr.bf16.mxu0 0
    %1335 = vmatmul.mubr.bf16.gmra.mrb[0].mxu0 %v1139
    %v1336 = vpop.f32.mrb[0].mxu0
    %v1337 = vadd.f32 0.0, %v1336
    %v1338 = vpop.f32.mrb[0].mxu0
    %v1339 = vpop.f32.mrb[0].mxu0
    %v1340 = vadd.f32 0.0, %v1339
    %v1341 = vpop.f32.mrb[0].mxu0
    %1342 = vmatprep.mubr.bf16.mxu0 0
    %1343 = vmatmul.mubr.bf16.gmra.mrb[0].mxu0 %v1142
    %v1344 = vpop.f32.mrb[0].mxu0
    %v1345 = vadd.f32 0.0, %v1344
    %v1346 = vpop.f32.mrb[0].mxu0
    %v1347 = vpop.f32.mrb[0].mxu0
    %v1348 = vadd.f32 0.0, %v1347
    %v1349 = vpop.f32.mrb[0].mxu0
    %1350 = vmatprep.mubr.bf16.mxu0 0
    %1351 = vmatmul.mubr.bf16.gmra.mrb[0].mxu0 %v1145
    %v1352 = vpop.f32.mrb[0].mxu0
    %v1353 = vadd.f32 0.0, %v1352
    %v1354 = vpop.f32.mrb[0].mxu0
    %v1355 = vpop.f32.mrb[0].mxu0
    %v1356 = vadd.f32 0.0, %v1355
    %v1357 = vpop.f32.mrb[0].mxu0
    %1358 = vmatprep.mubr.bf16.mxu0 0
    %1359 = vmatmul.mubr.bf16.gmra.mrb[0].mxu0 %v1148
    %v1360 = vpop.f32.mrb[0].mxu0
    %v1361 = vadd.f32 0.0, %v1360
    %v1362 = vpop.f32.mrb[0].mxu0
    %v1363 = vpop.f32.mrb[0].mxu0
    %v1364 = vadd.f32 0.0, %v1363
    %v1365 = vpop.f32.mrb[0].mxu0
    %1366 = vmatprep.mubr.bf16.mxu0 0
    %1367 = vmatmul.mubr.bf16.gmra.mrb[0].mxu0 %v1151
    %v1368 = vpop.f32.mrb[0].mxu0
    %v1369 = vadd.f32 0.0, %v1368
    %v1370 = vpop.f32.mrb[0].mxu0
    %v1371 = vpop.f32.mrb[0].mxu0
    %v1372 = vadd.f32 0.0, %v1371
    %v1373 = vpop.f32.mrb[0].mxu0
    %1374 = vmatprep.mubr.bf16.mxu0 0
    %1375 = vmatmul.mubr.bf16.gmra.mrb[0].mxu0 %v1154
    %v1376 = vpop.f32.mrb[0].mxu0
    %v1377 = vadd.f32 0.0, %v1376
    %v1378 = vpop.f32.mrb[0].mxu0
    %v1379 = vpop.f32.mrb[0].mxu0
    %v1380 = vadd.f32 0.0, %v1379
    %v1381 = vpop.f32.mrb[0].mxu0
    %1382 = vmatprep.mubr.bf16.mxu0 0
    %1383 = vmatmul.mubr.bf16.gmra.mrb[0].mxu0 %v1157
    %v1384 = vpop.f32.mrb[0].mxu0
    %v1385 = vadd.f32 0.0, %v1384
    %v1386 = vpop.f32.mrb[0].mxu0
    %v1387 = vpop.f32.mrb[0].mxu0
    %v1388 = vadd.f32 0.0, %v1387
    %v1389 = vpop.f32.mrb[0].mxu0
    %1390 = vmatprep.mubr.bf16.mxu0 0
    %1391 = vmatmul.mubr.bf16.gmra.mrb[0].mxu0 %v1160
    %v1392 = vpop.f32.mrb[0].mxu0
    %v1393 = vadd.f32 0.0, %v1392
    %v1394 = vpop.f32.mrb[0].mxu0
    %v1395 = vpop.f32.mrb[0].mxu0
    %v1396 = vadd.f32 0.0, %v1395
    %v1397 = vpop.f32.mrb[0].mxu0
    %1398 = vmatprep.mubr.bf16.mxu0 0
    %1399 = vmatmul.mubr.bf16.gmra.mrb[0].mxu0 %v1163
    %v1400 = vpop.f32.mrb[0].mxu0
    %v1401 = vadd.f32 0.0, %v1400
    %v1402 = vpop.f32.mrb[0].mxu0
    %v1403 = vpop.f32.mrb[0].mxu0
    %v1404 = vadd.f32 0.0, %v1403
    %v1405 = vpop.f32.mrb[0].mxu0
    %1406 = vmatprep.mubr.bf16.mxu0 0
    %1407 = vmatmul.mubr.bf16.gmra.mrb[0].mxu0 %v1166
    %v1408 = vpop.f32.mrb[0].mxu0
    %v1409 = vadd.f32 0.0, %v1408
    %v1410 = vpop.f32.mrb[0].mxu0
    %v1411 = vpop.f32.mrb[0].mxu0
    %v1412 = vadd.f32 0.0, %v1411
    %v1413 = vpop.f32.mrb[0].mxu0
    %1414 = vmatprep.mubr.bf16.mxu0 0
    %1415 = vmatmul.mubr.bf16.gmra.mrb[0].mxu0 %v1169
    %v1416 = vpop.f32.mrb[0].mxu0
    %v1417 = vadd.f32 0.0, %v1416
    %v1418 = vpop.f32.mrb[0].mxu0
    %v1419 = vpop.f32.mrb[0].mxu0
    %v1420 = vadd.f32 0.0, %v1419
    %v1421 = vpop.f32.mrb[0].mxu0
    %1422 = vmatprep.mubr.bf16.mxu0 0
    %1423 = vmatmul.mubr.bf16.gmra.mrb[0].mxu0 %v1172
    %v1424 = vpop.f32.mrb[0].mxu0
    %v1425 = vadd.f32 0.0, %v1424
    %v1426 = vpop.f32.mrb[0].mxu0
    %v1427 = vpop.f32.mrb[0].mxu0
    %v1428 = vadd.f32 0.0, %v1427
    %v1429 = vpop.f32.mrb[0].mxu0
    %1430 = vmatprep.mubr.bf16.mxu0 0
    %1431 = vmatmul.mubr.bf16.gmra.mrb[0].mxu0 %v1175
    %v1432 = vpop.f32.mrb[0].mxu0
    %v1433 = vadd.f32 0.0, %v1432
    %v1434 = vpop.f32.mrb[0].mxu0
    %v1435 = vpop.f32.mrb[0].mxu0
    %v1436 = vadd.f32 0.0, %v1435
    %v1437 = vpop.f32.mrb[0].mxu0
    %1438 = vmatprep.mubr.bf16.mxu0 0
    %1439 = vmatmul.mubr.bf16.gmra.mrb[0].mxu0 %v1178
    %v1440 = vpop.f32.mrb[0].mxu0
    %v1441 = vadd.f32 0.0, %v1440
    %v1442 = vpop.f32.mrb[0].mxu0
    %v1443 = vpop.f32.mrb[0].mxu0
    %v1444 = vadd.f32 0.0, %v1443
    %v1445 = vpop.f32.mrb[0].mxu0
    %1446 = vmatprep.mubr.bf16.mxu0 0
    %1447 = vmatmul.mubr.bf16.gmra.mrb[0].mxu0 %v1181
    %v1448 = vpop.f32.mrb[0].mxu0
    %v1449 = vadd.f32 0.0, %v1448
    %v1450 = vpop.f32.mrb[0].mxu0
    %v1451 = vpop.f32.mrb[0].mxu0
    %v1452 = vadd.f32 0.0, %v1451
    %v1453 = vpop.f32.mrb[0].mxu0
    %1454 = vmatprep.mubr.bf16.mxu0 0
    %1455 = vmatmul.mubr.bf16.gmra.mrb[0].mxu0 %v1184
    %v1456 = vpop.f32.mrb[0].mxu0
    %v1457 = vadd.f32 0.0, %v1456
    %v1458 = vpop.f32.mrb[0].mxu0
    %v1459 = vpop.f32.mrb[0].mxu0
    %v1460 = vadd.f32 0.0, %v1459
    %v1461 = vpop.f32.mrb[0].mxu0
    %1462 = vmatprep.mubr.bf16.mxu0 0
    %1463 = vmatmul.mubr.bf16.gmra.mrb[0].mxu0 %v1187
    %v1464 = vpop.f32.mrb[0].mxu0
    %v1465 = vadd.f32 0.0, %v1464
    %v1466 = vpop.f32.mrb[0].mxu0
    %v1467 = vpop.f32.mrb[0].mxu0
    %v1468 = vadd.f32 0.0, %v1467
    %v1469 = vpop.f32.mrb[0].mxu0
    %1470 = vmatprep.mubr.bf16.mxu0 0
    %1471 = vmatmul.mubr.bf16.gmra.mrb[0].mxu0 %v1190
    %v1472 = vpop.f32.mrb[0].mxu0
    %v1473 = vadd.f32 0.0, %v1472
    %v1474 = vpop.f32.mrb[0].mxu0
    %v1475 = vpop.f32.mrb[0].mxu0
    %v1476 = vadd.f32 0.0, %v1475
    %v1477 = vpop.f32.mrb[0].mxu0
    %1478 = vmatprep.mubr.bf16.mxu0 0
    %1479 = vmatmul.mubr.bf16.gmra.mrb[0].mxu0 %v1193
    %v1480 = vpop.f32.mrb[0].mxu0
    %v1481 = vadd.f32 0.0, %v1480
    %v1482 = vpop.f32.mrb[0].mxu0
    %v1483 = vpop.f32.mrb[0].mxu0
    %v1484 = vadd.f32 0.0, %v1483
    %v1485 = vpop.f32.mrb[0].mxu0
    %1486 = vdwg.mxu0
    %v1487 = vadd.f32 %v747, %v1233
    %v1488 = vadd.f32 %v750, %v1236
    %v1489 = vadd.f32 %v755, %v1241
    %v1490 = vadd.f32 %v758, %v1244
    %v1491 = vadd.f32 %v763, %v1249
    %v1492 = vadd.f32 %v766, %v1252
    %v1493 = vadd.f32 %v771, %v1257
    %v1494 = vadd.f32 %v774, %v1260
    %v1495 = vadd.f32 %v779, %v1265
    %v1496 = vadd.f32 %v782, %v1268
    %v1497 = vadd.f32 %v787, %v1273
    %v1498 = vadd.f32 %v790, %v1276
    %v1499 = vadd.f32 %v795, %v1281
    %v1500 = vadd.f32 %v798, %v1284
    %v1501 = vadd.f32 %v803, %v1289
    %v1502 = vadd.f32 %v806, %v1292
    %v1503 = vadd.f32 %v811, %v1297
    %v1504 = vadd.f32 %v814, %v1300
    %v1505 = vadd.f32 %v819, %v1305
    %v1506 = vadd.f32 %v822, %v1308
    %v1507 = vadd.f32 %v827, %v1313
    %v1508 = vadd.f32 %v830, %v1316
    %v1509 = vadd.f32 %v835, %v1321
    %v1510 = vadd.f32 %v838, %v1324
    %v1511 = vadd.f32 %v843, %v1329
    %v1512 = vadd.f32 %v846, %v1332
    %v1513 = vadd.f32 %v851, %v1337
    %v1514 = vadd.f32 %v854, %v1340
    %v1515 = vadd.f32 %v859, %v1345
    %v1516 = vadd.f32 %v862, %v1348
    %v1517 = vadd.f32 %v867, %v1353
    %v1518 = vadd.f32 %v870, %v1356
    %v1519 = vadd.f32 %v875, %v1361
    %v1520 = vadd.f32 %v878, %v1364
    %v1521 = vadd.f32 %v883, %v1369
    %v1522 = vadd.f32 %v886, %v1372
    %v1523 = vadd.f32 %v891, %v1377
    %v1524 = vadd.f32 %v894, %v1380
    %v1525 = vadd.f32 %v899, %v1385
    %v1526 = vadd.f32 %v902, %v1388
    %v1527 = vadd.f32 %v907, %v1393
    %v1528 = vadd.f32 %v910, %v1396
    %v1529 = vadd.f32 %v915, %v1401
    %v1530 = vadd.f32 %v918, %v1404
    %v1531 = vadd.f32 %v923, %v1409
    %v1532 = vadd.f32 %v926, %v1412
    %v1533 = vadd.f32 %v931, %v1417
    %v1534 = vadd.f32 %v934, %v1420
    %v1535 = vadd.f32 %v939, %v1425
    %v1536 = vadd.f32 %v942, %v1428
    %v1537 = vadd.f32 %v947, %v1433
    %v1538 = vadd.f32 %v950, %v1436
    %v1539 = vadd.f32 %v955, %v1441
    %v1540 = vadd.f32 %v958, %v1444
    %v1541 = vadd.f32 %v963, %v1449
    %v1542 = vadd.f32 %v966, %v1452
    %v1543 = vadd.f32 %v971, %v1457
    %v1544 = vadd.f32 %v974, %v1460
    %v1545 = vadd.f32 %v979, %v1465
    %v1546 = vadd.f32 %v982, %v1468
    %v1547 = vadd.f32 %v987, %v1473
    %v1548 = vadd.f32 %v990, %v1476
    %v1549 = vadd.f32 %v995, %v1481
    %v1550 = vadd.f32 %v998, %v1484
    %s1551 = scalar_lea.vmem %s0, 24
    %v1552 = vld [vmem:[%s1551] sm:$0xff]
    %v1553 = vld [vmem:[%s1551 + $0x8] sm:$0xff]
    %v1554 = vld [vmem:[%s1551 + $0x18] sm:$0xff]
    %v1555 = vld [vmem:[%s1551 + $0x20] sm:$0xff]
    %v1556 = vld [vmem:[%s1551 + $0x30] sm:$0xff]
    %v1557 = vld [vmem:[%s1551 + $0x38] sm:$0xff]
    %v1558 = vld [vmem:[%s1551 + $0x48] sm:$0xff]
    %v1559 = vld [vmem:[%s1551 + $0x50] sm:$0xff]
    %v1560 = vld [vmem:[%s1551 + $0x60] sm:$0xff]
    %v1561 = vld [vmem:[%s1551 + $0x68] sm:$0xff]
    %v1562 = vld [vmem:[%s1551 + $0x78] sm:$0xff]
    %v1563 = vld [vmem:[%s1551 + $0x80] sm:$0xff]
    %v1564 = vld [vmem:[%s1551 + $0x90] sm:$0xff]
    %v1565 = vld [vmem:[%s1551 + $0x98] sm:$0xff]
    %v1566 = vld [vmem:[%s1551 + $0xa8] sm:$0xff]
    %v1567 = vld [vmem:[%s1551 + $0xb0] sm:$0xff]
    %v1568 = vld [vmem:[%s1551 + $0xc0] sm:$0xff]
    %v1569 = vld [vmem:[%s1551 + $0xc8] sm:$0xff]
    %v1570 = vld [vmem:[%s1551 + $0xd8] sm:$0xff]
    %v1571 = vld [vmem:[%s1551 + $0xe0] sm:$0xff]
    %v1572 = vld [vmem:[%s1551 + $0xf0] sm:$0xff]
    %v1573 = vld [vmem:[%s1551 + $0xf8] sm:$0xff]
    %v1574 = vld [vmem:[%s1551 + $0x108] sm:$0xff]
    %v1575 = vld [vmem:[%s1551 + $0x110] sm:$0xff]
    %v1576 = vld [vmem:[%s1551 + $0x120] sm:$0xff]
    %v1577 = vld [vmem:[%s1551 + $0x128] sm:$0xff]
    %v1578 = vld [vmem:[%s1551 + $0x138] sm:$0xff]
    %v1579 = vld [vmem:[%s1551 + $0x140] sm:$0xff]
    %v1580 = vld [vmem:[%s1551 + $0x150] sm:$0xff]
    %v1581 = vld [vmem:[%s1551 + $0x158] sm:$0xff]
    %v1582 = vld [vmem:[%s1551 + $0x168] sm:$0xff]
    %v1583 = vld [vmem:[%s1551 + $0x170] sm:$0xff]
    %v1584 = vld [vmem:[%s1551 + $0x1b0] sm:$0xff]
    %v1585 = vld [vmem:[%s1551 + $0x1b8] sm:$0xff]
    %v1586 = vld [vmem:[%s1551 + $0x1c8] sm:$0xff]
    %v1587 = vld [vmem:[%s1551 + $0x1d0] sm:$0xff]
    %v1588 = vld [vmem:[%s1551 + $0x1e0] sm:$0xff]
    %v1589 = vld [vmem:[%s1551 + $0x1e8] sm:$0xff]
    %v1590 = vld [vmem:[%s1551 + $0x1f8] sm:$0xff]
    %v1591 = vld [vmem:[%s1551 + $0x200] sm:$0xff]
    %v1592 = vld [vmem:[%s1551 + $0x210] sm:$0xff]
    %v1593 = vld [vmem:[%s1551 + $0x218] sm:$0xff]
    %v1594 = vld [vmem:[%s1551 + $0x228] sm:$0xff]
    %v1595 = vld [vmem:[%s1551 + $0x230] sm:$0xff]
    %v1596 = vld [vmem:[%s1551 + $0x240] sm:$0xff]
    %v1597 = vld [vmem:[%s1551 + $0x248] sm:$0xff]
    %v1598 = vld [vmem:[%s1551 + $0x258] sm:$0xff]
    %v1599 = vld [vmem:[%s1551 + $0x260] sm:$0xff]
    %v1600 = vld [vmem:[%s1551 + $0x270] sm:$0xff]
    %v1601 = vld [vmem:[%s1551 + $0x278] sm:$0xff]
    %v1602 = vld [vmem:[%s1551 + $0x288] sm:$0xff]
    %v1603 = vld [vmem:[%s1551 + $0x290] sm:$0xff]
    %v1604 = vld [vmem:[%s1551 + $0x2a0] sm:$0xff]
    %v1605 = vld [vmem:[%s1551 + $0x2a8] sm:$0xff]
    %v1606 = vld [vmem:[%s1551 + $0x2b8] sm:$0xff]
    %v1607 = vld [vmem:[%s1551 + $0x2c0] sm:$0xff]
    %v1608 = vld [vmem:[%s1551 + $0x2d0] sm:$0xff]
    %v1609 = vld [vmem:[%s1551 + $0x2d8] sm:$0xff]
    %v1610 = vld [vmem:[%s1551 + $0x2e8] sm:$0xff]
    %v1611 = vld [vmem:[%s1551 + $0x2f0] sm:$0xff]
    %v1612 = vld [vmem:[%s1551 + $0x300] sm:$0xff]
    %v1613 = vld [vmem:[%s1551 + $0x308] sm:$0xff]
    %v1614 = vld [vmem:[%s1551 + $0x318] sm:$0xff]
    %v1615 = vld [vmem:[%s1551 + $0x320] sm:$0xff]
    %v1616 = vpack.c.bf16 %v1553, %v1552
    %v1617 = vpack.c.bf16 %v1555, %v1554
    %v1618 = vpack.c.bf16 %v1557, %v1556
    %v1619 = vpack.c.bf16 %v1559, %v1558
    %v1620 = vpack.c.bf16 %v1561, %v1560
    %v1621 = vpack.c.bf16 %v1563, %v1562
    %v1622 = vpack.c.bf16 %v1565, %v1564
    %v1623 = vpack.c.bf16 %v1567, %v1566
    %v1624 = vpack.c.bf16 %v1569, %v1568
    %v1625 = vpack.c.bf16 %v1571, %v1570
    %v1626 = vpack.c.bf16 %v1573, %v1572
    %v1627 = vpack.c.bf16 %v1575, %v1574
    %v1628 = vpack.c.bf16 %v1577, %v1576
    %v1629 = vpack.c.bf16 %v1579, %v1578
    %v1630 = vpack.c.bf16 %v1581, %v1580
    %v1631 = vpack.c.bf16 %v1583, %v1582
    %v1632 = vpack.c.bf16 %v1585, %v1584
    %v1633 = vpack.c.bf16 %v1587, %v1586
    %v1634 = vpack.c.bf16 %v1589, %v1588
    %v1635 = vpack.c.bf16 %v1591, %v1590
    %v1636 = vpack.c.bf16 %v1593, %v1592
    %v1637 = vpack.c.bf16 %v1595, %v1594
    %v1638 = vpack.c.bf16 %v1597, %v1596
    %v1639 = vpack.c.bf16 %v1599, %v1598
    %v1640 = vpack.c.bf16 %v1601, %v1600
    %v1641 = vpack.c.bf16 %v1603, %v1602
    %v1642 = vpack.c.bf16 %v1605, %v1604
    %v1643 = vpack.c.bf16 %v1607, %v1606
    %v1644 = vpack.c.bf16 %v1609, %v1608
    %v1645 = vpack.c.bf16 %v1611, %v1610
    %v1646 = vpack.c.bf16 %v1613, %v1612
    %v1647 = vpack.c.bf16 %v1615, %v1614
    %s1648 = scalar_lea.vmem %s1, 6
    %v1649 = vld [vmem:[%s1648] sm:$0x3]
    %v1651 = vsel %vm223, %v1616, 0
    %v1654 = vsel %vm223, %v1617, 0
    %v1657 = vsel %vm223, %v1618, 0
    %v1660 = vsel %vm223, %v1619, 0
    %v1663 = vsel %vm223, %v1620, 0
    %v1666 = vsel %vm223, %v1621, 0
    %v1669 = vsel %vm223, %v1622, 0
    %v1672 = vsel %vm223, %v1623, 0
    %v1675 = vsel %vm223, %v1624, 0
    %v1678 = vsel %vm223, %v1625, 0
    %v1681 = vsel %vm223, %v1626, 0
    %v1684 = vsel %vm223, %v1627, 0
    %v1687 = vsel %vm223, %v1628, 0
    %v1690 = vsel %vm223, %v1629, 0
    %v1693 = vsel %vm223, %v1630, 0
    %v1696 = vsel %vm223, %v1631, 0
    %v1699 = vsel %vm223, %v1632, 0
    %v1702 = vsel %vm223, %v1633, 0
    %v1705 = vsel %vm223, %v1634, 0
    %v1708 = vsel %vm223, %v1635, 0
    %v1711 = vsel %vm223, %v1636, 0
    %v1714 = vsel %vm223, %v1637, 0
    %v1717 = vsel %vm223, %v1638, 0
    %v1720 = vsel %vm223, %v1639, 0
    %v1723 = vsel %vm223, %v1640, 0
    %v1726 = vsel %vm223, %v1641, 0
    %v1729 = vsel %vm223, %v1642, 0
    %v1732 = vsel %vm223, %v1643, 0
    %v1735 = vsel %vm223, %v1644, 0
    %v1738 = vsel %vm223, %v1645, 0
    %v1741 = vsel %vm223, %v1646, 0
    %v1744 = vsel %vm223, %v1647, 0
    %v1747 = vsel %vm320, %v1649, 0
    %1749 = vmatprep.subr.bf16.mxu0 0
    %1750 = vmatpush1.bf16.msra.mxu0 %v1747
    %1751 = vmatprep.subr.bf16.mxu0 0
    %1752 = vmatpush1.bf16.msra.mxu0 0
    %1753 = vmatprep.subr.bf16.mxu0 0
    %1754 = vmatpush1.bf16.msra.mxu0 0
    %1755 = vmatprep.subr.bf16.mxu0 0
    %1756 = vmatpush1.bf16.msra.mxu0 0
    %1757 = vmatprep.subr.bf16.mxu0 0
    %1758 = vmatpush1.bf16.msra.mxu0 0
    %1759 = vmatprep.subr.bf16.mxu0 0
    %1760 = vmatpush1.bf16.msra.mxu0 0
    %1761 = vmatprep.subr.bf16.mxu0 0
    %1762 = vmatpush1.bf16.msra.mxu0 0
    %1763 = vmatprep.subr.bf16.mxu0 0
    %1764 = vmatpush1.bf16.msra.mxu0 0
    %1765 = vmatprep.subr.bf16.mxu0 0
    %1766 = vmatpush1.bf16.msra.mxu0 0
    %1767 = vmatprep.subr.bf16.mxu0 0
    %1768 = vmatpush1.bf16.msra.mxu0 0
    %1769 = vmatprep.subr.bf16.mxu0 0
    %1770 = vmatpush1.bf16.msra.mxu0 0
    %1771 = vmatprep.subr.bf16.mxu0 0
    %1772 = vmatpush1.bf16.msra.mxu0 0
    %1773 = vmatprep.subr.bf16.mxu0 0
    %1774 = vmatpush1.bf16.msra.mxu0 0
    %1775 = vmatprep.subr.bf16.mxu0 0
    %1776 = vmatpush1.bf16.msra.mxu0 0
    %1777 = vmatprep.subr.bf16.mxu0 0
    %1778 = vmatpush1.bf16.msra.mxu0 0
    %1779 = vmatprep.subr.bf16.mxu0 0
    %1780 = vmatpush1.bf16.msra.mxu0 0
    %1781 = vmatprep.mubr.bf16.mxu0 0
    %1782 = vmatmul.mubr.bf16.gmra.mrb[0].mxu0 %v1651
    %v1783 = vpop.f32.mrb[0].mxu0
    %v1784 = vadd.f32 0.0, %v1783
    %v1785 = vpop.f32.mrb[0].mxu0
    %v1786 = vpop.f32.mrb[0].mxu0
    %v1787 = vadd.f32 0.0, %v1786
    %v1788 = vpop.f32.mrb[0].mxu0
    %1789 = vmatprep.mubr.bf16.mxu0 0
    %1790 = vmatmul.mubr.bf16.gmra.mrb[0].mxu0 %v1654
    %v1791 = vpop.f32.mrb[0].mxu0
    %v1792 = vadd.f32 0.0, %v1791
    %v1793 = vpop.f32.mrb[0].mxu0
    %v1794 = vpop.f32.mrb[0].mxu0
    %v1795 = vadd.f32 0.0, %v1794
    %v1796 = vpop.f32.mrb[0].mxu0
    %1797 = vmatprep.mubr.bf16.mxu0 0
    %1798 = vmatmul.mubr.bf16.gmra.mrb[0].mxu0 %v1657
    %v1799 = vpop.f32.mrb[0].mxu0
    %v1800 = vadd.f32 0.0, %v1799
    %v1801 = vpop.f32.mrb[0].mxu0
    %v1802 = vpop.f32.mrb[0].mxu0
    %v1803 = vadd.f32 0.0, %v1802
    %v1804 = vpop.f32.mrb[0].mxu0
    %1805 = vmatprep.mubr.bf16.mxu0 0
    %1806 = vmatmul.mubr.bf16.gmra.mrb[0].mxu0 %v1660
    %v1807 = vpop.f32.mrb[0].mxu0
    %v1808 = vadd.f32 0.0, %v1807
    %v1809 = vpop.f32.mrb[0].mxu0
    %v1810 = vpop.f32.mrb[0].mxu0
    %v1811 = vadd.f32 0.0, %v1810
    %v1812 = vpop.f32.mrb[0].mxu0
    %1813 = vmatprep.mubr.bf16.mxu0 0
    %1814 = vmatmul.mubr.bf16.gmra.mrb[0].mxu0 %v1663
    %v1815 = vpop.f32.mrb[0].mxu0
    %v1816 = vadd.f32 0.0, %v1815
    %v1817 = vpop.f32.mrb[0].mxu0
    %v1818 = vpop.f32.mrb[0].mxu0
    %v1819 = vadd.f32 0.0, %v1818
    %v1820 = vpop.f32.mrb[0].mxu0
    %1821 = vmatprep.mubr.bf16.mxu0 0
    %1822 = vmatmul.mubr.bf16.gmra.mrb[0].mxu0 %v1666
    %v1823 = vpop.f32.mrb[0].mxu0
    %v1824 = vadd.f32 0.0, %v1823
    %v1825 = vpop.f32.mrb[0].mxu0
    %v1826 = vpop.f32.mrb[0].mxu0
    %v1827 = vadd.f32 0.0, %v1826
    %v1828 = vpop.f32.mrb[0].mxu0
    %1829 = vmatprep.mubr.bf16.mxu0 0
    %1830 = vmatmul.mubr.bf16.gmra.mrb[0].mxu0 %v1669
    %v1831 = vpop.f32.mrb[0].mxu0
    %v1832 = vadd.f32 0.0, %v1831
    %v1833 = vpop.f32.mrb[0].mxu0
    %v1834 = vpop.f32.mrb[0].mxu0
    %v1835 = vadd.f32 0.0, %v1834
    %v1836 = vpop.f32.mrb[0].mxu0
    %1837 = vmatprep.mubr.bf16.mxu0 0
    %1838 = vmatmul.mubr.bf16.gmra.mrb[0].mxu0 %v1672
    %v1839 = vpop.f32.mrb[0].mxu0
    %v1840 = vadd.f32 0.0, %v1839
    %v1841 = vpop.f32.mrb[0].mxu0
    %v1842 = vpop.f32.mrb[0].mxu0
    %v1843 = vadd.f32 0.0, %v1842
    %v1844 = vpop.f32.mrb[0].mxu0
    %1845 = vmatprep.mubr.bf16.mxu0 0
    %1846 = vmatmul.mubr.bf16.gmra.mrb[0].mxu0 %v1675
    %v1847 = vpop.f32.mrb[0].mxu0
    %v1848 = vadd.f32 0.0, %v1847
    %v1849 = vpop.f32.mrb[0].mxu0
    %v1850 = vpop.f32.mrb[0].mxu0
    %v1851 = vadd.f32 0.0, %v1850
    %v1852 = vpop.f32.mrb[0].mxu0
    %1853 = vmatprep.mubr.bf16.mxu0 0
    %1854 = vmatmul.mubr.bf16.gmra.mrb[0].mxu0 %v1678
    %v1855 = vpop.f32.mrb[0].mxu0
    %v1856 = vadd.f32 0.0, %v1855
    %v1857 = vpop.f32.mrb[0].mxu0
    %v1858 = vpop.f32.mrb[0].mxu0
    %v1859 = vadd.f32 0.0, %v1858
    %v1860 = vpop.f32.mrb[0].mxu0
    %1861 = vmatprep.mubr.bf16.mxu0 0
    %1862 = vmatmul.mubr.bf16.gmra.mrb[0].mxu0 %v1681
    %v1863 = vpop.f32.mrb[0].mxu0
    %v1864 = vadd.f32 0.0, %v1863
    %v1865 = vpop.f32.mrb[0].mxu0
    %v1866 = vpop.f32.mrb[0].mxu0
    %v1867 = vadd.f32 0.0, %v1866
    %v1868 = vpop.f32.mrb[0].mxu0
    %1869 = vmatprep.mubr.bf16.mxu0 0
    %1870 = vmatmul.mubr.bf16.gmra.mrb[0].mxu0 %v1684
    %v1871 = vpop.f32.mrb[0].mxu0
    %v1872 = vadd.f32 0.0, %v1871
    %v1873 = vpop.f32.mrb[0].mxu0
    %v1874 = vpop.f32.mrb[0].mxu0
    %v1875 = vadd.f32 0.0, %v1874
    %v1876 = vpop.f32.mrb[0].mxu0
    %1877 = vmatprep.mubr.bf16.mxu0 0
    %1878 = vmatmul.mubr.bf16.gmra.mrb[0].mxu0 %v1687
    %v1879 = vpop.f32.mrb[0].mxu0
    %v1880 = vadd.f32 0.0, %v1879
    %v1881 = vpop.f32.mrb[0].mxu0
    %v1882 = vpop.f32.mrb[0].mxu0
    %v1883 = vadd.f32 0.0, %v1882
    %v1884 = vpop.f32.mrb[0].mxu0
    %1885 = vmatprep.mubr.bf16.mxu0 0
    %1886 = vmatmul.mubr.bf16.gmra.mrb[0].mxu0 %v1690
    %v1887 = vpop.f32.mrb[0].mxu0
    %v1888 = vadd.f32 0.0, %v1887
    %v1889 = vpop.f32.mrb[0].mxu0
    %v1890 = vpop.f32.mrb[0].mxu0
    %v1891 = vadd.f32 0.0, %v1890
    %v1892 = vpop.f32.mrb[0].mxu0
    %1893 = vmatprep.mubr.bf16.mxu0 0
    %1894 = vmatmul.mubr.bf16.gmra.mrb[0].mxu0 %v1693
    %v1895 = vpop.f32.mrb[0].mxu0
    %v1896 = vadd.f32 0.0, %v1895
    %v1897 = vpop.f32.mrb[0].mxu0
    %v1898 = vpop.f32.mrb[0].mxu0
    %v1899 = vadd.f32 0.0, %v1898
    %v1900 = vpop.f32.mrb[0].mxu0
    %1901 = vmatprep.mubr.bf16.mxu0 0
    %1902 = vmatmul.mubr.bf16.gmra.mrb[0].mxu0 %v1696
    %v1903 = vpop.f32.mrb[0].mxu0
    %v1904 = vadd.f32 0.0, %v1903
    %v1905 = vpop.f32.mrb[0].mxu0
    %v1906 = vpop.f32.mrb[0].mxu0
    %v1907 = vadd.f32 0.0, %v1906
    %v1908 = vpop.f32.mrb[0].mxu0
    %1909 = vmatprep.mubr.bf16.mxu0 0
    %1910 = vmatmul.mubr.bf16.gmra.mrb[0].mxu0 %v1699
    %v1911 = vpop.f32.mrb[0].mxu0
    %v1912 = vadd.f32 0.0, %v1911
    %v1913 = vpop.f32.mrb[0].mxu0
    %v1914 = vpop.f32.mrb[0].mxu0
    %v1915 = vadd.f32 0.0, %v1914
    %v1916 = vpop.f32.mrb[0].mxu0
    %1917 = vmatprep.mubr.bf16.mxu0 0
    %1918 = vmatmul.mubr.bf16.gmra.mrb[0].mxu0 %v1702
    %v1919 = vpop.f32.mrb[0].mxu0
    %v1920 = vadd.f32 0.0, %v1919
    %v1921 = vpop.f32.mrb[0].mxu0
    %v1922 = vpop.f32.mrb[0].mxu0
    %v1923 = vadd.f32 0.0, %v1922
    %v1924 = vpop.f32.mrb[0].mxu0
    %1925 = vmatprep.mubr.bf16.mxu0 0
    %1926 = vmatmul.mubr.bf16.gmra.mrb[0].mxu0 %v1705
    %v1927 = vpop.f32.mrb[0].mxu0
    %v1928 = vadd.f32 0.0, %v1927
    %v1929 = vpop.f32.mrb[0].mxu0
    %v1930 = vpop.f32.mrb[0].mxu0
    %v1931 = vadd.f32 0.0, %v1930
    %v1932 = vpop.f32.mrb[0].mxu0
    %1933 = vmatprep.mubr.bf16.mxu0 0
    %1934 = vmatmul.mubr.bf16.gmra.mrb[0].mxu0 %v1708
    %v1935 = vpop.f32.mrb[0].mxu0
    %v1936 = vadd.f32 0.0, %v1935
    %v1937 = vpop.f32.mrb[0].mxu0
    %v1938 = vpop.f32.mrb[0].mxu0
    %v1939 = vadd.f32 0.0, %v1938
    %v1940 = vpop.f32.mrb[0].mxu0
    %1941 = vmatprep.mubr.bf16.mxu0 0
    %1942 = vmatmul.mubr.bf16.gmra.mrb[0].mxu0 %v1711
    %v1943 = vpop.f32.mrb[0].mxu0
    %v1944 = vadd.f32 0.0, %v1943
    %v1945 = vpop.f32.mrb[0].mxu0
    %v1946 = vpop.f32.mrb[0].mxu0
    %v1947 = vadd.f32 0.0, %v1946
    %v1948 = vpop.f32.mrb[0].mxu0
    %1949 = vmatprep.mubr.bf16.mxu0 0
    %1950 = vmatmul.mubr.bf16.gmra.mrb[0].mxu0 %v1714
    %v1951 = vpop.f32.mrb[0].mxu0
    %v1952 = vadd.f32 0.0, %v1951
    %v1953 = vpop.f32.mrb[0].mxu0
    %v1954 = vpop.f32.mrb[0].mxu0
    %v1955 = vadd.f32 0.0, %v1954
    %v1956 = vpop.f32.mrb[0].mxu0
    %1957 = vmatprep.mubr.bf16.mxu0 0
    %1958 = vmatmul.mubr.bf16.gmra.mrb[0].mxu0 %v1717
    %v1959 = vpop.f32.mrb[0].mxu0
    %v1960 = vadd.f32 0.0, %v1959
    %v1961 = vpop.f32.mrb[0].mxu0
    %v1962 = vpop.f32.mrb[0].mxu0
    %v1963 = vadd.f32 0.0, %v1962
    %v1964 = vpop.f32.mrb[0].mxu0
    %1965 = vmatprep.mubr.bf16.mxu0 0
    %1966 = vmatmul.mubr.bf16.gmra.mrb[0].mxu0 %v1720
    %v1967 = vpop.f32.mrb[0].mxu0
    %v1968 = vadd.f32 0.0, %v1967
    %v1969 = vpop.f32.mrb[0].mxu0
    %v1970 = vpop.f32.mrb[0].mxu0
    %v1971 = vadd.f32 0.0, %v1970
    %v1972 = vpop.f32.mrb[0].mxu0
    %1973 = vmatprep.mubr.bf16.mxu0 0
    %1974 = vmatmul.mubr.bf16.gmra.mrb[0].mxu0 %v1723
    %v1975 = vpop.f32.mrb[0].mxu0
    %v1976 = vadd.f32 0.0, %v1975
    %v1977 = vpop.f32.mrb[0].mxu0
    %v1978 = vpop.f32.mrb[0].mxu0
    %v1979 = vadd.f32 0.0, %v1978
    %v1980 = vpop.f32.mrb[0].mxu0
    %1981 = vmatprep.mubr.bf16.mxu0 0
    %1982 = vmatmul.mubr.bf16.gmra.mrb[0].mxu0 %v1726
    %v1983 = vpop.f32.mrb[0].mxu0
    %v1984 = vadd.f32 0.0, %v1983
    %v1985 = vpop.f32.mrb[0].mxu0
    %v1986 = vpop.f32.mrb[0].mxu0
    %v1987 = vadd.f32 0.0, %v1986
    %v1988 = vpop.f32.mrb[0].mxu0
    %1989 = vmatprep.mubr.bf16.mxu0 0
    %1990 = vmatmul.mubr.bf16.gmra.mrb[0].mxu0 %v1729
    %v1991 = vpop.f32.mrb[0].mxu0
    %v1992 = vadd.f32 0.0, %v1991
    %v1993 = vpop.f32.mrb[0].mxu0
    %v1994 = vpop.f32.mrb[0].mxu0
    %v1995 = vadd.f32 0.0, %v1994
    %v1996 = vpop.f32.mrb[0].mxu0
    %1997 = vmatprep.mubr.bf16.mxu0 0
    %1998 = vmatmul.mubr.bf16.gmra.mrb[0].mxu0 %v1732
    %v1999 = vpop.f32.mrb[0].mxu0
    %v2000 = vadd.f32 0.0, %v1999
    %v2001 = vpop.f32.mrb[0].mxu0
    %v2002 = vpop.f32.mrb[0].mxu0
    %v2003 = vadd.f32 0.0, %v2002
    %v2004 = vpop.f32.mrb[0].mxu0
    %2005 = vmatprep.mubr.bf16.mxu0 0
    %2006 = vmatmul.mubr.bf16.gmra.mrb[0].mxu0 %v1735
    %v2007 = vpop.f32.mrb[0].mxu0
    %v2008 = vadd.f32 0.0, %v2007
    %v2009 = vpop.f32.mrb[0].mxu0
    %v2010 = vpop.f32.mrb[0].mxu0
    %v2011 = vadd.f32 0.0, %v2010
    %v2012 = vpop.f32.mrb[0].mxu0
    %2013 = vmatprep.mubr.bf16.mxu0 0
    %2014 = vmatmul.mubr.bf16.gmra.mrb[0].mxu0 %v1738
    %v2015 = vpop.f32.mrb[0].mxu0
    %v2016 = vadd.f32 0.0, %v2015
    %v2017 = vpop.f32.mrb[0].mxu0
    %v2018 = vpop.f32.mrb[0].mxu0
    %v2019 = vadd.f32 0.0, %v2018
    %v2020 = vpop.f32.mrb[0].mxu0
    %2021 = vmatprep.mubr.bf16.mxu0 0
    %2022 = vmatmul.mubr.bf16.gmra.mrb[0].mxu0 %v1741
    %v2023 = vpop.f32.mrb[0].mxu0
    %v2024 = vadd.f32 0.0, %v2023
    %v2025 = vpop.f32.mrb[0].mxu0
    %v2026 = vpop.f32.mrb[0].mxu0
    %v2027 = vadd.f32 0.0, %v2026
    %v2028 = vpop.f32.mrb[0].mxu0
    %2029 = vmatprep.mubr.bf16.mxu0 0
    %2030 = vmatmul.mubr.bf16.gmra.mrb[0].mxu0 %v1744
    %v2031 = vpop.f32.mrb[0].mxu0
    %v2032 = vadd.f32 0.0, %v2031
    %v2033 = vpop.f32.mrb[0].mxu0
    %v2034 = vpop.f32.mrb[0].mxu0
    %v2035 = vadd.f32 0.0, %v2034
    %v2036 = vpop.f32.mrb[0].mxu0
    %2037 = vdwg.mxu0
    %v2038 = vadd.f32 %v1487, %v1784
    %v2039 = vadd.f32 %v1488, %v1787
    %v2040 = vadd.f32 %v1489, %v1792
    %v2041 = vadd.f32 %v1490, %v1795
    %v2042 = vadd.f32 %v1491, %v1800
    %v2043 = vadd.f32 %v1492, %v1803
    %v2044 = vadd.f32 %v1493, %v1808
    %v2045 = vadd.f32 %v1494, %v1811
    %v2046 = vadd.f32 %v1495, %v1816
    %v2047 = vadd.f32 %v1496, %v1819
    %v2048 = vadd.f32 %v1497, %v1824
    %v2049 = vadd.f32 %v1498, %v1827
    %v2050 = vadd.f32 %v1499, %v1832
    %v2051 = vadd.f32 %v1500, %v1835
    %v2052 = vadd.f32 %v1501, %v1840
    %v2053 = vadd.f32 %v1502, %v1843
    %v2054 = vadd.f32 %v1503, %v1848
    %v2055 = vadd.f32 %v1504, %v1851
    %v2056 = vadd.f32 %v1505, %v1856
    %v2057 = vadd.f32 %v1506, %v1859
    %v2058 = vadd.f32 %v1507, %v1864
    %v2059 = vadd.f32 %v1508, %v1867
    %v2060 = vadd.f32 %v1509, %v1872
    %v2061 = vadd.f32 %v1510, %v1875
    %v2062 = vadd.f32 %v1511, %v1880
    %v2063 = vadd.f32 %v1512, %v1883
    %v2064 = vadd.f32 %v1513, %v1888
    %v2065 = vadd.f32 %v1514, %v1891
    %v2066 = vadd.f32 %v1515, %v1896
    %v2067 = vadd.f32 %v1516, %v1899
    %v2068 = vadd.f32 %v1517, %v1904
    %v2069 = vadd.f32 %v1518, %v1907
    %v2070 = vadd.f32 %v1519, %v1912
    %v2071 = vadd.f32 %v1520, %v1915
    %v2072 = vadd.f32 %v1521, %v1920
    %v2073 = vadd.f32 %v1522, %v1923
    %v2074 = vadd.f32 %v1523, %v1928
    %v2075 = vadd.f32 %v1524, %v1931
    %v2076 = vadd.f32 %v1525, %v1936
    %v2077 = vadd.f32 %v1526, %v1939
    %v2078 = vadd.f32 %v1527, %v1944
    %v2079 = vadd.f32 %v1528, %v1947
    %v2080 = vadd.f32 %v1529, %v1952
    %v2081 = vadd.f32 %v1530, %v1955
    %v2082 = vadd.f32 %v1531, %v1960
    %v2083 = vadd.f32 %v1532, %v1963
    %v2084 = vadd.f32 %v1533, %v1968
    %v2085 = vadd.f32 %v1534, %v1971
    %v2086 = vadd.f32 %v1535, %v1976
    %v2087 = vadd.f32 %v1536, %v1979
    %v2088 = vadd.f32 %v1537, %v1984
    %v2089 = vadd.f32 %v1538, %v1987
    %v2090 = vadd.f32 %v1539, %v1992
    %v2091 = vadd.f32 %v1540, %v1995
    %v2092 = vadd.f32 %v1541, %v2000
    %v2093 = vadd.f32 %v1542, %v2003
    %v2094 = vadd.f32 %v1543, %v2008
    %v2095 = vadd.f32 %v1544, %v2011
    %v2096 = vadd.f32 %v1545, %v2016
    %v2097 = vadd.f32 %v1546, %v2019
    %v2098 = vadd.f32 %v1547, %v2024
    %v2099 = vadd.f32 %v1548, %v2027
    %v2100 = vadd.f32 %v1549, %v2032
    %v2101 = vadd.f32 %v1550, %v2035
    %v2102 = vld [vmem:[%s1551 + $0x1] sm:$0xff]
    %v2103 = vld [vmem:[%s1551 + $0x9] sm:$0xff]
    %v2104 = vld [vmem:[%s1551 + $0x19] sm:$0xff]
    %v2105 = vld [vmem:[%s1551 + $0x21] sm:$0xff]
    %v2106 = vld [vmem:[%s1551 + $0x31] sm:$0xff]
    %v2107 = vld [vmem:[%s1551 + $0x39] sm:$0xff]
    %v2108 = vld [vmem:[%s1551 + $0x49] sm:$0xff]
    %v2109 = vld [vmem:[%s1551 + $0x51] sm:$0xff]
    %v2110 = vld [vmem:[%s1551 + $0x61] sm:$0xff]
    %v2111 = vld [vmem:[%s1551 + $0x69] sm:$0xff]
    %v2112 = vld [vmem:[%s1551 + $0x79] sm:$0xff]
    %v2113 = vld [vmem:[%s1551 + $0x81] sm:$0xff]
    %v2114 = vld [vmem:[%s1551 + $0x91] sm:$0xff]
    %v2115 = vld [vmem:[%s1551 + $0x99] sm:$0xff]
    %v2116 = vld [vmem:[%s1551 + $0xa9] sm:$0xff]
    %v2117 = vld [vmem:[%s1551 + $0xb1] sm:$0xff]
    %v2118 = vld [vmem:[%s1551 + $0xc1] sm:$0xff]
    %v2119 = vld [vmem:[%s1551 + $0xc9] sm:$0xff]
    %v2120 = vld [vmem:[%s1551 + $0xd9] sm:$0xff]
    %v2121 = vld [vmem:[%s1551 + $0xe1] sm:$0xff]
    %v2122 = vld [vmem:[%s1551 + $0xf1] sm:$0xff]
    %v2123 = vld [vmem:[%s1551 + $0xf9] sm:$0xff]
    %v2124 = vld [vmem:[%s1551 + $0x109] sm:$0xff]
    %v2125 = vld [vmem:[%s1551 + $0x111] sm:$0xff]
    %v2126 = vld [vmem:[%s1551 + $0x121] sm:$0xff]
    %v2127 = vld [vmem:[%s1551 + $0x129] sm:$0xff]
    %v2128 = vld [vmem:[%s1551 + $0x139] sm:$0xff]
    %v2129 = vld [vmem:[%s1551 + $0x141] sm:$0xff]
    %v2130 = vld [vmem:[%s1551 + $0x151] sm:$0xff]
    %v2131 = vld [vmem:[%s1551 + $0x159] sm:$0xff]
    %v2132 = vld [vmem:[%s1551 + $0x169] sm:$0xff]
    %v2133 = vld [vmem:[%s1551 + $0x171] sm:$0xff]
    %v2134 = vld [vmem:[%s1551 + $0x1b1] sm:$0xff]
    %v2135 = vld [vmem:[%s1551 + $0x1b9] sm:$0xff]
    %v2136 = vld [vmem:[%s1551 + $0x1c9] sm:$0xff]
    %v2137 = vld [vmem:[%s1551 + $0x1d1] sm:$0xff]
    %v2138 = vld [vmem:[%s1551 + $0x1e1] sm:$0xff]
    %v2139 = vld [vmem:[%s1551 + $0x1e9] sm:$0xff]
    %v2140 = vld [vmem:[%s1551 + $0x1f9] sm:$0xff]
    %v2141 = vld [vmem:[%s1551 + $0x201] sm:$0xff]
    %v2142 = vld [vmem:[%s1551 + $0x211] sm:$0xff]
    %v2143 = vld [vmem:[%s1551 + $0x219] sm:$0xff]
    %v2144 = vld [vmem:[%s1551 + $0x229] sm:$0xff]
    %v2145 = vld [vmem:[%s1551 + $0x231] sm:$0xff]
    %v2146 = vld [vmem:[%s1551 + $0x241] sm:$0xff]
    %v2147 = vld [vmem:[%s1551 + $0x249] sm:$0xff]
    %v2148 = vld [vmem:[%s1551 + $0x259] sm:$0xff]
    %v2149 = vld [vmem:[%s1551 + $0x261] sm:$0xff]
    %v2150 = vld [vmem:[%s1551 + $0x271] sm:$0xff]
    %v2151 = vld [vmem:[%s1551 + $0x279] sm:$0xff]
    %v2152 = vld [vmem:[%s1551 + $0x289] sm:$0xff]
    %v2153 = vld [vmem:[%s1551 + $0x291] sm:$0xff]
    %v2154 = vld [vmem:[%s1551 + $0x2a1] sm:$0xff]
    %v2155 = vld [vmem:[%s1551 + $0x2a9] sm:$0xff]
    %v2156 = vld [vmem:[%s1551 + $0x2b9] sm:$0xff]
    %v2157 = vld [vmem:[%s1551 + $0x2c1] sm:$0xff]
    %v2158 = vld [vmem:[%s1551 + $0x2d1] sm:$0xff]
    %v2159 = vld [vmem:[%s1551 + $0x2d9] sm:$0xff]
    %v2160 = vld [vmem:[%s1551 + $0x2e9] sm:$0xff]
    %v2161 = vld [vmem:[%s1551 + $0x2f1] sm:$0xff]
    %v2162 = vld [vmem:[%s1551 + $0x301] sm:$0xff]
    %v2163 = vld [vmem:[%s1551 + $0x309] sm:$0xff]
    %v2164 = vld [vmem:[%s1551 + $0x319] sm:$0xff]
    %v2165 = vld [vmem:[%s1551 + $0x321] sm:$0xff]
    %v2166 = vpack.c.bf16 %v2103, %v2102
    %v2167 = vpack.c.bf16 %v2105, %v2104
    %v2168 = vpack.c.bf16 %v2107, %v2106
    %v2169 = vpack.c.bf16 %v2109, %v2108
    %v2170 = vpack.c.bf16 %v2111, %v2110
    %v2171 = vpack.c.bf16 %v2113, %v2112
    %v2172 = vpack.c.bf16 %v2115, %v2114
    %v2173 = vpack.c.bf16 %v2117, %v2116
    %v2174 = vpack.c.bf16 %v2119, %v2118
    %v2175 = vpack.c.bf16 %v2121, %v2120
    %v2176 = vpack.c.bf16 %v2123, %v2122
    %v2177 = vpack.c.bf16 %v2125, %v2124
    %v2178 = vpack.c.bf16 %v2127, %v2126
    %v2179 = vpack.c.bf16 %v2129, %v2128
    %v2180 = vpack.c.bf16 %v2131, %v2130
    %v2181 = vpack.c.bf16 %v2133, %v2132
    %v2182 = vpack.c.bf16 %v2135, %v2134
    %v2183 = vpack.c.bf16 %v2137, %v2136
    %v2184 = vpack.c.bf16 %v2139, %v2138
    %v2185 = vpack.c.bf16 %v2141, %v2140
    %v2186 = vpack.c.bf16 %v2143, %v2142
    %v2187 = vpack.c.bf16 %v2145, %v2144
    %v2188 = vpack.c.bf16 %v2147, %v2146
    %v2189 = vpack.c.bf16 %v2149, %v2148
    %v2190 = vpack.c.bf16 %v2151, %v2150
    %v2191 = vpack.c.bf16 %v2153, %v2152
    %v2192 = vpack.c.bf16 %v2155, %v2154
    %v2193 = vpack.c.bf16 %v2157, %v2156
    %v2194 = vpack.c.bf16 %v2159, %v2158
    %v2195 = vpack.c.bf16 %v2161, %v2160
    %v2196 = vpack.c.bf16 %v2163, %v2162
    %v2197 = vpack.c.bf16 %v2165, %v2164
    %s2198 = scalar_lea.vmem %s1, 8
    %v2199 = vld [vmem:[%s2198] sm:$0x3]
    %v2201 = vsel %vm223, %v2166, 0
    %v2204 = vsel %vm223, %v2167, 0
    %v2207 = vsel %vm223, %v2168, 0
    %v2210 = vsel %vm223, %v2169, 0
    %v2213 = vsel %vm223, %v2170, 0
    %v2216 = vsel %vm223, %v2171, 0
    %v2219 = vsel %vm223, %v2172, 0
    %v2222 = vsel %vm223, %v2173, 0
    %v2225 = vsel %vm223, %v2174, 0
    %v2228 = vsel %vm223, %v2175, 0
    %v2231 = vsel %vm223, %v2176, 0
    %v2234 = vsel %vm223, %v2177, 0
    %v2237 = vsel %vm223, %v2178, 0
    %v2240 = vsel %vm223, %v2179, 0
    %v2243 = vsel %vm223, %v2180, 0
    %v2246 = vsel %vm223, %v2181, 0
    %v2249 = vsel %vm223, %v2182, 0
    %v2252 = vsel %vm223, %v2183, 0
    %v2255 = vsel %vm223, %v2184, 0
    %v2258 = vsel %vm223, %v2185, 0
    %v2261 = vsel %vm223, %v2186, 0
    %v2264 = vsel %vm223, %v2187, 0
    %v2267 = vsel %vm223, %v2188, 0
    %v2270 = vsel %vm223, %v2189, 0
    %v2273 = vsel %vm223, %v2190, 0
    %v2276 = vsel %vm223, %v2191, 0
    %v2279 = vsel %vm223, %v2192, 0
    %v2282 = vsel %vm223, %v2193, 0
    %v2285 = vsel %vm223, %v2194, 0
    %v2288 = vsel %vm223, %v2195, 0
    %v2291 = vsel %vm223, %v2196, 0
    %v2294 = vsel %vm223, %v2197, 0
    %v2297 = vsel %vm320, %v2199, 0
    %2299 = vmatprep.subr.bf16.mxu0 0
    %2300 = vmatpush1.bf16.msra.mxu0 %v2297
    %2301 = vmatprep.subr.bf16.mxu0 0
    %2302 = vmatpush1.bf16.msra.mxu0 0
    %2303 = vmatprep.subr.bf16.mxu0 0
    %2304 = vmatpush1.bf16.msra.mxu0 0
    %2305 = vmatprep.subr.bf16.mxu0 0
    %2306 = vmatpush1.bf16.msra.mxu0 0
    %2307 = vmatprep.subr.bf16.mxu0 0
    %2308 = vmatpush1.bf16.msra.mxu0 0
    %2309 = vmatprep.subr.bf16.mxu0 0
    %2310 = vmatpush1.bf16.msra.mxu0 0
    %2311 = vmatprep.subr.bf16.mxu0 0
    %2312 = vmatpush1.bf16.msra.mxu0 0
    %2313 = vmatprep.subr.bf16.mxu0 0
    %2314 = vmatpush1.bf16.msra.mxu0 0
    %2315 = vmatprep.subr.bf16.mxu0 0
    %2316 = vmatpush1.bf16.msra.mxu0 0
    %2317 = vmatprep.subr.bf16.mxu0 0
    %2318 = vmatpush1.bf16.msra.mxu0 0
    %2319 = vmatprep.subr.bf16.mxu0 0
    %2320 = vmatpush1.bf16.msra.mxu0 0
    %2321 = vmatprep.subr.bf16.mxu0 0
    %2322 = vmatpush1.bf16.msra.mxu0 0
    %2323 = vmatprep.subr.bf16.mxu0 0
    %2324 = vmatpush1.bf16.msra.mxu0 0
    %2325 = vmatprep.subr.bf16.mxu0 0
    %2326 = vmatpush1.bf16.msra.mxu0 0
    %2327 = vmatprep.subr.bf16.mxu0 0
    %2328 = vmatpush1.bf16.msra.mxu0 0
    %2329 = vmatprep.subr.bf16.mxu0 0
    %2330 = vmatpush1.bf16.msra.mxu0 0
    %2331 = vmatprep.mubr.bf16.mxu0 0
    %2332 = vmatmul.mubr.bf16.gmra.mrb[0].mxu0 %v2201
    %v2333 = vpop.f32.mrb[0].mxu0
    %v2334 = vadd.f32 0.0, %v2333
    %v2335 = vpop.f32.mrb[0].mxu0
    %v2336 = vpop.f32.mrb[0].mxu0
    %v2337 = vadd.f32 0.0, %v2336
    %v2338 = vpop.f32.mrb[0].mxu0
    %2339 = vmatprep.mubr.bf16.mxu0 0
    %2340 = vmatmul.mubr.bf16.gmra.mrb[0].mxu0 %v2204
    %v2341 = vpop.f32.mrb[0].mxu0
    %v2342 = vadd.f32 0.0, %v2341
    %v2343 = vpop.f32.mrb[0].mxu0
    %v2344 = vpop.f32.mrb[0].mxu0
    %v2345 = vadd.f32 0.0, %v2344
    %v2346 = vpop.f32.mrb[0].mxu0
    %2347 = vmatprep.mubr.bf16.mxu0 0
    %2348 = vmatmul.mubr.bf16.gmra.mrb[0].mxu0 %v2207
    %v2349 = vpop.f32.mrb[0].mxu0
    %v2350 = vadd.f32 0.0, %v2349
    %v2351 = vpop.f32.mrb[0].mxu0
    %v2352 = vpop.f32.mrb[0].mxu0
    %v2353 = vadd.f32 0.0, %v2352
    %v2354 = vpop.f32.mrb[0].mxu0
    %2355 = vmatprep.mubr.bf16.mxu0 0
    %2356 = vmatmul.mubr.bf16.gmra.mrb[0].mxu0 %v2210
    %v2357 = vpop.f32.mrb[0].mxu0
    %v2358 = vadd.f32 0.0, %v2357
    %v2359 = vpop.f32.mrb[0].mxu0
    %v2360 = vpop.f32.mrb[0].mxu0
    %v2361 = vadd.f32 0.0, %v2360
    %v2362 = vpop.f32.mrb[0].mxu0
    %2363 = vmatprep.mubr.bf16.mxu0 0
    %2364 = vmatmul.mubr.bf16.gmra.mrb[0].mxu0 %v2213
    %v2365 = vpop.f32.mrb[0].mxu0
    %v2366 = vadd.f32 0.0, %v2365
    %v2367 = vpop.f32.mrb[0].mxu0
    %v2368 = vpop.f32.mrb[0].mxu0
    %v2369 = vadd.f32 0.0, %v2368
    %v2370 = vpop.f32.mrb[0].mxu0
    %2371 = vmatprep.mubr.bf16.mxu0 0
    %2372 = vmatmul.mubr.bf16.gmra.mrb[0].mxu0 %v2216
    %v2373 = vpop.f32.mrb[0].mxu0
    %v2374 = vadd.f32 0.0, %v2373
    %v2375 = vpop.f32.mrb[0].mxu0
    %v2376 = vpop.f32.mrb[0].mxu0
    %v2377 = vadd.f32 0.0, %v2376
    %v2378 = vpop.f32.mrb[0].mxu0
    %2379 = vmatprep.mubr.bf16.mxu0 0
    %2380 = vmatmul.mubr.bf16.gmra.mrb[0].mxu0 %v2219
    %v2381 = vpop.f32.mrb[0].mxu0
    %v2382 = vadd.f32 0.0, %v2381
    %v2383 = vpop.f32.mrb[0].mxu0
    %v2384 = vpop.f32.mrb[0].mxu0
    %v2385 = vadd.f32 0.0, %v2384
    %v2386 = vpop.f32.mrb[0].mxu0
    %2387 = vmatprep.mubr.bf16.mxu0 0
    %2388 = vmatmul.mubr.bf16.gmra.mrb[0].mxu0 %v2222
    %v2389 = vpop.f32.mrb[0].mxu0
    %v2390 = vadd.f32 0.0, %v2389
    %v2391 = vpop.f32.mrb[0].mxu0
    %v2392 = vpop.f32.mrb[0].mxu0
    %v2393 = vadd.f32 0.0, %v2392
    %v2394 = vpop.f32.mrb[0].mxu0
    %2395 = vmatprep.mubr.bf16.mxu0 0
    %2396 = vmatmul.mubr.bf16.gmra.mrb[0].mxu0 %v2225
    %v2397 = vpop.f32.mrb[0].mxu0
    %v2398 = vadd.f32 0.0, %v2397
    %v2399 = vpop.f32.mrb[0].mxu0
    %v2400 = vpop.f32.mrb[0].mxu0
    %v2401 = vadd.f32 0.0, %v2400
    %v2402 = vpop.f32.mrb[0].mxu0
    %2403 = vmatprep.mubr.bf16.mxu0 0
    %2404 = vmatmul.mubr.bf16.gmra.mrb[0].mxu0 %v2228
    %v2405 = vpop.f32.mrb[0].mxu0
    %v2406 = vadd.f32 0.0, %v2405
    %v2407 = vpop.f32.mrb[0].mxu0
    %v2408 = vpop.f32.mrb[0].mxu0
    %v2409 = vadd.f32 0.0, %v2408
    %v2410 = vpop.f32.mrb[0].mxu0
    %2411 = vmatprep.mubr.bf16.mxu0 0
    %2412 = vmatmul.mubr.bf16.gmra.mrb[0].mxu0 %v2231
    %v2413 = vpop.f32.mrb[0].mxu0
    %v2414 = vadd.f32 0.0, %v2413
    %v2415 = vpop.f32.mrb[0].mxu0
    %v2416 = vpop.f32.mrb[0].mxu0
    %v2417 = vadd.f32 0.0, %v2416
    %v2418 = vpop.f32.mrb[0].mxu0
    %2419 = vmatprep.mubr.bf16.mxu0 0
    %2420 = vmatmul.mubr.bf16.gmra.mrb[0].mxu0 %v2234
    %v2421 = vpop.f32.mrb[0].mxu0
    %v2422 = vadd.f32 0.0, %v2421
    %v2423 = vpop.f32.mrb[0].mxu0
    %v2424 = vpop.f32.mrb[0].mxu0
    %v2425 = vadd.f32 0.0, %v2424
    %v2426 = vpop.f32.mrb[0].mxu0
    %2427 = vmatprep.mubr.bf16.mxu0 0
    %2428 = vmatmul.mubr.bf16.gmra.mrb[0].mxu0 %v2237
    %v2429 = vpop.f32.mrb[0].mxu0
    %v2430 = vadd.f32 0.0, %v2429
    %v2431 = vpop.f32.mrb[0].mxu0
    %v2432 = vpop.f32.mrb[0].mxu0
    %v2433 = vadd.f32 0.0, %v2432
    %v2434 = vpop.f32.mrb[0].mxu0
    %2435 = vmatprep.mubr.bf16.mxu0 0
    %2436 = vmatmul.mubr.bf16.gmra.mrb[0].mxu0 %v2240
    %v2437 = vpop.f32.mrb[0].mxu0
    %v2438 = vadd.f32 0.0, %v2437
    %v2439 = vpop.f32.mrb[0].mxu0
    %v2440 = vpop.f32.mrb[0].mxu0
    %v2441 = vadd.f32 0.0, %v2440
    %v2442 = vpop.f32.mrb[0].mxu0
    %2443 = vmatprep.mubr.bf16.mxu0 0
    %2444 = vmatmul.mubr.bf16.gmra.mrb[0].mxu0 %v2243
    %v2445 = vpop.f32.mrb[0].mxu0
    %v2446 = vadd.f32 0.0, %v2445
    %v2447 = vpop.f32.mrb[0].mxu0
    %v2448 = vpop.f32.mrb[0].mxu0
    %v2449 = vadd.f32 0.0, %v2448
    %v2450 = vpop.f32.mrb[0].mxu0
    %2451 = vmatprep.mubr.bf16.mxu0 0
    %2452 = vmatmul.mubr.bf16.gmra.mrb[0].mxu0 %v2246
    %v2453 = vpop.f32.mrb[0].mxu0
    %v2454 = vadd.f32 0.0, %v2453
    %v2455 = vpop.f32.mrb[0].mxu0
    %v2456 = vpop.f32.mrb[0].mxu0
    %v2457 = vadd.f32 0.0, %v2456
    %v2458 = vpop.f32.mrb[0].mxu0
    %2459 = vmatprep.mubr.bf16.mxu0 0
    %2460 = vmatmul.mubr.bf16.gmra.mrb[0].mxu0 %v2249
    %v2461 = vpop.f32.mrb[0].mxu0
    %v2462 = vadd.f32 0.0, %v2461
    %v2463 = vpop.f32.mrb[0].mxu0
    %v2464 = vpop.f32.mrb[0].mxu0
    %v2465 = vadd.f32 0.0, %v2464
    %v2466 = vpop.f32.mrb[0].mxu0
    %2467 = vmatprep.mubr.bf16.mxu0 0
    %2468 = vmatmul.mubr.bf16.gmra.mrb[0].mxu0 %v2252
    %v2469 = vpop.f32.mrb[0].mxu0
    %v2470 = vadd.f32 0.0, %v2469
    %v2471 = vpop.f32.mrb[0].mxu0
    %v2472 = vpop.f32.mrb[0].mxu0
    %v2473 = vadd.f32 0.0, %v2472
    %v2474 = vpop.f32.mrb[0].mxu0
    %2475 = vmatprep.mubr.bf16.mxu0 0
    %2476 = vmatmul.mubr.bf16.gmra.mrb[0].mxu0 %v2255
    %v2477 = vpop.f32.mrb[0].mxu0
    %v2478 = vadd.f32 0.0, %v2477
    %v2479 = vpop.f32.mrb[0].mxu0
    %v2480 = vpop.f32.mrb[0].mxu0
    %v2481 = vadd.f32 0.0, %v2480
    %v2482 = vpop.f32.mrb[0].mxu0
    %2483 = vmatprep.mubr.bf16.mxu0 0
    %2484 = vmatmul.mubr.bf16.gmra.mrb[0].mxu0 %v2258
    %v2485 = vpop.f32.mrb[0].mxu0
    %v2486 = vadd.f32 0.0, %v2485
    %v2487 = vpop.f32.mrb[0].mxu0
    %v2488 = vpop.f32.mrb[0].mxu0
    %v2489 = vadd.f32 0.0, %v2488
    %v2490 = vpop.f32.mrb[0].mxu0
    %2491 = vmatprep.mubr.bf16.mxu0 0
    %2492 = vmatmul.mubr.bf16.gmra.mrb[0].mxu0 %v2261
    %v2493 = vpop.f32.mrb[0].mxu0
    %v2494 = vadd.f32 0.0, %v2493
    %v2495 = vpop.f32.mrb[0].mxu0
    %v2496 = vpop.f32.mrb[0].mxu0
    %v2497 = vadd.f32 0.0, %v2496
    %v2498 = vpop.f32.mrb[0].mxu0
    %2499 = vmatprep.mubr.bf16.mxu0 0
    %2500 = vmatmul.mubr.bf16.gmra.mrb[0].mxu0 %v2264
    %v2501 = vpop.f32.mrb[0].mxu0
    %v2502 = vadd.f32 0.0, %v2501
    %v2503 = vpop.f32.mrb[0].mxu0
    %v2504 = vpop.f32.mrb[0].mxu0
    %v2505 = vadd.f32 0.0, %v2504
    %v2506 = vpop.f32.mrb[0].mxu0
    %2507 = vmatprep.mubr.bf16.mxu0 0
    %2508 = vmatmul.mubr.bf16.gmra.mrb[0].mxu0 %v2267
    %v2509 = vpop.f32.mrb[0].mxu0
    %v2510 = vadd.f32 0.0, %v2509
    %v2511 = vpop.f32.mrb[0].mxu0
    %v2512 = vpop.f32.mrb[0].mxu0
    %v2513 = vadd.f32 0.0, %v2512
    %v2514 = vpop.f32.mrb[0].mxu0
    %2515 = vmatprep.mubr.bf16.mxu0 0
    %2516 = vmatmul.mubr.bf16.gmra.mrb[0].mxu0 %v2270
    %v2517 = vpop.f32.mrb[0].mxu0
    %v2518 = vadd.f32 0.0, %v2517
    %v2519 = vpop.f32.mrb[0].mxu0
    %v2520 = vpop.f32.mrb[0].mxu0
    %v2521 = vadd.f32 0.0, %v2520
    %v2522 = vpop.f32.mrb[0].mxu0
    %2523 = vmatprep.mubr.bf16.mxu0 0
    %2524 = vmatmul.mubr.bf16.gmra.mrb[0].mxu0 %v2273
    %v2525 = vpop.f32.mrb[0].mxu0
    %v2526 = vadd.f32 0.0, %v2525
    %v2527 = vpop.f32.mrb[0].mxu0
    %v2528 = vpop.f32.mrb[0].mxu0
    %v2529 = vadd.f32 0.0, %v2528
    %v2530 = vpop.f32.mrb[0].mxu0
    %2531 = vmatprep.mubr.bf16.mxu0 0
    %2532 = vmatmul.mubr.bf16.gmra.mrb[0].mxu0 %v2276
    %v2533 = vpop.f32.mrb[0].mxu0
    %v2534 = vadd.f32 0.0, %v2533
    %v2535 = vpop.f32.mrb[0].mxu0
    %v2536 = vpop.f32.mrb[0].mxu0
    %v2537 = vadd.f32 0.0, %v2536
    %v2538 = vpop.f32.mrb[0].mxu0
    %2539 = vmatprep.mubr.bf16.mxu0 0
    %2540 = vmatmul.mubr.bf16.gmra.mrb[0].mxu0 %v2279
    %v2541 = vpop.f32.mrb[0].mxu0
    %v2542 = vadd.f32 0.0, %v2541
    %v2543 = vpop.f32.mrb[0].mxu0
    %v2544 = vpop.f32.mrb[0].mxu0
    %v2545 = vadd.f32 0.0, %v2544
    %v2546 = vpop.f32.mrb[0].mxu0
    %2547 = vmatprep.mubr.bf16.mxu0 0
    %2548 = vmatmul.mubr.bf16.gmra.mrb[0].mxu0 %v2282
    %v2549 = vpop.f32.mrb[0].mxu0
    %v2550 = vadd.f32 0.0, %v2549
    %v2551 = vpop.f32.mrb[0].mxu0
    %v2552 = vpop.f32.mrb[0].mxu0
    %v2553 = vadd.f32 0.0, %v2552
    %v2554 = vpop.f32.mrb[0].mxu0
    %2555 = vmatprep.mubr.bf16.mxu0 0
    %2556 = vmatmul.mubr.bf16.gmra.mrb[0].mxu0 %v2285
    %v2557 = vpop.f32.mrb[0].mxu0
    %v2558 = vadd.f32 0.0, %v2557
    %v2559 = vpop.f32.mrb[0].mxu0
    %v2560 = vpop.f32.mrb[0].mxu0
    %v2561 = vadd.f32 0.0, %v2560
    %v2562 = vpop.f32.mrb[0].mxu0
    %2563 = vmatprep.mubr.bf16.mxu0 0
    %2564 = vmatmul.mubr.bf16.gmra.mrb[0].mxu0 %v2288
    %v2565 = vpop.f32.mrb[0].mxu0
    %v2566 = vadd.f32 0.0, %v2565
    %v2567 = vpop.f32.mrb[0].mxu0
    %v2568 = vpop.f32.mrb[0].mxu0
    %v2569 = vadd.f32 0.0, %v2568
    %v2570 = vpop.f32.mrb[0].mxu0
    %2571 = vmatprep.mubr.bf16.mxu0 0
    %2572 = vmatmul.mubr.bf16.gmra.mrb[0].mxu0 %v2291
    %v2573 = vpop.f32.mrb[0].mxu0
    %v2574 = vadd.f32 0.0, %v2573
    %v2575 = vpop.f32.mrb[0].mxu0
    %v2576 = vpop.f32.mrb[0].mxu0
    %v2577 = vadd.f32 0.0, %v2576
    %v2578 = vpop.f32.mrb[0].mxu0
    %2579 = vmatprep.mubr.bf16.mxu0 0
    %2580 = vmatmul.mubr.bf16.gmra.mrb[0].mxu0 %v2294
    %v2581 = vpop.f32.mrb[0].mxu0
    %v2582 = vadd.f32 0.0, %v2581
    %v2583 = vpop.f32.mrb[0].mxu0
    %v2584 = vpop.f32.mrb[0].mxu0
    %v2585 = vadd.f32 0.0, %v2584
    %v2586 = vpop.f32.mrb[0].mxu0
    %2587 = vdwg.mxu0
    %v2588 = vadd.f32 %v2038, %v2334
    %v2589 = vadd.f32 %v2039, %v2337
    %v2590 = vadd.f32 %v2040, %v2342
    %v2591 = vadd.f32 %v2041, %v2345
    %v2592 = vadd.f32 %v2042, %v2350
    %v2593 = vadd.f32 %v2043, %v2353
    %v2594 = vadd.f32 %v2044, %v2358
    %v2595 = vadd.f32 %v2045, %v2361
    %v2596 = vadd.f32 %v2046, %v2366
    %v2597 = vadd.f32 %v2047, %v2369
    %v2598 = vadd.f32 %v2048, %v2374
    %v2599 = vadd.f32 %v2049, %v2377
    %v2600 = vadd.f32 %v2050, %v2382
    %v2601 = vadd.f32 %v2051, %v2385
    %v2602 = vadd.f32 %v2052, %v2390
    %v2603 = vadd.f32 %v2053, %v2393
    %v2604 = vadd.f32 %v2054, %v2398
    %v2605 = vadd.f32 %v2055, %v2401
    %v2606 = vadd.f32 %v2056, %v2406
    %v2607 = vadd.f32 %v2057, %v2409
    %v2608 = vadd.f32 %v2058, %v2414
    %v2609 = vadd.f32 %v2059, %v2417
    %v2610 = vadd.f32 %v2060, %v2422
    %v2611 = vadd.f32 %v2061, %v2425
    %v2612 = vadd.f32 %v2062, %v2430
    %v2613 = vadd.f32 %v2063, %v2433
    %v2614 = vadd.f32 %v2064, %v2438
    %v2615 = vadd.f32 %v2065, %v2441
    %v2616 = vadd.f32 %v2066, %v2446
    %v2617 = vadd.f32 %v2067, %v2449
    %v2618 = vadd.f32 %v2068, %v2454
    %v2619 = vadd.f32 %v2069, %v2457
    %v2620 = vadd.f32 %v2070, %v2462
    %v2621 = vadd.f32 %v2071, %v2465
    %v2622 = vadd.f32 %v2072, %v2470
    %v2623 = vadd.f32 %v2073, %v2473
    %v2624 = vadd.f32 %v2074, %v2478
    %v2625 = vadd.f32 %v2075, %v2481
    %v2626 = vadd.f32 %v2076, %v2486
    %v2627 = vadd.f32 %v2077, %v2489
    %v2628 = vadd.f32 %v2078, %v2494
    %v2629 = vadd.f32 %v2079, %v2497
    %v2630 = vadd.f32 %v2080, %v2502
    %v2631 = vadd.f32 %v2081, %v2505
    %v2632 = vadd.f32 %v2082, %v2510
    %v2633 = vadd.f32 %v2083, %v2513
    %v2634 = vadd.f32 %v2084, %v2518
    %v2635 = vadd.f32 %v2085, %v2521
    %v2636 = vadd.f32 %v2086, %v2526
    %v2637 = vadd.f32 %v2087, %v2529
    %v2638 = vadd.f32 %v2088, %v2534
    %v2639 = vadd.f32 %v2089, %v2537
    %v2640 = vadd.f32 %v2090, %v2542
    %v2641 = vadd.f32 %v2091, %v2545
    %v2642 = vadd.f32 %v2092, %v2550
    %v2643 = vadd.f32 %v2093, %v2553
    %v2644 = vadd.f32 %v2094, %v2558
    %v2645 = vadd.f32 %v2095, %v2561
    %v2646 = vadd.f32 %v2096, %v2566
    %v2647 = vadd.f32 %v2097, %v2569
    %v2648 = vadd.f32 %v2098, %v2574
    %v2649 = vadd.f32 %v2099, %v2577
    %v2650 = vadd.f32 %v2100, %v2582
    %v2651 = vadd.f32 %v2101, %v2585
    %v2652 = vld [vmem:[%s1551 + $0x2] sm:$0xff]
    %v2653 = vld [vmem:[%s1551 + $0xa] sm:$0xff]
    %v2654 = vld [vmem:[%s1551 + $0x1a] sm:$0xff]
    %v2655 = vld [vmem:[%s1551 + $0x22] sm:$0xff]
    %v2656 = vld [vmem:[%s1551 + $0x32] sm:$0xff]
    %v2657 = vld [vmem:[%s1551 + $0x3a] sm:$0xff]
    %v2658 = vld [vmem:[%s1551 + $0x4a] sm:$0xff]
    %v2659 = vld [vmem:[%s1551 + $0x52] sm:$0xff]
    %v2660 = vld [vmem:[%s1551 + $0x62] sm:$0xff]
    %v2661 = vld [vmem:[%s1551 + $0x6a] sm:$0xff]
    %v2662 = vld [vmem:[%s1551 + $0x7a] sm:$0xff]
    %v2663 = vld [vmem:[%s1551 + $0x82] sm:$0xff]
    %v2664 = vld [vmem:[%s1551 + $0x92] sm:$0xff]
    %v2665 = vld [vmem:[%s1551 + $0x9a] sm:$0xff]
    %v2666 = vld [vmem:[%s1551 + $0xaa] sm:$0xff]
    %v2667 = vld [vmem:[%s1551 + $0xb2] sm:$0xff]
    %v2668 = vld [vmem:[%s1551 + $0xc2] sm:$0xff]
    %v2669 = vld [vmem:[%s1551 + $0xca] sm:$0xff]
    %v2670 = vld [vmem:[%s1551 + $0xda] sm:$0xff]
    %v2671 = vld [vmem:[%s1551 + $0xe2] sm:$0xff]
    %v2672 = vld [vmem:[%s1551 + $0xf2] sm:$0xff]
    %v2673 = vld [vmem:[%s1551 + $0xfa] sm:$0xff]
    %v2674 = vld [vmem:[%s1551 + $0x10a] sm:$0xff]
    %v2675 = vld [vmem:[%s1551 + $0x112] sm:$0xff]
    %v2676 = vld [vmem:[%s1551 + $0x122] sm:$0xff]
    %v2677 = vld [vmem:[%s1551 + $0x12a] sm:$0xff]
    %v2678 = vld [vmem:[%s1551 + $0x13a] sm:$0xff]
    %v2679 = vld [vmem:[%s1551 + $0x142] sm:$0xff]
    %v2680 = vld [vmem:[%s1551 + $0x152] sm:$0xff]
    %v2681 = vld [vmem:[%s1551 + $0x15a] sm:$0xff]
    %v2682 = vld [vmem:[%s1551 + $0x16a] sm:$0xff]
    %v2683 = vld [vmem:[%s1551 + $0x172] sm:$0xff]
    %v2684 = vld [vmem:[%s1551 + $0x1b2] sm:$0xff]
    %v2685 = vld [vmem:[%s1551 + $0x1ba] sm:$0xff]
    %v2686 = vld [vmem:[%s1551 + $0x1ca] sm:$0xff]
    %v2687 = vld [vmem:[%s1551 + $0x1d2] sm:$0xff]
    %v2688 = vld [vmem:[%s1551 + $0x1e2] sm:$0xff]
    %v2689 = vld [vmem:[%s1551 + $0x1ea] sm:$0xff]
    %v2690 = vld [vmem:[%s1551 + $0x1fa] sm:$0xff]
    %v2691 = vld [vmem:[%s1551 + $0x202] sm:$0xff]
    %v2692 = vld [vmem:[%s1551 + $0x212] sm:$0xff]
    %v2693 = vld [vmem:[%s1551 + $0x21a] sm:$0xff]
    %v2694 = vld [vmem:[%s1551 + $0x22a] sm:$0xff]
    %v2695 = vld [vmem:[%s1551 + $0x232] sm:$0xff]
    %v2696 = vld [vmem:[%s1551 + $0x242] sm:$0xff]
    %v2697 = vld [vmem:[%s1551 + $0x24a] sm:$0xff]
    %v2698 = vld [vmem:[%s1551 + $0x25a] sm:$0xff]
    %v2699 = vld [vmem:[%s1551 + $0x262] sm:$0xff]
    %v2700 = vld [vmem:[%s1551 + $0x272] sm:$0xff]
    %v2701 = vld [vmem:[%s1551 + $0x27a] sm:$0xff]
    %v2702 = vld [vmem:[%s1551 + $0x28a] sm:$0xff]
    %v2703 = vld [vmem:[%s1551 + $0x292] sm:$0xff]
    %v2704 = vld [vmem:[%s1551 + $0x2a2] sm:$0xff]
    %v2705 = vld [vmem:[%s1551 + $0x2aa] sm:$0xff]
    %v2706 = vld [vmem:[%s1551 + $0x2ba] sm:$0xff]
    %v2707 = vld [vmem:[%s1551 + $0x2c2] sm:$0xff]
    %v2708 = vld [vmem:[%s1551 + $0x2d2] sm:$0xff]
    %v2709 = vld [vmem:[%s1551 + $0x2da] sm:$0xff]
    %v2710 = vld [vmem:[%s1551 + $0x2ea] sm:$0xff]
    %v2711 = vld [vmem:[%s1551 + $0x2f2] sm:$0xff]
    %v2712 = vld [vmem:[%s1551 + $0x302] sm:$0xff]
    %v2713 = vld [vmem:[%s1551 + $0x30a] sm:$0xff]
    %v2714 = vld [vmem:[%s1551 + $0x31a] sm:$0xff]
    %v2715 = vld [vmem:[%s1551 + $0x322] sm:$0xff]
    %v2716 = vpack.c.bf16 %v2653, %v2652
    %v2717 = vpack.c.bf16 %v2655, %v2654
    %v2718 = vpack.c.bf16 %v2657, %v2656
    %v2719 = vpack.c.bf16 %v2659, %v2658
    %v2720 = vpack.c.bf16 %v2661, %v2660
    %v2721 = vpack.c.bf16 %v2663, %v2662
    %v2722 = vpack.c.bf16 %v2665, %v2664
    %v2723 = vpack.c.bf16 %v2667, %v2666
    %v2724 = vpack.c.bf16 %v2669, %v2668
    %v2725 = vpack.c.bf16 %v2671, %v2670
    %v2726 = vpack.c.bf16 %v2673, %v2672
    %v2727 = vpack.c.bf16 %v2675, %v2674
    %v2728 = vpack.c.bf16 %v2677, %v2676
    %v2729 = vpack.c.bf16 %v2679, %v2678
    %v2730 = vpack.c.bf16 %v2681, %v2680
    %v2731 = vpack.c.bf16 %v2683, %v2682
    %v2732 = vpack.c.bf16 %v2685, %v2684
    %v2733 = vpack.c.bf16 %v2687, %v2686
    %v2734 = vpack.c.bf16 %v2689, %v2688
    %v2735 = vpack.c.bf16 %v2691, %v2690
    %v2736 = vpack.c.bf16 %v2693, %v2692
    %v2737 = vpack.c.bf16 %v2695, %v2694
    %v2738 = vpack.c.bf16 %v2697, %v2696
    %v2739 = vpack.c.bf16 %v2699, %v2698
    %v2740 = vpack.c.bf16 %v2701, %v2700
    %v2741 = vpack.c.bf16 %v2703, %v2702
    %v2742 = vpack.c.bf16 %v2705, %v2704
    %v2743 = vpack.c.bf16 %v2707, %v2706
    %v2744 = vpack.c.bf16 %v2709, %v2708
    %v2745 = vpack.c.bf16 %v2711, %v2710
    %v2746 = vpack.c.bf16 %v2713, %v2712
    %v2747 = vpack.c.bf16 %v2715, %v2714
    %s2748 = scalar_lea.vmem %s1, 10
    %v2749 = vld [vmem:[%s2748] sm:$0x3]
    %v2751 = vsel %vm223, %v2716, 0
    %v2754 = vsel %vm223, %v2717, 0
    %v2757 = vsel %vm223, %v2718, 0
    %v2760 = vsel %vm223, %v2719, 0
    %v2763 = vsel %vm223, %v2720, 0
    %v2766 = vsel %vm223, %v2721, 0
    %v2769 = vsel %vm223, %v2722, 0
    %v2772 = vsel %vm223, %v2723, 0
    %v2775 = vsel %vm223, %v2724, 0
    %v2778 = vsel %vm223, %v2725, 0
    %v2781 = vsel %vm223, %v2726, 0
    %v2784 = vsel %vm223, %v2727, 0
    %v2787 = vsel %vm223, %v2728, 0
    %v2790 = vsel %vm223, %v2729, 0
    %v2793 = vsel %vm223, %v2730, 0
    %v2796 = vsel %vm223, %v2731, 0
    %v2799 = vsel %vm223, %v2732, 0
    %v2802 = vsel %vm223, %v2733, 0
    %v2805 = vsel %vm223, %v2734, 0
    %v2808 = vsel %vm223, %v2735, 0
    %v2811 = vsel %vm223, %v2736, 0
    %v2814 = vsel %vm223, %v2737, 0
    %v2817 = vsel %vm223, %v2738, 0
    %v2820 = vsel %vm223, %v2739, 0
    %v2823 = vsel %vm223, %v2740, 0
    %v2826 = vsel %vm223, %v2741, 0
    %v2829 = vsel %vm223, %v2742, 0
    %v2832 = vsel %vm223, %v2743, 0
    %v2835 = vsel %vm223, %v2744, 0
    %v2838 = vsel %vm223, %v2745, 0
    %v2841 = vsel %vm223, %v2746, 0
    %v2844 = vsel %vm223, %v2747, 0
    %v2847 = vsel %vm320, %v2749, 0
    %2849 = vmatprep.subr.bf16.mxu0 0
    %2850 = vmatpush1.bf16.msra.mxu0 %v2847
    %2851 = vmatprep.subr.bf16.mxu0 0
    %2852 = vmatpush1.bf16.msra.mxu0 0
    %2853 = vmatprep.subr.bf16.mxu0 0
    %2854 = vmatpush1.bf16.msra.mxu0 0
    %2855 = vmatprep.subr.bf16.mxu0 0
    %2856 = vmatpush1.bf16.msra.mxu0 0
    %2857 = vmatprep.subr.bf16.mxu0 0
    %2858 = vmatpush1.bf16.msra.mxu0 0
    %2859 = vmatprep.subr.bf16.mxu0 0
    %2860 = vmatpush1.bf16.msra.mxu0 0
    %2861 = vmatprep.subr.bf16.mxu0 0
    %2862 = vmatpush1.bf16.msra.mxu0 0
    %2863 = vmatprep.subr.bf16.mxu0 0
    %2864 = vmatpush1.bf16.msra.mxu0 0
    %2865 = vmatprep.subr.bf16.mxu0 0
    %2866 = vmatpush1.bf16.msra.mxu0 0
    %2867 = vmatprep.subr.bf16.mxu0 0
    %2868 = vmatpush1.bf16.msra.mxu0 0
    %2869 = vmatprep.subr.bf16.mxu0 0
    %2870 = vmatpush1.bf16.msra.mxu0 0
    %2871 = vmatprep.subr.bf16.mxu0 0
    %2872 = vmatpush1.bf16.msra.mxu0 0
    %2873 = vmatprep.subr.bf16.mxu0 0
    %2874 = vmatpush1.bf16.msra.mxu0 0
    %2875 = vmatprep.subr.bf16.mxu0 0
    %2876 = vmatpush1.bf16.msra.mxu0 0
    %2877 = vmatprep.subr.bf16.mxu0 0
    %2878 = vmatpush1.bf16.msra.mxu0 0
    %2879 = vmatprep.subr.bf16.mxu0 0
    %2880 = vmatpush1.bf16.msra.mxu0 0
    %2881 = vmatprep.mubr.bf16.mxu0 0
    %2882 = vmatmul.mubr.bf16.gmra.mrb[0].mxu0 %v2751
    %v2883 = vpop.f32.mrb[0].mxu0
    %v2884 = vadd.f32 0.0, %v2883
    %v2885 = vpop.f32.mrb[0].mxu0
    %v2886 = vpop.f32.mrb[0].mxu0
    %v2887 = vadd.f32 0.0, %v2886
    %v2888 = vpop.f32.mrb[0].mxu0
    %2889 = vmatprep.mubr.bf16.mxu0 0
    %2890 = vmatmul.mubr.bf16.gmra.mrb[0].mxu0 %v2754
    %v2891 = vpop.f32.mrb[0].mxu0
    %v2892 = vadd.f32 0.0, %v2891
    %v2893 = vpop.f32.mrb[0].mxu0
    %v2894 = vpop.f32.mrb[0].mxu0
    %v2895 = vadd.f32 0.0, %v2894
    %v2896 = vpop.f32.mrb[0].mxu0
    %2897 = vmatprep.mubr.bf16.mxu0 0
    %2898 = vmatmul.mubr.bf16.gmra.mrb[0].mxu0 %v2757
    %v2899 = vpop.f32.mrb[0].mxu0
    %v2900 = vadd.f32 0.0, %v2899
    %v2901 = vpop.f32.mrb[0].mxu0
    %v2902 = vpop.f32.mrb[0].mxu0
    %v2903 = vadd.f32 0.0, %v2902
    %v2904 = vpop.f32.mrb[0].mxu0
    %2905 = vmatprep.mubr.bf16.mxu0 0
    %2906 = vmatmul.mubr.bf16.gmra.mrb[0].mxu0 %v2760
    %v2907 = vpop.f32.mrb[0].mxu0
    %v2908 = vadd.f32 0.0, %v2907
    %v2909 = vpop.f32.mrb[0].mxu0
    %v2910 = vpop.f32.mrb[0].mxu0
    %v2911 = vadd.f32 0.0, %v2910
    %v2912 = vpop.f32.mrb[0].mxu0
    %2913 = vmatprep.mubr.bf16.mxu0 0
    %2914 = vmatmul.mubr.bf16.gmra.mrb[0].mxu0 %v2763
    %v2915 = vpop.f32.mrb[0].mxu0
    %v2916 = vadd.f32 0.0, %v2915
    %v2917 = vpop.f32.mrb[0].mxu0
    %v2918 = vpop.f32.mrb[0].mxu0
    %v2919 = vadd.f32 0.0, %v2918
    %v2920 = vpop.f32.mrb[0].mxu0
    %2921 = vmatprep.mubr.bf16.mxu0 0
    %2922 = vmatmul.mubr.bf16.gmra.mrb[0].mxu0 %v2766
    %v2923 = vpop.f32.mrb[0].mxu0
    %v2924 = vadd.f32 0.0, %v2923
    %v2925 = vpop.f32.mrb[0].mxu0
    %v2926 = vpop.f32.mrb[0].mxu0
    %v2927 = vadd.f32 0.0, %v2926
    %v2928 = vpop.f32.mrb[0].mxu0
    %2929 = vmatprep.mubr.bf16.mxu0 0
    %2930 = vmatmul.mubr.bf16.gmra.mrb[0].mxu0 %v2769
    %v2931 = vpop.f32.mrb[0].mxu0
    %v2932 = vadd.f32 0.0, %v2931
    %v2933 = vpop.f32.mrb[0].mxu0
    %v2934 = vpop.f32.mrb[0].mxu0
    %v2935 = vadd.f32 0.0, %v2934
    %v2936 = vpop.f32.mrb[0].mxu0
    %2937 = vmatprep.mubr.bf16.mxu0 0
    %2938 = vmatmul.mubr.bf16.gmra.mrb[0].mxu0 %v2772
    %v2939 = vpop.f32.mrb[0].mxu0
    %v2940 = vadd.f32 0.0, %v2939
    %v2941 = vpop.f32.mrb[0].mxu0
    %v2942 = vpop.f32.mrb[0].mxu0
    %v2943 = vadd.f32 0.0, %v2942
    %v2944 = vpop.f32.mrb[0].mxu0
    %2945 = vmatprep.mubr.bf16.mxu0 0
    %2946 = vmatmul.mubr.bf16.gmra.mrb[0].mxu0 %v2775
    %v2947 = vpop.f32.mrb[0].mxu0
    %v2948 = vadd.f32 0.0, %v2947
    %v2949 = vpop.f32.mrb[0].mxu0
    %v2950 = vpop.f32.mrb[0].mxu0
    %v2951 = vadd.f32 0.0, %v2950
    %v2952 = vpop.f32.mrb[0].mxu0
    %2953 = vmatprep.mubr.bf16.mxu0 0
    %2954 = vmatmul.mubr.bf16.gmra.mrb[0].mxu0 %v2778
    %v2955 = vpop.f32.mrb[0].mxu0
    %v2956 = vadd.f32 0.0, %v2955
    %v2957 = vpop.f32.mrb[0].mxu0
    %v2958 = vpop.f32.mrb[0].mxu0
    %v2959 = vadd.f32 0.0, %v2958
    %v2960 = vpop.f32.mrb[0].mxu0
    %2961 = vmatprep.mubr.bf16.mxu0 0
    %2962 = vmatmul.mubr.bf16.gmra.mrb[0].mxu0 %v2781
    %v2963 = vpop.f32.mrb[0].mxu0
    %v2964 = vadd.f32 0.0, %v2963
    %v2965 = vpop.f32.mrb[0].mxu0
    %v2966 = vpop.f32.mrb[0].mxu0
    %v2967 = vadd.f32 0.0, %v2966
    %v2968 = vpop.f32.mrb[0].mxu0
    %2969 = vmatprep.mubr.bf16.mxu0 0
    %2970 = vmatmul.mubr.bf16.gmra.mrb[0].mxu0 %v2784
    %v2971 = vpop.f32.mrb[0].mxu0
    %v2972 = vadd.f32 0.0, %v2971
    %v2973 = vpop.f32.mrb[0].mxu0
    %v2974 = vpop.f32.mrb[0].mxu0
    %v2975 = vadd.f32 0.0, %v2974
    %v2976 = vpop.f32.mrb[0].mxu0
    %2977 = vmatprep.mubr.bf16.mxu0 0
    %2978 = vmatmul.mubr.bf16.gmra.mrb[0].mxu0 %v2787
    %v2979 = vpop.f32.mrb[0].mxu0
    %v2980 = vadd.f32 0.0, %v2979
    %v2981 = vpop.f32.mrb[0].mxu0
    %v2982 = vpop.f32.mrb[0].mxu0
    %v2983 = vadd.f32 0.0, %v2982
    %v2984 = vpop.f32.mrb[0].mxu0
    %2985 = vmatprep.mubr.bf16.mxu0 0
    %2986 = vmatmul.mubr.bf16.gmra.mrb[0].mxu0 %v2790
    %v2987 = vpop.f32.mrb[0].mxu0
    %v2988 = vadd.f32 0.0, %v2987
    %v2989 = vpop.f32.mrb[0].mxu0
    %v2990 = vpop.f32.mrb[0].mxu0
    %v2991 = vadd.f32 0.0, %v2990
    %v2992 = vpop.f32.mrb[0].mxu0
    %2993 = vmatprep.mubr.bf16.mxu0 0
    %2994 = vmatmul.mubr.bf16.gmra.mrb[0].mxu0 %v2793
    %v2995 = vpop.f32.mrb[0].mxu0
    %v2996 = vadd.f32 0.0, %v2995
    %v2997 = vpop.f32.mrb[0].mxu0
    %v2998 = vpop.f32.mrb[0].mxu0
    %v2999 = vadd.f32 0.0, %v2998
    %v3000 = vpop.f32.mrb[0].mxu0
    %3001 = vmatprep.mubr.bf16.mxu0 0
    %3002 = vmatmul.mubr.bf16.gmra.mrb[0].mxu0 %v2796
    %v3003 = vpop.f32.mrb[0].mxu0
    %v3004 = vadd.f32 0.0, %v3003
    %v3005 = vpop.f32.mrb[0].mxu0
    %v3006 = vpop.f32.mrb[0].mxu0
    %v3007 = vadd.f32 0.0, %v3006
    %v3008 = vpop.f32.mrb[0].mxu0
    %3009 = vmatprep.mubr.bf16.mxu0 0
    %3010 = vmatmul.mubr.bf16.gmra.mrb[0].mxu0 %v2799
    %v3011 = vpop.f32.mrb[0].mxu0
    %v3012 = vadd.f32 0.0, %v3011
    %v3013 = vpop.f32.mrb[0].mxu0
    %v3014 = vpop.f32.mrb[0].mxu0
    %v3015 = vadd.f32 0.0, %v3014
    %v3016 = vpop.f32.mrb[0].mxu0
    %3017 = vmatprep.mubr.bf16.mxu0 0
    %3018 = vmatmul.mubr.bf16.gmra.mrb[0].mxu0 %v2802
    %v3019 = vpop.f32.mrb[0].mxu0
    %v3020 = vadd.f32 0.0, %v3019
    %v3021 = vpop.f32.mrb[0].mxu0
    %v3022 = vpop.f32.mrb[0].mxu0
    %v3023 = vadd.f32 0.0, %v3022
    %v3024 = vpop.f32.mrb[0].mxu0
    %3025 = vmatprep.mubr.bf16.mxu0 0
    %3026 = vmatmul.mubr.bf16.gmra.mrb[0].mxu0 %v2805
    %v3027 = vpop.f32.mrb[0].mxu0
    %v3028 = vadd.f32 0.0, %v3027
    %v3029 = vpop.f32.mrb[0].mxu0
    %v3030 = vpop.f32.mrb[0].mxu0
    %v3031 = vadd.f32 0.0, %v3030
    %v3032 = vpop.f32.mrb[0].mxu0
    %3033 = vmatprep.mubr.bf16.mxu0 0
    %3034 = vmatmul.mubr.bf16.gmra.mrb[0].mxu0 %v2808
    %v3035 = vpop.f32.mrb[0].mxu0
    %v3036 = vadd.f32 0.0, %v3035
    %v3037 = vpop.f32.mrb[0].mxu0
    %v3038 = vpop.f32.mrb[0].mxu0
    %v3039 = vadd.f32 0.0, %v3038
    %v3040 = vpop.f32.mrb[0].mxu0
    %3041 = vmatprep.mubr.bf16.mxu0 0
    %3042 = vmatmul.mubr.bf16.gmra.mrb[0].mxu0 %v2811
    %v3043 = vpop.f32.mrb[0].mxu0
    %v3044 = vadd.f32 0.0, %v3043
    %v3045 = vpop.f32.mrb[0].mxu0
    %v3046 = vpop.f32.mrb[0].mxu0
    %v3047 = vadd.f32 0.0, %v3046
    %v3048 = vpop.f32.mrb[0].mxu0
    %3049 = vmatprep.mubr.bf16.mxu0 0
    %3050 = vmatmul.mubr.bf16.gmra.mrb[0].mxu0 %v2814
    %v3051 = vpop.f32.mrb[0].mxu0
    %v3052 = vadd.f32 0.0, %v3051
    %v3053 = vpop.f32.mrb[0].mxu0
    %v3054 = vpop.f32.mrb[0].mxu0
    %v3055 = vadd.f32 0.0, %v3054
    %v3056 = vpop.f32.mrb[0].mxu0
    %3057 = vmatprep.mubr.bf16.mxu0 0
    %3058 = vmatmul.mubr.bf16.gmra.mrb[0].mxu0 %v2817
    %v3059 = vpop.f32.mrb[0].mxu0
    %v3060 = vadd.f32 0.0, %v3059
    %v3061 = vpop.f32.mrb[0].mxu0
    %v3062 = vpop.f32.mrb[0].mxu0
    %v3063 = vadd.f32 0.0, %v3062
    %v3064 = vpop.f32.mrb[0].mxu0
    %3065 = vmatprep.mubr.bf16.mxu0 0
    %3066 = vmatmul.mubr.bf16.gmra.mrb[0].mxu0 %v2820
    %v3067 = vpop.f32.mrb[0].mxu0
    %v3068 = vadd.f32 0.0, %v3067
    %v3069 = vpop.f32.mrb[0].mxu0
    %v3070 = vpop.f32.mrb[0].mxu0
    %v3071 = vadd.f32 0.0, %v3070
    %v3072 = vpop.f32.mrb[0].mxu0
    %3073 = vmatprep.mubr.bf16.mxu0 0
    %3074 = vmatmul.mubr.bf16.gmra.mrb[0].mxu0 %v2823
    %v3075 = vpop.f32.mrb[0].mxu0
    %v3076 = vadd.f32 0.0, %v3075
    %v3077 = vpop.f32.mrb[0].mxu0
    %v3078 = vpop.f32.mrb[0].mxu0
    %v3079 = vadd.f32 0.0, %v3078
    %v3080 = vpop.f32.mrb[0].mxu0
    %3081 = vmatprep.mubr.bf16.mxu0 0
    %3082 = vmatmul.mubr.bf16.gmra.mrb[0].mxu0 %v2826
    %v3083 = vpop.f32.mrb[0].mxu0
    %v3084 = vadd.f32 0.0, %v3083
    %v3085 = vpop.f32.mrb[0].mxu0
    %v3086 = vpop.f32.mrb[0].mxu0
    %v3087 = vadd.f32 0.0, %v3086
    %v3088 = vpop.f32.mrb[0].mxu0
    %3089 = vmatprep.mubr.bf16.mxu0 0
    %3090 = vmatmul.mubr.bf16.gmra.mrb[0].mxu0 %v2829
    %v3091 = vpop.f32.mrb[0].mxu0
    %v3092 = vadd.f32 0.0, %v3091
    %v3093 = vpop.f32.mrb[0].mxu0
    %v3094 = vpop.f32.mrb[0].mxu0
    %v3095 = vadd.f32 0.0, %v3094
    %v3096 = vpop.f32.mrb[0].mxu0
    %3097 = vmatprep.mubr.bf16.mxu0 0
    %3098 = vmatmul.mubr.bf16.gmra.mrb[0].mxu0 %v2832
    %v3099 = vpop.f32.mrb[0].mxu0
    %v3100 = vadd.f32 0.0, %v3099
    %v3101 = vpop.f32.mrb[0].mxu0
    %v3102 = vpop.f32.mrb[0].mxu0
    %v3103 = vadd.f32 0.0, %v3102
    %v3104 = vpop.f32.mrb[0].mxu0
    %3105 = vmatprep.mubr.bf16.mxu0 0
    %3106 = vmatmul.mubr.bf16.gmra.mrb[0].mxu0 %v2835
    %v3107 = vpop.f32.mrb[0].mxu0
    %v3108 = vadd.f32 0.0, %v3107
    %v3109 = vpop.f32.mrb[0].mxu0
    %v3110 = vpop.f32.mrb[0].mxu0
    %v3111 = vadd.f32 0.0, %v3110
    %v3112 = vpop.f32.mrb[0].mxu0
    %3113 = vmatprep.mubr.bf16.mxu0 0
    %3114 = vmatmul.mubr.bf16.gmra.mrb[0].mxu0 %v2838
    %v3115 = vpop.f32.mrb[0].mxu0
    %v3116 = vadd.f32 0.0, %v3115
    %v3117 = vpop.f32.mrb[0].mxu0
    %v3118 = vpop.f32.mrb[0].mxu0
    %v3119 = vadd.f32 0.0, %v3118
    %v3120 = vpop.f32.mrb[0].mxu0
    %3121 = vmatprep.mubr.bf16.mxu0 0
    %3122 = vmatmul.mubr.bf16.gmra.mrb[0].mxu0 %v2841
    %v3123 = vpop.f32.mrb[0].mxu0
    %v3124 = vadd.f32 0.0, %v3123
    %v3125 = vpop.f32.mrb[0].mxu0
    %v3126 = vpop.f32.mrb[0].mxu0
    %v3127 = vadd.f32 0.0, %v3126
    %v3128 = vpop.f32.mrb[0].mxu0
    %3129 = vmatprep.mubr.bf16.mxu0 0
    %3130 = vmatmul.mubr.bf16.gmra.mrb[0].mxu0 %v2844
    %v3131 = vpop.f32.mrb[0].mxu0
    %v3132 = vadd.f32 0.0, %v3131
    %v3133 = vpop.f32.mrb[0].mxu0
    %v3134 = vpop.f32.mrb[0].mxu0
    %v3135 = vadd.f32 0.0, %v3134
    %v3136 = vpop.f32.mrb[0].mxu0
    %3137 = vdwg.mxu0
    %v3138 = vadd.f32 %v2588, %v2884
    %v3139 = vadd.f32 %v2589, %v2887
    %v3140 = vadd.f32 %v2590, %v2892
    %v3141 = vadd.f32 %v2591, %v2895
    %v3142 = vadd.f32 %v2592, %v2900
    %v3143 = vadd.f32 %v2593, %v2903
    %v3144 = vadd.f32 %v2594, %v2908
    %v3145 = vadd.f32 %v2595, %v2911
    %v3146 = vadd.f32 %v2596, %v2916
    %v3147 = vadd.f32 %v2597, %v2919
    %v3148 = vadd.f32 %v2598, %v2924
    %v3149 = vadd.f32 %v2599, %v2927
    %v3150 = vadd.f32 %v2600, %v2932
    %v3151 = vadd.f32 %v2601, %v2935
    %v3152 = vadd.f32 %v2602, %v2940
    %v3153 = vadd.f32 %v2603, %v2943
    %v3154 = vadd.f32 %v2604, %v2948
    %v3155 = vadd.f32 %v2605, %v2951
    %v3156 = vadd.f32 %v2606, %v2956
    %v3157 = vadd.f32 %v2607, %v2959
    %v3158 = vadd.f32 %v2608, %v2964
    %v3159 = vadd.f32 %v2609, %v2967
    %v3160 = vadd.f32 %v2610, %v2972
    %v3161 = vadd.f32 %v2611, %v2975
    %v3162 = vadd.f32 %v2612, %v2980
    %v3163 = vadd.f32 %v2613, %v2983
    %v3164 = vadd.f32 %v2614, %v2988
    %v3165 = vadd.f32 %v2615, %v2991
    %v3166 = vadd.f32 %v2616, %v2996
    %v3167 = vadd.f32 %v2617, %v2999
    %v3168 = vadd.f32 %v2618, %v3004
    %v3169 = vadd.f32 %v2619, %v3007
    %v3170 = vadd.f32 %v2620, %v3012
    %v3171 = vadd.f32 %v2621, %v3015
    %v3172 = vadd.f32 %v2622, %v3020
    %v3173 = vadd.f32 %v2623, %v3023
    %v3174 = vadd.f32 %v2624, %v3028
    %v3175 = vadd.f32 %v2625, %v3031
    %v3176 = vadd.f32 %v2626, %v3036
    %v3177 = vadd.f32 %v2627, %v3039
    %v3178 = vadd.f32 %v2628, %v3044
    %v3179 = vadd.f32 %v2629, %v3047
    %v3180 = vadd.f32 %v2630, %v3052
    %v3181 = vadd.f32 %v2631, %v3055
    %v3182 = vadd.f32 %v2632, %v3060
    %v3183 = vadd.f32 %v2633, %v3063
    %v3184 = vadd.f32 %v2634, %v3068
    %v3185 = vadd.f32 %v2635, %v3071
    %v3186 = vadd.f32 %v2636, %v3076
    %v3187 = vadd.f32 %v2637, %v3079
    %v3188 = vadd.f32 %v2638, %v3084
    %v3189 = vadd.f32 %v2639, %v3087
    %v3190 = vadd.f32 %v2640, %v3092
    %v3191 = vadd.f32 %v2641, %v3095
    %v3192 = vadd.f32 %v2642, %v3100
    %v3193 = vadd.f32 %v2643, %v3103
    %v3194 = vadd.f32 %v2644, %v3108
    %v3195 = vadd.f32 %v2645, %v3111
    %v3196 = vadd.f32 %v2646, %v3116
    %v3197 = vadd.f32 %v2647, %v3119
    %v3198 = vadd.f32 %v2648, %v3124
    %v3199 = vadd.f32 %v2649, %v3127
    %v3200 = vadd.f32 %v2650, %v3132
    %v3201 = vadd.f32 %v2651, %v3135
    %s3202 = scalar_lea.vmem %s0, 48
    %v3203 = vld [vmem:[%s3202] sm:$0xff]
    %v3204 = vld [vmem:[%s3202 + $0x8] sm:$0xff]
    %v3205 = vld [vmem:[%s3202 + $0x18] sm:$0xff]
    %v3206 = vld [vmem:[%s3202 + $0x20] sm:$0xff]
    %v3207 = vld [vmem:[%s3202 + $0x30] sm:$0xff]
    %v3208 = vld [vmem:[%s3202 + $0x38] sm:$0xff]
    %v3209 = vld [vmem:[%s3202 + $0x48] sm:$0xff]
    %v3210 = vld [vmem:[%s3202 + $0x50] sm:$0xff]
    %v3211 = vld [vmem:[%s3202 + $0x60] sm:$0xff]
    %v3212 = vld [vmem:[%s3202 + $0x68] sm:$0xff]
    %v3213 = vld [vmem:[%s3202 + $0x78] sm:$0xff]
    %v3214 = vld [vmem:[%s3202 + $0x80] sm:$0xff]
    %v3215 = vld [vmem:[%s3202 + $0x90] sm:$0xff]
    %v3216 = vld [vmem:[%s3202 + $0x98] sm:$0xff]
    %v3217 = vld [vmem:[%s3202 + $0xa8] sm:$0xff]
    %v3218 = vld [vmem:[%s3202 + $0xb0] sm:$0xff]
    %v3219 = vld [vmem:[%s3202 + $0xc0] sm:$0xff]
    %v3220 = vld [vmem:[%s3202 + $0xc8] sm:$0xff]
    %v3221 = vld [vmem:[%s3202 + $0xd8] sm:$0xff]
    %v3222 = vld [vmem:[%s3202 + $0xe0] sm:$0xff]
    %v3223 = vld [vmem:[%s3202 + $0xf0] sm:$0xff]
    %v3224 = vld [vmem:[%s3202 + $0xf8] sm:$0xff]
    %v3225 = vld [vmem:[%s3202 + $0x108] sm:$0xff]
    %v3226 = vld [vmem:[%s3202 + $0x110] sm:$0xff]
    %v3227 = vld [vmem:[%s3202 + $0x120] sm:$0xff]
    %v3228 = vld [vmem:[%s3202 + $0x128] sm:$0xff]
    %v3229 = vld [vmem:[%s3202 + $0x138] sm:$0xff]
    %v3230 = vld [vmem:[%s3202 + $0x140] sm:$0xff]
    %v3231 = vld [vmem:[%s3202 + $0x150] sm:$0xff]
    %v3232 = vld [vmem:[%s3202 + $0x158] sm:$0xff]
    %v3233 = vld [vmem:[%s3202 + $0x168] sm:$0xff]
    %v3234 = vld [vmem:[%s3202 + $0x170] sm:$0xff]
    %v3235 = vld [vmem:[%s3202 + $0x1b0] sm:$0xff]
    %v3236 = vld [vmem:[%s3202 + $0x1b8] sm:$0xff]
    %v3237 = vld [vmem:[%s3202 + $0x1c8] sm:$0xff]
    %v3238 = vld [vmem:[%s3202 + $0x1d0] sm:$0xff]
    %v3239 = vld [vmem:[%s3202 + $0x1e0] sm:$0xff]
    %v3240 = vld [vmem:[%s3202 + $0x1e8] sm:$0xff]
    %v3241 = vld [vmem:[%s3202 + $0x1f8] sm:$0xff]
    %v3242 = vld [vmem:[%s3202 + $0x200] sm:$0xff]
    %v3243 = vld [vmem:[%s3202 + $0x210] sm:$0xff]
    %v3244 = vld [vmem:[%s3202 + $0x218] sm:$0xff]
    %v3245 = vld [vmem:[%s3202 + $0x228] sm:$0xff]
    %v3246 = vld [vmem:[%s3202 + $0x230] sm:$0xff]
    %v3247 = vld [vmem:[%s3202 + $0x240] sm:$0xff]
    %v3248 = vld [vmem:[%s3202 + $0x248] sm:$0xff]
    %v3249 = vld [vmem:[%s3202 + $0x258] sm:$0xff]
    %v3250 = vld [vmem:[%s3202 + $0x260] sm:$0xff]
    %v3251 = vld [vmem:[%s3202 + $0x270] sm:$0xff]
    %v3252 = vld [vmem:[%s3202 + $0x278] sm:$0xff]
    %v3253 = vld [vmem:[%s3202 + $0x288] sm:$0xff]
    %v3254 = vld [vmem:[%s3202 + $0x290] sm:$0xff]
    %v3255 = vld [vmem:[%s3202 + $0x2a0] sm:$0xff]
    %v3256 = vld [vmem:[%s3202 + $0x2a8] sm:$0xff]
    %v3257 = vld [vmem:[%s3202 + $0x2b8] sm:$0xff]
    %v3258 = vld [vmem:[%s3202 + $0x2c0] sm:$0xff]
    %v3259 = vld [vmem:[%s3202 + $0x2d0] sm:$0xff]
    %v3260 = vld [vmem:[%s3202 + $0x2d8] sm:$0xff]
    %v3261 = vld [vmem:[%s3202 + $0x2e8] sm:$0xff]
    %v3262 = vld [vmem:[%s3202 + $0x2f0] sm:$0xff]
    %v3263 = vld [vmem:[%s3202 + $0x300] sm:$0xff]
    %v3264 = vld [vmem:[%s3202 + $0x308] sm:$0xff]
    %v3265 = vld [vmem:[%s3202 + $0x318] sm:$0xff]
    %v3266 = vld [vmem:[%s3202 + $0x320] sm:$0xff]
    %v3267 = vpack.c.bf16 %v3204, %v3203
    %v3268 = vpack.c.bf16 %v3206, %v3205
    %v3269 = vpack.c.bf16 %v3208, %v3207
    %v3270 = vpack.c.bf16 %v3210, %v3209
    %v3271 = vpack.c.bf16 %v3212, %v3211
    %v3272 = vpack.c.bf16 %v3214, %v3213
    %v3273 = vpack.c.bf16 %v3216, %v3215
    %v3274 = vpack.c.bf16 %v3218, %v3217
    %v3275 = vpack.c.bf16 %v3220, %v3219
    %v3276 = vpack.c.bf16 %v3222, %v3221
    %v3277 = vpack.c.bf16 %v3224, %v3223
    %v3278 = vpack.c.bf16 %v3226, %v3225
    %v3279 = vpack.c.bf16 %v3228, %v3227
    %v3280 = vpack.c.bf16 %v3230, %v3229
    %v3281 = vpack.c.bf16 %v3232, %v3231
    %v3282 = vpack.c.bf16 %v3234, %v3233
    %v3283 = vpack.c.bf16 %v3236, %v3235
    %v3284 = vpack.c.bf16 %v3238, %v3237
    %v3285 = vpack.c.bf16 %v3240, %v3239
    %v3286 = vpack.c.bf16 %v3242, %v3241
    %v3287 = vpack.c.bf16 %v3244, %v3243
    %v3288 = vpack.c.bf16 %v3246, %v3245
    %v3289 = vpack.c.bf16 %v3248, %v3247
    %v3290 = vpack.c.bf16 %v3250, %v3249
    %v3291 = vpack.c.bf16 %v3252, %v3251
    %v3292 = vpack.c.bf16 %v3254, %v3253
    %v3293 = vpack.c.bf16 %v3256, %v3255
    %v3294 = vpack.c.bf16 %v3258, %v3257
    %v3295 = vpack.c.bf16 %v3260, %v3259
    %v3296 = vpack.c.bf16 %v3262, %v3261
    %v3297 = vpack.c.bf16 %v3264, %v3263
    %v3298 = vpack.c.bf16 %v3266, %v3265
    %s3299 = scalar_lea.vmem %s1, 12
    %v3300 = vld [vmem:[%s3299] sm:$0x3]
    %v3302 = vsel %vm223, %v3267, 0
    %v3305 = vsel %vm223, %v3268, 0
    %v3308 = vsel %vm223, %v3269, 0
    %v3311 = vsel %vm223, %v3270, 0
    %v3314 = vsel %vm223, %v3271, 0
    %v3317 = vsel %vm223, %v3272, 0
    %v3320 = vsel %vm223, %v3273, 0
    %v3323 = vsel %vm223, %v3274, 0
    %v3326 = vsel %vm223, %v3275, 0
    %v3329 = vsel %vm223, %v3276, 0
    %v3332 = vsel %vm223, %v3277, 0
    %v3335 = vsel %vm223, %v3278, 0
    %v3338 = vsel %vm223, %v3279, 0
    %v3341 = vsel %vm223, %v3280, 0
    %v3344 = vsel %vm223, %v3281, 0
    %v3347 = vsel %vm223, %v3282, 0
    %v3350 = vsel %vm223, %v3283, 0
    %v3353 = vsel %vm223, %v3284, 0
    %v3356 = vsel %vm223, %v3285, 0
    %v3359 = vsel %vm223, %v3286, 0
    %v3362 = vsel %vm223, %v3287, 0
    %v3365 = vsel %vm223, %v3288, 0
    %v3368 = vsel %vm223, %v3289, 0
    %v3371 = vsel %vm223, %v3290, 0
    %v3374 = vsel %vm223, %v3291, 0
    %v3377 = vsel %vm223, %v3292, 0
    %v3380 = vsel %vm223, %v3293, 0
    %v3383 = vsel %vm223, %v3294, 0
    %v3386 = vsel %vm223, %v3295, 0
    %v3389 = vsel %vm223, %v3296, 0
    %v3392 = vsel %vm223, %v3297, 0
    %v3395 = vsel %vm223, %v3298, 0
    %v3398 = vsel %vm320, %v3300, 0
    %3400 = vmatprep.subr.bf16.mxu0 0
    %3401 = vmatpush1.bf16.msra.mxu0 %v3398
    %3402 = vmatprep.subr.bf16.mxu0 0
    %3403 = vmatpush1.bf16.msra.mxu0 0
    %3404 = vmatprep.subr.bf16.mxu0 0
    %3405 = vmatpush1.bf16.msra.mxu0 0
    %3406 = vmatprep.subr.bf16.mxu0 0
    %3407 = vmatpush1.bf16.msra.mxu0 0
    %3408 = vmatprep.subr.bf16.mxu0 0
    %3409 = vmatpush1.bf16.msra.mxu0 0
    %3410 = vmatprep.subr.bf16.mxu0 0
    %3411 = vmatpush1.bf16.msra.mxu0 0
    %3412 = vmatprep.subr.bf16.mxu0 0
    %3413 = vmatpush1.bf16.msra.mxu0 0
    %3414 = vmatprep.subr.bf16.mxu0 0
    %3415 = vmatpush1.bf16.msra.mxu0 0
    %3416 = vmatprep.subr.bf16.mxu0 0
    %3417 = vmatpush1.bf16.msra.mxu0 0
    %3418 = vmatprep.subr.bf16.mxu0 0
    %3419 = vmatpush1.bf16.msra.mxu0 0
    %3420 = vmatprep.subr.bf16.mxu0 0
    %3421 = vmatpush1.bf16.msra.mxu0 0
    %3422 = vmatprep.subr.bf16.mxu0 0
    %3423 = vmatpush1.bf16.msra.mxu0 0
    %3424 = vmatprep.subr.bf16.mxu0 0
    %3425 = vmatpush1.bf16.msra.mxu0 0
    %3426 = vmatprep.subr.bf16.mxu0 0
    %3427 = vmatpush1.bf16.msra.mxu0 0
    %3428 = vmatprep.subr.bf16.mxu0 0
    %3429 = vmatpush1.bf16.msra.mxu0 0
    %3430 = vmatprep.subr.bf16.mxu0 0
    %3431 = vmatpush1.bf16.msra.mxu0 0
    %3432 = vmatprep.mubr.bf16.mxu0 0
    %3433 = vmatmul.mubr.bf16.gmra.mrb[0].mxu0 %v3302
    %v3434 = vpop.f32.mrb[0].mxu0
    %v3435 = vadd.f32 0.0, %v3434
    %v3436 = vpop.f32.mrb[0].mxu0
    %v3437 = vpop.f32.mrb[0].mxu0
    %v3438 = vadd.f32 0.0, %v3437
    %v3439 = vpop.f32.mrb[0].mxu0
    %3440 = vmatprep.mubr.bf16.mxu0 0
    %3441 = vmatmul.mubr.bf16.gmra.mrb[0].mxu0 %v3305
    %v3442 = vpop.f32.mrb[0].mxu0
    %v3443 = vadd.f32 0.0, %v3442
    %v3444 = vpop.f32.mrb[0].mxu0
    %v3445 = vpop.f32.mrb[0].mxu0
    %v3446 = vadd.f32 0.0, %v3445
    %v3447 = vpop.f32.mrb[0].mxu0
    %3448 = vmatprep.mubr.bf16.mxu0 0
    %3449 = vmatmul.mubr.bf16.gmra.mrb[0].mxu0 %v3308
    %v3450 = vpop.f32.mrb[0].mxu0
    %v3451 = vadd.f32 0.0, %v3450
    %v3452 = vpop.f32.mrb[0].mxu0
    %v3453 = vpop.f32.mrb[0].mxu0
    %v3454 = vadd.f32 0.0, %v3453
    %v3455 = vpop.f32.mrb[0].mxu0
    %3456 = vmatprep.mubr.bf16.mxu0 0
    %3457 = vmatmul.mubr.bf16.gmra.mrb[0].mxu0 %v3311
    %v3458 = vpop.f32.mrb[0].mxu0
    %v3459 = vadd.f32 0.0, %v3458
    %v3460 = vpop.f32.mrb[0].mxu0
    %v3461 = vpop.f32.mrb[0].mxu0
    %v3462 = vadd.f32 0.0, %v3461
    %v3463 = vpop.f32.mrb[0].mxu0
    %3464 = vmatprep.mubr.bf16.mxu0 0
    %3465 = vmatmul.mubr.bf16.gmra.mrb[0].mxu0 %v3314
    %v3466 = vpop.f32.mrb[0].mxu0
    %v3467 = vadd.f32 0.0, %v3466
    %v3468 = vpop.f32.mrb[0].mxu0
    %v3469 = vpop.f32.mrb[0].mxu0
    %v3470 = vadd.f32 0.0, %v3469
    %v3471 = vpop.f32.mrb[0].mxu0
    %3472 = vmatprep.mubr.bf16.mxu0 0
    %3473 = vmatmul.mubr.bf16.gmra.mrb[0].mxu0 %v3317
    %v3474 = vpop.f32.mrb[0].mxu0
    %v3475 = vadd.f32 0.0, %v3474
    %v3476 = vpop.f32.mrb[0].mxu0
    %v3477 = vpop.f32.mrb[0].mxu0
    %v3478 = vadd.f32 0.0, %v3477
    %v3479 = vpop.f32.mrb[0].mxu0
    %3480 = vmatprep.mubr.bf16.mxu0 0
    %3481 = vmatmul.mubr.bf16.gmra.mrb[0].mxu0 %v3320
    %v3482 = vpop.f32.mrb[0].mxu0
    %v3483 = vadd.f32 0.0, %v3482
    %v3484 = vpop.f32.mrb[0].mxu0
    %v3485 = vpop.f32.mrb[0].mxu0
    %v3486 = vadd.f32 0.0, %v3485
    %v3487 = vpop.f32.mrb[0].mxu0
    %3488 = vmatprep.mubr.bf16.mxu0 0
    %3489 = vmatmul.mubr.bf16.gmra.mrb[0].mxu0 %v3323
    %v3490 = vpop.f32.mrb[0].mxu0
    %v3491 = vadd.f32 0.0, %v3490
    %v3492 = vpop.f32.mrb[0].mxu0
    %v3493 = vpop.f32.mrb[0].mxu0
    %v3494 = vadd.f32 0.0, %v3493
    %v3495 = vpop.f32.mrb[0].mxu0
    %3496 = vmatprep.mubr.bf16.mxu0 0
    %3497 = vmatmul.mubr.bf16.gmra.mrb[0].mxu0 %v3326
    %v3498 = vpop.f32.mrb[0].mxu0
    %v3499 = vadd.f32 0.0, %v3498
    %v3500 = vpop.f32.mrb[0].mxu0
    %v3501 = vpop.f32.mrb[0].mxu0
    %v3502 = vadd.f32 0.0, %v3501
    %v3503 = vpop.f32.mrb[0].mxu0
    %3504 = vmatprep.mubr.bf16.mxu0 0
    %3505 = vmatmul.mubr.bf16.gmra.mrb[0].mxu0 %v3329
    %v3506 = vpop.f32.mrb[0].mxu0
    %v3507 = vadd.f32 0.0, %v3506
    %v3508 = vpop.f32.mrb[0].mxu0
    %v3509 = vpop.f32.mrb[0].mxu0
    %v3510 = vadd.f32 0.0, %v3509
    %v3511 = vpop.f32.mrb[0].mxu0
    %3512 = vmatprep.mubr.bf16.mxu0 0
    %3513 = vmatmul.mubr.bf16.gmra.mrb[0].mxu0 %v3332
    %v3514 = vpop.f32.mrb[0].mxu0
    %v3515 = vadd.f32 0.0, %v3514
    %v3516 = vpop.f32.mrb[0].mxu0
    %v3517 = vpop.f32.mrb[0].mxu0
    %v3518 = vadd.f32 0.0, %v3517
    %v3519 = vpop.f32.mrb[0].mxu0
    %3520 = vmatprep.mubr.bf16.mxu0 0
    %3521 = vmatmul.mubr.bf16.gmra.mrb[0].mxu0 %v3335
    %v3522 = vpop.f32.mrb[0].mxu0
    %v3523 = vadd.f32 0.0, %v3522
    %v3524 = vpop.f32.mrb[0].mxu0
    %v3525 = vpop.f32.mrb[0].mxu0
    %v3526 = vadd.f32 0.0, %v3525
    %v3527 = vpop.f32.mrb[0].mxu0
    %3528 = vmatprep.mubr.bf16.mxu0 0
    %3529 = vmatmul.mubr.bf16.gmra.mrb[0].mxu0 %v3338
    %v3530 = vpop.f32.mrb[0].mxu0
    %v3531 = vadd.f32 0.0, %v3530
    %v3532 = vpop.f32.mrb[0].mxu0
    %v3533 = vpop.f32.mrb[0].mxu0
    %v3534 = vadd.f32 0.0, %v3533
    %v3535 = vpop.f32.mrb[0].mxu0
    %3536 = vmatprep.mubr.bf16.mxu0 0
    %3537 = vmatmul.mubr.bf16.gmra.mrb[0].mxu0 %v3341
    %v3538 = vpop.f32.mrb[0].mxu0
    %v3539 = vadd.f32 0.0, %v3538
    %v3540 = vpop.f32.mrb[0].mxu0
    %v3541 = vpop.f32.mrb[0].mxu0
    %v3542 = vadd.f32 0.0, %v3541
    %v3543 = vpop.f32.mrb[0].mxu0
    %3544 = vmatprep.mubr.bf16.mxu0 0
    %3545 = vmatmul.mubr.bf16.gmra.mrb[0].mxu0 %v3344
    %v3546 = vpop.f32.mrb[0].mxu0
    %v3547 = vadd.f32 0.0, %v3546
    %v3548 = vpop.f32.mrb[0].mxu0
    %v3549 = vpop.f32.mrb[0].mxu0
    %v3550 = vadd.f32 0.0, %v3549
    %v3551 = vpop.f32.mrb[0].mxu0
    %3552 = vmatprep.mubr.bf16.mxu0 0
    %3553 = vmatmul.mubr.bf16.gmra.mrb[0].mxu0 %v3347
    %v3554 = vpop.f32.mrb[0].mxu0
    %v3555 = vadd.f32 0.0, %v3554
    %v3556 = vpop.f32.mrb[0].mxu0
    %v3557 = vpop.f32.mrb[0].mxu0
    %v3558 = vadd.f32 0.0, %v3557
    %v3559 = vpop.f32.mrb[0].mxu0
    %3560 = vmatprep.mubr.bf16.mxu0 0
    %3561 = vmatmul.mubr.bf16.gmra.mrb[0].mxu0 %v3350
    %v3562 = vpop.f32.mrb[0].mxu0
    %v3563 = vadd.f32 0.0, %v3562
    %v3564 = vpop.f32.mrb[0].mxu0
    %v3565 = vpop.f32.mrb[0].mxu0
    %v3566 = vadd.f32 0.0, %v3565
    %v3567 = vpop.f32.mrb[0].mxu0
    %3568 = vmatprep.mubr.bf16.mxu0 0
    %3569 = vmatmul.mubr.bf16.gmra.mrb[0].mxu0 %v3353
    %v3570 = vpop.f32.mrb[0].mxu0
    %v3571 = vadd.f32 0.0, %v3570
    %v3572 = vpop.f32.mrb[0].mxu0
    %v3573 = vpop.f32.mrb[0].mxu0
    %v3574 = vadd.f32 0.0, %v3573
    %v3575 = vpop.f32.mrb[0].mxu0
    %3576 = vmatprep.mubr.bf16.mxu0 0
    %3577 = vmatmul.mubr.bf16.gmra.mrb[0].mxu0 %v3356
    %v3578 = vpop.f32.mrb[0].mxu0
    %v3579 = vadd.f32 0.0, %v3578
    %v3580 = vpop.f32.mrb[0].mxu0
    %v3581 = vpop.f32.mrb[0].mxu0
    %v3582 = vadd.f32 0.0, %v3581
    %v3583 = vpop.f32.mrb[0].mxu0
    %3584 = vmatprep.mubr.bf16.mxu0 0
    %3585 = vmatmul.mubr.bf16.gmra.mrb[0].mxu0 %v3359
    %v3586 = vpop.f32.mrb[0].mxu0
    %v3587 = vadd.f32 0.0, %v3586
    %v3588 = vpop.f32.mrb[0].mxu0
    %v3589 = vpop.f32.mrb[0].mxu0
    %v3590 = vadd.f32 0.0, %v3589
    %v3591 = vpop.f32.mrb[0].mxu0
    %3592 = vmatprep.mubr.bf16.mxu0 0
    %3593 = vmatmul.mubr.bf16.gmra.mrb[0].mxu0 %v3362
    %v3594 = vpop.f32.mrb[0].mxu0
    %v3595 = vadd.f32 0.0, %v3594
    %v3596 = vpop.f32.mrb[0].mxu0
    %v3597 = vpop.f32.mrb[0].mxu0
    %v3598 = vadd.f32 0.0, %v3597
    %v3599 = vpop.f32.mrb[0].mxu0
    %3600 = vmatprep.mubr.bf16.mxu0 0
    %3601 = vmatmul.mubr.bf16.gmra.mrb[0].mxu0 %v3365
    %v3602 = vpop.f32.mrb[0].mxu0
    %v3603 = vadd.f32 0.0, %v3602
    %v3604 = vpop.f32.mrb[0].mxu0
    %v3605 = vpop.f32.mrb[0].mxu0
    %v3606 = vadd.f32 0.0, %v3605
    %v3607 = vpop.f32.mrb[0].mxu0
    %3608 = vmatprep.mubr.bf16.mxu0 0
    %3609 = vmatmul.mubr.bf16.gmra.mrb[0].mxu0 %v3368
    %v3610 = vpop.f32.mrb[0].mxu0
    %v3611 = vadd.f32 0.0, %v3610
    %v3612 = vpop.f32.mrb[0].mxu0
    %v3613 = vpop.f32.mrb[0].mxu0
    %v3614 = vadd.f32 0.0, %v3613
    %v3615 = vpop.f32.mrb[0].mxu0
    %3616 = vmatprep.mubr.bf16.mxu0 0
    %3617 = vmatmul.mubr.bf16.gmra.mrb[0].mxu0 %v3371
    %v3618 = vpop.f32.mrb[0].mxu0
    %v3619 = vadd.f32 0.0, %v3618
    %v3620 = vpop.f32.mrb[0].mxu0
    %v3621 = vpop.f32.mrb[0].mxu0
    %v3622 = vadd.f32 0.0, %v3621
    %v3623 = vpop.f32.mrb[0].mxu0
    %3624 = vmatprep.mubr.bf16.mxu0 0
    %3625 = vmatmul.mubr.bf16.gmra.mrb[0].mxu0 %v3374
    %v3626 = vpop.f32.mrb[0].mxu0
    %v3627 = vadd.f32 0.0, %v3626
    %v3628 = vpop.f32.mrb[0].mxu0
    %v3629 = vpop.f32.mrb[0].mxu0
    %v3630 = vadd.f32 0.0, %v3629
    %v3631 = vpop.f32.mrb[0].mxu0
    %3632 = vmatprep.mubr.bf16.mxu0 0
    %3633 = vmatmul.mubr.bf16.gmra.mrb[0].mxu0 %v3377
    %v3634 = vpop.f32.mrb[0].mxu0
    %v3635 = vadd.f32 0.0, %v3634
    %v3636 = vpop.f32.mrb[0].mxu0
    %v3637 = vpop.f32.mrb[0].mxu0
    %v3638 = vadd.f32 0.0, %v3637
    %v3639 = vpop.f32.mrb[0].mxu0
    %3640 = vmatprep.mubr.bf16.mxu0 0
    %3641 = vmatmul.mubr.bf16.gmra.mrb[0].mxu0 %v3380
    %v3642 = vpop.f32.mrb[0].mxu0
    %v3643 = vadd.f32 0.0, %v3642
    %v3644 = vpop.f32.mrb[0].mxu0
    %v3645 = vpop.f32.mrb[0].mxu0
    %v3646 = vadd.f32 0.0, %v3645
    %v3647 = vpop.f32.mrb[0].mxu0
    %3648 = vmatprep.mubr.bf16.mxu0 0
    %3649 = vmatmul.mubr.bf16.gmra.mrb[0].mxu0 %v3383
    %v3650 = vpop.f32.mrb[0].mxu0
    %v3651 = vadd.f32 0.0, %v3650
    %v3652 = vpop.f32.mrb[0].mxu0
    %v3653 = vpop.f32.mrb[0].mxu0
    %v3654 = vadd.f32 0.0, %v3653
    %v3655 = vpop.f32.mrb[0].mxu0
    %3656 = vmatprep.mubr.bf16.mxu0 0
    %3657 = vmatmul.mubr.bf16.gmra.mrb[0].mxu0 %v3386
    %v3658 = vpop.f32.mrb[0].mxu0
    %v3659 = vadd.f32 0.0, %v3658
    %v3660 = vpop.f32.mrb[0].mxu0
    %v3661 = vpop.f32.mrb[0].mxu0
    %v3662 = vadd.f32 0.0, %v3661
    %v3663 = vpop.f32.mrb[0].mxu0
    %3664 = vmatprep.mubr.bf16.mxu0 0
    %3665 = vmatmul.mubr.bf16.gmra.mrb[0].mxu0 %v3389
    %v3666 = vpop.f32.mrb[0].mxu0
    %v3667 = vadd.f32 0.0, %v3666
    %v3668 = vpop.f32.mrb[0].mxu0
    %v3669 = vpop.f32.mrb[0].mxu0
    %v3670 = vadd.f32 0.0, %v3669
    %v3671 = vpop.f32.mrb[0].mxu0
    %3672 = vmatprep.mubr.bf16.mxu0 0
    %3673 = vmatmul.mubr.bf16.gmra.mrb[0].mxu0 %v3392
    %v3674 = vpop.f32.mrb[0].mxu0
    %v3675 = vadd.f32 0.0, %v3674
    %v3676 = vpop.f32.mrb[0].mxu0
    %v3677 = vpop.f32.mrb[0].mxu0
    %v3678 = vadd.f32 0.0, %v3677
    %v3679 = vpop.f32.mrb[0].mxu0
    %3680 = vmatprep.mubr.bf16.mxu0 0
    %3681 = vmatmul.mubr.bf16.gmra.mrb[0].mxu0 %v3395
    %v3682 = vpop.f32.mrb[0].mxu0
    %v3683 = vadd.f32 0.0, %v3682
    %v3684 = vpop.f32.mrb[0].mxu0
    %v3685 = vpop.f32.mrb[0].mxu0
    %v3686 = vadd.f32 0.0, %v3685
    %v3687 = vpop.f32.mrb[0].mxu0
    %3688 = vdwg.mxu0
    %v3689 = vadd.f32 %v3138, %v3435
    %v3690 = vadd.f32 %v3139, %v3438
    %v3691 = vadd.f32 %v3140, %v3443
    %v3692 = vadd.f32 %v3141, %v3446
    %v3693 = vadd.f32 %v3142, %v3451
    %v3694 = vadd.f32 %v3143, %v3454
    %v3695 = vadd.f32 %v3144, %v3459
    %v3696 = vadd.f32 %v3145, %v3462
    %v3697 = vadd.f32 %v3146, %v3467
    %v3698 = vadd.f32 %v3147, %v3470
    %v3699 = vadd.f32 %v3148, %v3475
    %v3700 = vadd.f32 %v3149, %v3478
    %v3701 = vadd.f32 %v3150, %v3483
    %v3702 = vadd.f32 %v3151, %v3486
    %v3703 = vadd.f32 %v3152, %v3491
    %v3704 = vadd.f32 %v3153, %v3494
    %v3705 = vadd.f32 %v3154, %v3499
    %v3706 = vadd.f32 %v3155, %v3502
    %v3707 = vadd.f32 %v3156, %v3507
    %v3708 = vadd.f32 %v3157, %v3510
    %v3709 = vadd.f32 %v3158, %v3515
    %v3710 = vadd.f32 %v3159, %v3518
    %v3711 = vadd.f32 %v3160, %v3523
    %v3712 = vadd.f32 %v3161, %v3526
    %v3713 = vadd.f32 %v3162, %v3531
    %v3714 = vadd.f32 %v3163, %v3534
    %v3715 = vadd.f32 %v3164, %v3539
    %v3716 = vadd.f32 %v3165, %v3542
    %v3717 = vadd.f32 %v3166, %v3547
    %v3718 = vadd.f32 %v3167, %v3550
    %v3719 = vadd.f32 %v3168, %v3555
    %v3720 = vadd.f32 %v3169, %v3558
    %v3721 = vadd.f32 %v3170, %v3563
    %v3722 = vadd.f32 %v3171, %v3566
    %v3723 = vadd.f32 %v3172, %v3571
    %v3724 = vadd.f32 %v3173, %v3574
    %v3725 = vadd.f32 %v3174, %v3579
    %v3726 = vadd.f32 %v3175, %v3582
    %v3727 = vadd.f32 %v3176, %v3587
    %v3728 = vadd.f32 %v3177, %v3590
    %v3729 = vadd.f32 %v3178, %v3595
    %v3730 = vadd.f32 %v3179, %v3598
    %v3731 = vadd.f32 %v3180, %v3603
    %v3732 = vadd.f32 %v3181, %v3606
    %v3733 = vadd.f32 %v3182, %v3611
    %v3734 = vadd.f32 %v3183, %v3614
    %v3735 = vadd.f32 %v3184, %v3619
    %v3736 = vadd.f32 %v3185, %v3622
    %v3737 = vadd.f32 %v3186, %v3627
    %v3738 = vadd.f32 %v3187, %v3630
    %v3739 = vadd.f32 %v3188, %v3635
    %v3740 = vadd.f32 %v3189, %v3638
    %v3741 = vadd.f32 %v3190, %v3643
    %v3742 = vadd.f32 %v3191, %v3646
    %v3743 = vadd.f32 %v3192, %v3651
    %v3744 = vadd.f32 %v3193, %v3654
    %v3745 = vadd.f32 %v3194, %v3659
    %v3746 = vadd.f32 %v3195, %v3662
    %v3747 = vadd.f32 %v3196, %v3667
    %v3748 = vadd.f32 %v3197, %v3670
    %v3749 = vadd.f32 %v3198, %v3675
    %v3750 = vadd.f32 %v3199, %v3678
    %v3751 = vadd.f32 %v3200, %v3683
    %v3752 = vadd.f32 %v3201, %v3686
    %v3753 = vld [vmem:[%s3202 + $0x1] sm:$0xff]
    %v3754 = vld [vmem:[%s3202 + $0x9] sm:$0xff]
    %v3755 = vld [vmem:[%s3202 + $0x19] sm:$0xff]
    %v3756 = vld [vmem:[%s3202 + $0x21] sm:$0xff]
    %v3757 = vld [vmem:[%s3202 + $0x31] sm:$0xff]
    %v3758 = vld [vmem:[%s3202 + $0x39] sm:$0xff]
    %v3759 = vld [vmem:[%s3202 + $0x49] sm:$0xff]
    %v3760 = vld [vmem:[%s3202 + $0x51] sm:$0xff]
    %v3761 = vld [vmem:[%s3202 + $0x61] sm:$0xff]
    %v3762 = vld [vmem:[%s3202 + $0x69] sm:$0xff]
    %v3763 = vld [vmem:[%s3202 + $0x79] sm:$0xff]
    %v3764 = vld [vmem:[%s3202 + $0x81] sm:$0xff]
    %v3765 = vld [vmem:[%s3202 + $0x91] sm:$0xff]
    %v3766 = vld [vmem:[%s3202 + $0x99] sm:$0xff]
    %v3767 = vld [vmem:[%s3202 + $0xa9] sm:$0xff]
    %v3768 = vld [vmem:[%s3202 + $0xb1] sm:$0xff]
    %v3769 = vld [vmem:[%s3202 + $0xc1] sm:$0xff]
    %v3770 = vld [vmem:[%s3202 + $0xc9] sm:$0xff]
    %v3771 = vld [vmem:[%s3202 + $0xd9] sm:$0xff]
    %v3772 = vld [vmem:[%s3202 + $0xe1] sm:$0xff]
    %v3773 = vld [vmem:[%s3202 + $0xf1] sm:$0xff]
    %v3774 = vld [vmem:[%s3202 + $0xf9] sm:$0xff]
    %v3775 = vld [vmem:[%s3202 + $0x109] sm:$0xff]
    %v3776 = vld [vmem:[%s3202 + $0x111] sm:$0xff]
    %v3777 = vld [vmem:[%s3202 + $0x121] sm:$0xff]
    %v3778 = vld [vmem:[%s3202 + $0x129] sm:$0xff]
    %v3779 = vld [vmem:[%s3202 + $0x139] sm:$0xff]
    %v3780 = vld [vmem:[%s3202 + $0x141] sm:$0xff]
    %v3781 = vld [vmem:[%s3202 + $0x151] sm:$0xff]
    %v3782 = vld [vmem:[%s3202 + $0x159] sm:$0xff]
    %v3783 = vld [vmem:[%s3202 + $0x169] sm:$0xff]
    %v3784 = vld [vmem:[%s3202 + $0x171] sm:$0xff]
    %v3785 = vld [vmem:[%s3202 + $0x1b1] sm:$0xff]
    %v3786 = vld [vmem:[%s3202 + $0x1b9] sm:$0xff]
    %v3787 = vld [vmem:[%s3202 + $0x1c9] sm:$0xff]
    %v3788 = vld [vmem:[%s3202 + $0x1d1] sm:$0xff]
    %v3789 = vld [vmem:[%s3202 + $0x1e1] sm:$0xff]
    %v3790 = vld [vmem:[%s3202 + $0x1e9] sm:$0xff]
    %v3791 = vld [vmem:[%s3202 + $0x1f9] sm:$0xff]
    %v3792 = vld [vmem:[%s3202 + $0x201] sm:$0xff]
    %v3793 = vld [vmem:[%s3202 + $0x211] sm:$0xff]
    %v3794 = vld [vmem:[%s3202 + $0x219] sm:$0xff]
    %v3795 = vld [vmem:[%s3202 + $0x229] sm:$0xff]
    %v3796 = vld [vmem:[%s3202 + $0x231] sm:$0xff]
    %v3797 = vld [vmem:[%s3202 + $0x241] sm:$0xff]
    %v3798 = vld [vmem:[%s3202 + $0x249] sm:$0xff]
    %v3799 = vld [vmem:[%s3202 + $0x259] sm:$0xff]
    %v3800 = vld [vmem:[%s3202 + $0x261] sm:$0xff]
    %v3801 = vld [vmem:[%s3202 + $0x271] sm:$0xff]
    %v3802 = vld [vmem:[%s3202 + $0x279] sm:$0xff]
    %v3803 = vld [vmem:[%s3202 + $0x289] sm:$0xff]
    %v3804 = vld [vmem:[%s3202 + $0x291] sm:$0xff]
    %v3805 = vld [vmem:[%s3202 + $0x2a1] sm:$0xff]
    %v3806 = vld [vmem:[%s3202 + $0x2a9] sm:$0xff]
    %v3807 = vld [vmem:[%s3202 + $0x2b9] sm:$0xff]
    %v3808 = vld [vmem:[%s3202 + $0x2c1] sm:$0xff]
    %v3809 = vld [vmem:[%s3202 + $0x2d1] sm:$0xff]
    %v3810 = vld [vmem:[%s3202 + $0x2d9] sm:$0xff]
    %v3811 = vld [vmem:[%s3202 + $0x2e9] sm:$0xff]
    %v3812 = vld [vmem:[%s3202 + $0x2f1] sm:$0xff]
    %v3813 = vld [vmem:[%s3202 + $0x301] sm:$0xff]
    %v3814 = vld [vmem:[%s3202 + $0x309] sm:$0xff]
    %v3815 = vld [vmem:[%s3202 + $0x319] sm:$0xff]
    %v3816 = vld [vmem:[%s3202 + $0x321] sm:$0xff]
    %v3817 = vpack.c.bf16 %v3754, %v3753
    %v3818 = vpack.c.bf16 %v3756, %v3755
    %v3819 = vpack.c.bf16 %v3758, %v3757
    %v3820 = vpack.c.bf16 %v3760, %v3759
    %v3821 = vpack.c.bf16 %v3762, %v3761
    %v3822 = vpack.c.bf16 %v3764, %v3763
    %v3823 = vpack.c.bf16 %v3766, %v3765
    %v3824 = vpack.c.bf16 %v3768, %v3767
    %v3825 = vpack.c.bf16 %v3770, %v3769
    %v3826 = vpack.c.bf16 %v3772, %v3771
    %v3827 = vpack.c.bf16 %v3774, %v3773
    %v3828 = vpack.c.bf16 %v3776, %v3775
    %v3829 = vpack.c.bf16 %v3778, %v3777
    %v3830 = vpack.c.bf16 %v3780, %v3779
    %v3831 = vpack.c.bf16 %v3782, %v3781
    %v3832 = vpack.c.bf16 %v3784, %v3783
    %v3833 = vpack.c.bf16 %v3786, %v3785
    %v3834 = vpack.c.bf16 %v3788, %v3787
    %v3835 = vpack.c.bf16 %v3790, %v3789
    %v3836 = vpack.c.bf16 %v3792, %v3791
    %v3837 = vpack.c.bf16 %v3794, %v3793
    %v3838 = vpack.c.bf16 %v3796, %v3795
    %v3839 = vpack.c.bf16 %v3798, %v3797
    %v3840 = vpack.c.bf16 %v3800, %v3799
    %v3841 = vpack.c.bf16 %v3802, %v3801
    %v3842 = vpack.c.bf16 %v3804, %v3803
    %v3843 = vpack.c.bf16 %v3806, %v3805
    %v3844 = vpack.c.bf16 %v3808, %v3807
    %v3845 = vpack.c.bf16 %v3810, %v3809
    %v3846 = vpack.c.bf16 %v3812, %v3811
    %v3847 = vpack.c.bf16 %v3814, %v3813
    %v3848 = vpack.c.bf16 %v3816, %v3815
    %s3849 = scalar_lea.vmem %s1, 14
    %v3850 = vld [vmem:[%s3849] sm:$0x3]
    %v3852 = vsel %vm223, %v3817, 0
    %v3855 = vsel %vm223, %v3818, 0
    %v3858 = vsel %vm223, %v3819, 0
    %v3861 = vsel %vm223, %v3820, 0
    %v3864 = vsel %vm223, %v3821, 0
    %v3867 = vsel %vm223, %v3822, 0
    %v3870 = vsel %vm223, %v3823, 0
    %v3873 = vsel %vm223, %v3824, 0
    %v3876 = vsel %vm223, %v3825, 0
    %v3879 = vsel %vm223, %v3826, 0
    %v3882 = vsel %vm223, %v3827, 0
    %v3885 = vsel %vm223, %v3828, 0
    %v3888 = vsel %vm223, %v3829, 0
    %v3891 = vsel %vm223, %v3830, 0
    %v3894 = vsel %vm223, %v3831, 0
    %v3897 = vsel %vm223, %v3832, 0
    %v3900 = vsel %vm223, %v3833, 0
    %v3903 = vsel %vm223, %v3834, 0
    %v3906 = vsel %vm223, %v3835, 0
    %v3909 = vsel %vm223, %v3836, 0
    %v3912 = vsel %vm223, %v3837, 0
    %v3915 = vsel %vm223, %v3838, 0
    %v3918 = vsel %vm223, %v3839, 0
    %v3921 = vsel %vm223, %v3840, 0
    %v3924 = vsel %vm223, %v3841, 0
    %v3927 = vsel %vm223, %v3842, 0
    %v3930 = vsel %vm223, %v3843, 0
    %v3933 = vsel %vm223, %v3844, 0
    %v3936 = vsel %vm223, %v3845, 0
    %v3939 = vsel %vm223, %v3846, 0
    %v3942 = vsel %vm223, %v3847, 0
    %v3945 = vsel %vm223, %v3848, 0
    %v3948 = vsel %vm320, %v3850, 0
    %3950 = vmatprep.subr.bf16.mxu0 0
    %3951 = vmatpush1.bf16.msra.mxu0 %v3948
    %3952 = vmatprep.subr.bf16.mxu0 0
    %3953 = vmatpush1.bf16.msra.mxu0 0
    %3954 = vmatprep.subr.bf16.mxu0 0
    %3955 = vmatpush1.bf16.msra.mxu0 0
    %3956 = vmatprep.subr.bf16.mxu0 0
    %3957 = vmatpush1.bf16.msra.mxu0 0
    %3958 = vmatprep.subr.bf16.mxu0 0
    %3959 = vmatpush1.bf16.msra.mxu0 0
    %3960 = vmatprep.subr.bf16.mxu0 0
    %3961 = vmatpush1.bf16.msra.mxu0 0
    %3962 = vmatprep.subr.bf16.mxu0 0
    %3963 = vmatpush1.bf16.msra.mxu0 0
    %3964 = vmatprep.subr.bf16.mxu0 0
    %3965 = vmatpush1.bf16.msra.mxu0 0
    %3966 = vmatprep.subr.bf16.mxu0 0
    %3967 = vmatpush1.bf16.msra.mxu0 0
    %3968 = vmatprep.subr.bf16.mxu0 0
    %3969 = vmatpush1.bf16.msra.mxu0 0
    %3970 = vmatprep.subr.bf16.mxu0 0
    %3971 = vmatpush1.bf16.msra.mxu0 0
    %3972 = vmatprep.subr.bf16.mxu0 0
    %3973 = vmatpush1.bf16.msra.mxu0 0
    %3974 = vmatprep.subr.bf16.mxu0 0
    %3975 = vmatpush1.bf16.msra.mxu0 0
    %3976 = vmatprep.subr.bf16.mxu0 0
    %3977 = vmatpush1.bf16.msra.mxu0 0
    %3978 = vmatprep.subr.bf16.mxu0 0
    %3979 = vmatpush1.bf16.msra.mxu0 0
    %3980 = vmatprep.subr.bf16.mxu0 0
    %3981 = vmatpush1.bf16.msra.mxu0 0
    %3982 = vmatprep.mubr.bf16.mxu0 0
    %3983 = vmatmul.mubr.bf16.gmra.mrb[0].mxu0 %v3852
    %v3984 = vpop.f32.mrb[0].mxu0
    %v3985 = vadd.f32 0.0, %v3984
    %v3986 = vpop.f32.mrb[0].mxu0
    %v3987 = vpop.f32.mrb[0].mxu0
    %v3988 = vadd.f32 0.0, %v3987
    %v3989 = vpop.f32.mrb[0].mxu0
    %3990 = vmatprep.mubr.bf16.mxu0 0
    %3991 = vmatmul.mubr.bf16.gmra.mrb[0].mxu0 %v3855
    %v3992 = vpop.f32.mrb[0].mxu0
    %v3993 = vadd.f32 0.0, %v3992
    %v3994 = vpop.f32.mrb[0].mxu0
    %v3995 = vpop.f32.mrb[0].mxu0
    %v3996 = vadd.f32 0.0, %v3995
    %v3997 = vpop.f32.mrb[0].mxu0
    %3998 = vmatprep.mubr.bf16.mxu0 0
    %3999 = vmatmul.mubr.bf16.gmra.mrb[0].mxu0 %v3858
    %v4000 = vpop.f32.mrb[0].mxu0
    %v4001 = vadd.f32 0.0, %v4000
    %v4002 = vpop.f32.mrb[0].mxu0
    %v4003 = vpop.f32.mrb[0].mxu0
    %v4004 = vadd.f32 0.0, %v4003
    %v4005 = vpop.f32.mrb[0].mxu0
    %4006 = vmatprep.mubr.bf16.mxu0 0
    %4007 = vmatmul.mubr.bf16.gmra.mrb[0].mxu0 %v3861
    %v4008 = vpop.f32.mrb[0].mxu0
    %v4009 = vadd.f32 0.0, %v4008
    %v4010 = vpop.f32.mrb[0].mxu0
    %v4011 = vpop.f32.mrb[0].mxu0
    %v4012 = vadd.f32 0.0, %v4011
    %v4013 = vpop.f32.mrb[0].mxu0
    %4014 = vmatprep.mubr.bf16.mxu0 0
    %4015 = vmatmul.mubr.bf16.gmra.mrb[0].mxu0 %v3864
    %v4016 = vpop.f32.mrb[0].mxu0
    %v4017 = vadd.f32 0.0, %v4016
    %v4018 = vpop.f32.mrb[0].mxu0
    %v4019 = vpop.f32.mrb[0].mxu0
    %v4020 = vadd.f32 0.0, %v4019
    %v4021 = vpop.f32.mrb[0].mxu0
    %4022 = vmatprep.mubr.bf16.mxu0 0
    %4023 = vmatmul.mubr.bf16.gmra.mrb[0].mxu0 %v3867
    %v4024 = vpop.f32.mrb[0].mxu0
    %v4025 = vadd.f32 0.0, %v4024
    %v4026 = vpop.f32.mrb[0].mxu0
    %v4027 = vpop.f32.mrb[0].mxu0
    %v4028 = vadd.f32 0.0, %v4027
    %v4029 = vpop.f32.mrb[0].mxu0
    %4030 = vmatprep.mubr.bf16.mxu0 0
    %4031 = vmatmul.mubr.bf16.gmra.mrb[0].mxu0 %v3870
    %v4032 = vpop.f32.mrb[0].mxu0
    %v4033 = vadd.f32 0.0, %v4032
    %v4034 = vpop.f32.mrb[0].mxu0
    %v4035 = vpop.f32.mrb[0].mxu0
    %v4036 = vadd.f32 0.0, %v4035
    %v4037 = vpop.f32.mrb[0].mxu0
    %4038 = vmatprep.mubr.bf16.mxu0 0
    %4039 = vmatmul.mubr.bf16.gmra.mrb[0].mxu0 %v3873
    %v4040 = vpop.f32.mrb[0].mxu0
    %v4041 = vadd.f32 0.0, %v4040
    %v4042 = vpop.f32.mrb[0].mxu0
    %v4043 = vpop.f32.mrb[0].mxu0
    %v4044 = vadd.f32 0.0, %v4043
    %v4045 = vpop.f32.mrb[0].mxu0
    %4046 = vmatprep.mubr.bf16.mxu0 0
    %4047 = vmatmul.mubr.bf16.gmra.mrb[0].mxu0 %v3876
    %v4048 = vpop.f32.mrb[0].mxu0
    %v4049 = vadd.f32 0.0, %v4048
    %v4050 = vpop.f32.mrb[0].mxu0
    %v4051 = vpop.f32.mrb[0].mxu0
    %v4052 = vadd.f32 0.0, %v4051
    %v4053 = vpop.f32.mrb[0].mxu0
    %4054 = vmatprep.mubr.bf16.mxu0 0
    %4055 = vmatmul.mubr.bf16.gmra.mrb[0].mxu0 %v3879
    %v4056 = vpop.f32.mrb[0].mxu0
    %v4057 = vadd.f32 0.0, %v4056
    %v4058 = vpop.f32.mrb[0].mxu0
    %v4059 = vpop.f32.mrb[0].mxu0
    %v4060 = vadd.f32 0.0, %v4059
    %v4061 = vpop.f32.mrb[0].mxu0
    %4062 = vmatprep.mubr.bf16.mxu0 0
    %4063 = vmatmul.mubr.bf16.gmra.mrb[0].mxu0 %v3882
    %v4064 = vpop.f32.mrb[0].mxu0
    %v4065 = vadd.f32 0.0, %v4064
    %v4066 = vpop.f32.mrb[0].mxu0
    %v4067 = vpop.f32.mrb[0].mxu0
    %v4068 = vadd.f32 0.0, %v4067
    %v4069 = vpop.f32.mrb[0].mxu0
    %4070 = vmatprep.mubr.bf16.mxu0 0
    %4071 = vmatmul.mubr.bf16.gmra.mrb[0].mxu0 %v3885
    %v4072 = vpop.f32.mrb[0].mxu0
    %v4073 = vadd.f32 0.0, %v4072
    %v4074 = vpop.f32.mrb[0].mxu0
    %v4075 = vpop.f32.mrb[0].mxu0
    %v4076 = vadd.f32 0.0, %v4075
    %v4077 = vpop.f32.mrb[0].mxu0
    %4078 = vmatprep.mubr.bf16.mxu0 0
    %4079 = vmatmul.mubr.bf16.gmra.mrb[0].mxu0 %v3888
    %v4080 = vpop.f32.mrb[0].mxu0
    %v4081 = vadd.f32 0.0, %v4080
    %v4082 = vpop.f32.mrb[0].mxu0
    %v4083 = vpop.f32.mrb[0].mxu0
    %v4084 = vadd.f32 0.0, %v4083
    %v4085 = vpop.f32.mrb[0].mxu0
    %4086 = vmatprep.mubr.bf16.mxu0 0
    %4087 = vmatmul.mubr.bf16.gmra.mrb[0].mxu0 %v3891
    %v4088 = vpop.f32.mrb[0].mxu0
    %v4089 = vadd.f32 0.0, %v4088
    %v4090 = vpop.f32.mrb[0].mxu0
    %v4091 = vpop.f32.mrb[0].mxu0
    %v4092 = vadd.f32 0.0, %v4091
    %v4093 = vpop.f32.mrb[0].mxu0
    %4094 = vmatprep.mubr.bf16.mxu0 0
    %4095 = vmatmul.mubr.bf16.gmra.mrb[0].mxu0 %v3894
    %v4096 = vpop.f32.mrb[0].mxu0
    %v4097 = vadd.f32 0.0, %v4096
    %v4098 = vpop.f32.mrb[0].mxu0
    %v4099 = vpop.f32.mrb[0].mxu0
    %v4100 = vadd.f32 0.0, %v4099
    %v4101 = vpop.f32.mrb[0].mxu0
    %4102 = vmatprep.mubr.bf16.mxu0 0
    %4103 = vmatmul.mubr.bf16.gmra.mrb[0].mxu0 %v3897
    %v4104 = vpop.f32.mrb[0].mxu0
    %v4105 = vadd.f32 0.0, %v4104
    %v4106 = vpop.f32.mrb[0].mxu0
    %v4107 = vpop.f32.mrb[0].mxu0
    %v4108 = vadd.f32 0.0, %v4107
    %v4109 = vpop.f32.mrb[0].mxu0
    %4110 = vmatprep.mubr.bf16.mxu0 0
    %4111 = vmatmul.mubr.bf16.gmra.mrb[0].mxu0 %v3900
    %v4112 = vpop.f32.mrb[0].mxu0
    %v4113 = vadd.f32 0.0, %v4112
    %v4114 = vpop.f32.mrb[0].mxu0
    %v4115 = vpop.f32.mrb[0].mxu0
    %v4116 = vadd.f32 0.0, %v4115
    %v4117 = vpop.f32.mrb[0].mxu0
    %4118 = vmatprep.mubr.bf16.mxu0 0
    %4119 = vmatmul.mubr.bf16.gmra.mrb[0].mxu0 %v3903
    %v4120 = vpop.f32.mrb[0].mxu0
    %v4121 = vadd.f32 0.0, %v4120
    %v4122 = vpop.f32.mrb[0].mxu0
    %v4123 = vpop.f32.mrb[0].mxu0
    %v4124 = vadd.f32 0.0, %v4123
    %v4125 = vpop.f32.mrb[0].mxu0
    %4126 = vmatprep.mubr.bf16.mxu0 0
    %4127 = vmatmul.mubr.bf16.gmra.mrb[0].mxu0 %v3906
    %v4128 = vpop.f32.mrb[0].mxu0
    %v4129 = vadd.f32 0.0, %v4128
    %v4130 = vpop.f32.mrb[0].mxu0
    %v4131 = vpop.f32.mrb[0].mxu0
    %v4132 = vadd.f32 0.0, %v4131
    %v4133 = vpop.f32.mrb[0].mxu0
    %4134 = vmatprep.mubr.bf16.mxu0 0
    %4135 = vmatmul.mubr.bf16.gmra.mrb[0].mxu0 %v3909
    %v4136 = vpop.f32.mrb[0].mxu0
    %v4137 = vadd.f32 0.0, %v4136
    %v4138 = vpop.f32.mrb[0].mxu0
    %v4139 = vpop.f32.mrb[0].mxu0
    %v4140 = vadd.f32 0.0, %v4139
    %v4141 = vpop.f32.mrb[0].mxu0
    %4142 = vmatprep.mubr.bf16.mxu0 0
    %4143 = vmatmul.mubr.bf16.gmra.mrb[0].mxu0 %v3912
    %v4144 = vpop.f32.mrb[0].mxu0
    %v4145 = vadd.f32 0.0, %v4144
    %v4146 = vpop.f32.mrb[0].mxu0
    %v4147 = vpop.f32.mrb[0].mxu0
    %v4148 = vadd.f32 0.0, %v4147
    %v4149 = vpop.f32.mrb[0].mxu0
    %4150 = vmatprep.mubr.bf16.mxu0 0
    %4151 = vmatmul.mubr.bf16.gmra.mrb[0].mxu0 %v3915
    %v4152 = vpop.f32.mrb[0].mxu0
    %v4153 = vadd.f32 0.0, %v4152
    %v4154 = vpop.f32.mrb[0].mxu0
    %v4155 = vpop.f32.mrb[0].mxu0
    %v4156 = vadd.f32 0.0, %v4155
    %v4157 = vpop.f32.mrb[0].mxu0
    %4158 = vmatprep.mubr.bf16.mxu0 0
    %4159 = vmatmul.mubr.bf16.gmra.mrb[0].mxu0 %v3918
    %v4160 = vpop.f32.mrb[0].mxu0
    %v4161 = vadd.f32 0.0, %v4160
    %v4162 = vpop.f32.mrb[0].mxu0
    %v4163 = vpop.f32.mrb[0].mxu0
    %v4164 = vadd.f32 0.0, %v4163
    %v4165 = vpop.f32.mrb[0].mxu0
    %4166 = vmatprep.mubr.bf16.mxu0 0
    %4167 = vmatmul.mubr.bf16.gmra.mrb[0].mxu0 %v3921
    %v4168 = vpop.f32.mrb[0].mxu0
    %v4169 = vadd.f32 0.0, %v4168
    %v4170 = vpop.f32.mrb[0].mxu0
    %v4171 = vpop.f32.mrb[0].mxu0
    %v4172 = vadd.f32 0.0, %v4171
    %v4173 = vpop.f32.mrb[0].mxu0
    %4174 = vmatprep.mubr.bf16.mxu0 0
    %4175 = vmatmul.mubr.bf16.gmra.mrb[0].mxu0 %v3924
    %v4176 = vpop.f32.mrb[0].mxu0
    %v4177 = vadd.f32 0.0, %v4176
    %v4178 = vpop.f32.mrb[0].mxu0
    %v4179 = vpop.f32.mrb[0].mxu0
    %v4180 = vadd.f32 0.0, %v4179
    %v4181 = vpop.f32.mrb[0].mxu0
    %4182 = vmatprep.mubr.bf16.mxu0 0
    %4183 = vmatmul.mubr.bf16.gmra.mrb[0].mxu0 %v3927
    %v4184 = vpop.f32.mrb[0].mxu0
    %v4185 = vadd.f32 0.0, %v4184
    %v4186 = vpop.f32.mrb[0].mxu0
    %v4187 = vpop.f32.mrb[0].mxu0
    %v4188 = vadd.f32 0.0, %v4187
    %v4189 = vpop.f32.mrb[0].mxu0
    %4190 = vmatprep.mubr.bf16.mxu0 0
    %4191 = vmatmul.mubr.bf16.gmra.mrb[0].mxu0 %v3930
    %v4192 = vpop.f32.mrb[0].mxu0
    %v4193 = vadd.f32 0.0, %v4192
    %v4194 = vpop.f32.mrb[0].mxu0
    %v4195 = vpop.f32.mrb[0].mxu0
    %v4196 = vadd.f32 0.0, %v4195
    %v4197 = vpop.f32.mrb[0].mxu0
    %4198 = vmatprep.mubr.bf16.mxu0 0
    %4199 = vmatmul.mubr.bf16.gmra.mrb[0].mxu0 %v3933
    %v4200 = vpop.f32.mrb[0].mxu0
    %v4201 = vadd.f32 0.0, %v4200
    %v4202 = vpop.f32.mrb[0].mxu0
    %v4203 = vpop.f32.mrb[0].mxu0
    %v4204 = vadd.f32 0.0, %v4203
    %v4205 = vpop.f32.mrb[0].mxu0
    %4206 = vmatprep.mubr.bf16.mxu0 0
    %4207 = vmatmul.mubr.bf16.gmra.mrb[0].mxu0 %v3936
    %v4208 = vpop.f32.mrb[0].mxu0
    %v4209 = vadd.f32 0.0, %v4208
    %v4210 = vpop.f32.mrb[0].mxu0
    %v4211 = vpop.f32.mrb[0].mxu0
    %v4212 = vadd.f32 0.0, %v4211
    %v4213 = vpop.f32.mrb[0].mxu0
    %4214 = vmatprep.mubr.bf16.mxu0 0
    %4215 = vmatmul.mubr.bf16.gmra.mrb[0].mxu0 %v3939
    %v4216 = vpop.f32.mrb[0].mxu0
    %v4217 = vadd.f32 0.0, %v4216
    %v4218 = vpop.f32.mrb[0].mxu0
    %v4219 = vpop.f32.mrb[0].mxu0
    %v4220 = vadd.f32 0.0, %v4219
    %v4221 = vpop.f32.mrb[0].mxu0
    %4222 = vmatprep.mubr.bf16.mxu0 0
    %4223 = vmatmul.mubr.bf16.gmra.mrb[0].mxu0 %v3942
    %v4224 = vpop.f32.mrb[0].mxu0
    %v4225 = vadd.f32 0.0, %v4224
    %v4226 = vpop.f32.mrb[0].mxu0
    %v4227 = vpop.f32.mrb[0].mxu0
    %v4228 = vadd.f32 0.0, %v4227
    %v4229 = vpop.f32.mrb[0].mxu0
    %4230 = vmatprep.mubr.bf16.mxu0 0
    %4231 = vmatmul.mubr.bf16.gmra.mrb[0].mxu0 %v3945
    %v4232 = vpop.f32.mrb[0].mxu0
    %v4233 = vadd.f32 0.0, %v4232
    %v4234 = vpop.f32.mrb[0].mxu0
    %v4235 = vpop.f32.mrb[0].mxu0
    %v4236 = vadd.f32 0.0, %v4235
    %v4237 = vpop.f32.mrb[0].mxu0
    %4238 = vdwg.mxu0
    %v4239 = vadd.f32 %v3689, %v3985
    %v4240 = vadd.f32 %v3690, %v3988
    %v4241 = vadd.f32 %v3691, %v3993
    %v4242 = vadd.f32 %v3692, %v3996
    %v4243 = vadd.f32 %v3693, %v4001
    %v4244 = vadd.f32 %v3694, %v4004
    %v4245 = vadd.f32 %v3695, %v4009
    %v4246 = vadd.f32 %v3696, %v4012
    %v4247 = vadd.f32 %v3697, %v4017
    %v4248 = vadd.f32 %v3698, %v4020
    %v4249 = vadd.f32 %v3699, %v4025
    %v4250 = vadd.f32 %v3700, %v4028
    %v4251 = vadd.f32 %v3701, %v4033
    %v4252 = vadd.f32 %v3702, %v4036
    %v4253 = vadd.f32 %v3703, %v4041
    %v4254 = vadd.f32 %v3704, %v4044
    %v4255 = vadd.f32 %v3705, %v4049
    %v4256 = vadd.f32 %v3706, %v4052
    %v4257 = vadd.f32 %v3707, %v4057
    %v4258 = vadd.f32 %v3708, %v4060
    %v4259 = vadd.f32 %v3709, %v4065
    %v4260 = vadd.f32 %v3710, %v4068
    %v4261 = vadd.f32 %v3711, %v4073
    %v4262 = vadd.f32 %v3712, %v4076
    %v4263 = vadd.f32 %v3713, %v4081
    %v4264 = vadd.f32 %v3714, %v4084
    %v4265 = vadd.f32 %v3715, %v4089
    %v4266 = vadd.f32 %v3716, %v4092
    %v4267 = vadd.f32 %v3717, %v4097
    %v4268 = vadd.f32 %v3718, %v4100
    %v4269 = vadd.f32 %v3719, %v4105
    %v4270 = vadd.f32 %v3720, %v4108
    %v4271 = vadd.f32 %v3721, %v4113
    %v4272 = vadd.f32 %v3722, %v4116
    %v4273 = vadd.f32 %v3723, %v4121
    %v4274 = vadd.f32 %v3724, %v4124
    %v4275 = vadd.f32 %v3725, %v4129
    %v4276 = vadd.f32 %v3726, %v4132
    %v4277 = vadd.f32 %v3727, %v4137
    %v4278 = vadd.f32 %v3728, %v4140
    %v4279 = vadd.f32 %v3729, %v4145
    %v4280 = vadd.f32 %v3730, %v4148
    %v4281 = vadd.f32 %v3731, %v4153
    %v4282 = vadd.f32 %v3732, %v4156
    %v4283 = vadd.f32 %v3733, %v4161
    %v4284 = vadd.f32 %v3734, %v4164
    %v4285 = vadd.f32 %v3735, %v4169
    %v4286 = vadd.f32 %v3736, %v4172
    %v4287 = vadd.f32 %v3737, %v4177
    %v4288 = vadd.f32 %v3738, %v4180
    %v4289 = vadd.f32 %v3739, %v4185
    %v4290 = vadd.f32 %v3740, %v4188
    %v4291 = vadd.f32 %v3741, %v4193
    %v4292 = vadd.f32 %v3742, %v4196
    %v4293 = vadd.f32 %v3743, %v4201
    %v4294 = vadd.f32 %v3744, %v4204
    %v4295 = vadd.f32 %v3745, %v4209
    %v4296 = vadd.f32 %v3746, %v4212
    %v4297 = vadd.f32 %v3747, %v4217
    %v4298 = vadd.f32 %v3748, %v4220
    %v4299 = vadd.f32 %v3749, %v4225
    %v4300 = vadd.f32 %v3750, %v4228
    %v4301 = vadd.f32 %v3751, %v4233
    %v4302 = vadd.f32 %v3752, %v4236
    %v4303 = vld [vmem:[%s3202 + $0x2] sm:$0xff]
    %v4304 = vld [vmem:[%s3202 + $0xa] sm:$0xff]
    %v4305 = vld [vmem:[%s3202 + $0x1a] sm:$0xff]
    %v4306 = vld [vmem:[%s3202 + $0x22] sm:$0xff]
    %v4307 = vld [vmem:[%s3202 + $0x32] sm:$0xff]
    %v4308 = vld [vmem:[%s3202 + $0x3a] sm:$0xff]
    %v4309 = vld [vmem:[%s3202 + $0x4a] sm:$0xff]
    %v4310 = vld [vmem:[%s3202 + $0x52] sm:$0xff]
    %v4311 = vld [vmem:[%s3202 + $0x62] sm:$0xff]
    %v4312 = vld [vmem:[%s3202 + $0x6a] sm:$0xff]
    %v4313 = vld [vmem:[%s3202 + $0x7a] sm:$0xff]
    %v4314 = vld [vmem:[%s3202 + $0x82] sm:$0xff]
    %v4315 = vld [vmem:[%s3202 + $0x92] sm:$0xff]
    %v4316 = vld [vmem:[%s3202 + $0x9a] sm:$0xff]
    %v4317 = vld [vmem:[%s3202 + $0xaa] sm:$0xff]
    %v4318 = vld [vmem:[%s3202 + $0xb2] sm:$0xff]
    %v4319 = vld [vmem:[%s3202 + $0xc2] sm:$0xff]
    %v4320 = vld [vmem:[%s3202 + $0xca] sm:$0xff]
    %v4321 = vld [vmem:[%s3202 + $0xda] sm:$0xff]
    %v4322 = vld [vmem:[%s3202 + $0xe2] sm:$0xff]
    %v4323 = vld [vmem:[%s3202 + $0xf2] sm:$0xff]
    %v4324 = vld [vmem:[%s3202 + $0xfa] sm:$0xff]
    %v4325 = vld [vmem:[%s3202 + $0x10a] sm:$0xff]
    %v4326 = vld [vmem:[%s3202 + $0x112] sm:$0xff]
    %v4327 = vld [vmem:[%s3202 + $0x122] sm:$0xff]
    %v4328 = vld [vmem:[%s3202 + $0x12a] sm:$0xff]
    %v4329 = vld [vmem:[%s3202 + $0x13a] sm:$0xff]
    %v4330 = vld [vmem:[%s3202 + $0x142] sm:$0xff]
    %v4331 = vld [vmem:[%s3202 + $0x152] sm:$0xff]
    %v4332 = vld [vmem:[%s3202 + $0x15a] sm:$0xff]
    %v4333 = vld [vmem:[%s3202 + $0x16a] sm:$0xff]
    %v4334 = vld [vmem:[%s3202 + $0x172] sm:$0xff]
    %v4335 = vld [vmem:[%s3202 + $0x1b2] sm:$0xff]
    %v4336 = vld [vmem:[%s3202 + $0x1ba] sm:$0xff]
    %v4337 = vld [vmem:[%s3202 + $0x1ca] sm:$0xff]
    %v4338 = vld [vmem:[%s3202 + $0x1d2] sm:$0xff]
    %v4339 = vld [vmem:[%s3202 + $0x1e2] sm:$0xff]
    %v4340 = vld [vmem:[%s3202 + $0x1ea] sm:$0xff]
    %v4341 = vld [vmem:[%s3202 + $0x1fa] sm:$0xff]
    %v4342 = vld [vmem:[%s3202 + $0x202] sm:$0xff]
    %v4343 = vld [vmem:[%s3202 + $0x212] sm:$0xff]
    %v4344 = vld [vmem:[%s3202 + $0x21a] sm:$0xff]
    %v4345 = vld [vmem:[%s3202 + $0x22a] sm:$0xff]
    %v4346 = vld [vmem:[%s3202 + $0x232] sm:$0xff]
    %v4347 = vld [vmem:[%s3202 + $0x242] sm:$0xff]
    %v4348 = vld [vmem:[%s3202 + $0x24a] sm:$0xff]
    %v4349 = vld [vmem:[%s3202 + $0x25a] sm:$0xff]
    %v4350 = vld [vmem:[%s3202 + $0x262] sm:$0xff]
    %v4351 = vld [vmem:[%s3202 + $0x272] sm:$0xff]
    %v4352 = vld [vmem:[%s3202 + $0x27a] sm:$0xff]
    %v4353 = vld [vmem:[%s3202 + $0x28a] sm:$0xff]
    %v4354 = vld [vmem:[%s3202 + $0x292] sm:$0xff]
    %v4355 = vld [vmem:[%s3202 + $0x2a2] sm:$0xff]
    %v4356 = vld [vmem:[%s3202 + $0x2aa] sm:$0xff]
    %v4357 = vld [vmem:[%s3202 + $0x2ba] sm:$0xff]
    %v4358 = vld [vmem:[%s3202 + $0x2c2] sm:$0xff]
    %v4359 = vld [vmem:[%s3202 + $0x2d2] sm:$0xff]
    %v4360 = vld [vmem:[%s3202 + $0x2da] sm:$0xff]
    %v4361 = vld [vmem:[%s3202 + $0x2ea] sm:$0xff]
    %v4362 = vld [vmem:[%s3202 + $0x2f2] sm:$0xff]
    %v4363 = vld [vmem:[%s3202 + $0x302] sm:$0xff]
    %v4364 = vld [vmem:[%s3202 + $0x30a] sm:$0xff]
    %v4365 = vld [vmem:[%s3202 + $0x31a] sm:$0xff]
    %v4366 = vld [vmem:[%s3202 + $0x322] sm:$0xff]
    %v4367 = vpack.c.bf16 %v4304, %v4303
    %v4368 = vpack.c.bf16 %v4306, %v4305
    %v4369 = vpack.c.bf16 %v4308, %v4307
    %v4370 = vpack.c.bf16 %v4310, %v4309
    %v4371 = vpack.c.bf16 %v4312, %v4311
    %v4372 = vpack.c.bf16 %v4314, %v4313
    %v4373 = vpack.c.bf16 %v4316, %v4315
    %v4374 = vpack.c.bf16 %v4318, %v4317
    %v4375 = vpack.c.bf16 %v4320, %v4319
    %v4376 = vpack.c.bf16 %v4322, %v4321
    %v4377 = vpack.c.bf16 %v4324, %v4323
    %v4378 = vpack.c.bf16 %v4326, %v4325
    %v4379 = vpack.c.bf16 %v4328, %v4327
    %v4380 = vpack.c.bf16 %v4330, %v4329
    %v4381 = vpack.c.bf16 %v4332, %v4331
    %v4382 = vpack.c.bf16 %v4334, %v4333
    %v4383 = vpack.c.bf16 %v4336, %v4335
    %v4384 = vpack.c.bf16 %v4338, %v4337
    %v4385 = vpack.c.bf16 %v4340, %v4339
    %v4386 = vpack.c.bf16 %v4342, %v4341
    %v4387 = vpack.c.bf16 %v4344, %v4343
    %v4388 = vpack.c.bf16 %v4346, %v4345
    %v4389 = vpack.c.bf16 %v4348, %v4347
    %v4390 = vpack.c.bf16 %v4350, %v4349
    %v4391 = vpack.c.bf16 %v4352, %v4351
    %v4392 = vpack.c.bf16 %v4354, %v4353
    %v4393 = vpack.c.bf16 %v4356, %v4355
    %v4394 = vpack.c.bf16 %v4358, %v4357
    %v4395 = vpack.c.bf16 %v4360, %v4359
    %v4396 = vpack.c.bf16 %v4362, %v4361
    %v4397 = vpack.c.bf16 %v4364, %v4363
    %v4398 = vpack.c.bf16 %v4366, %v4365
    %s4399 = scalar_lea.vmem %s1, 16
    %v4400 = vld [vmem:[%s4399] sm:$0x3]
    %v4402 = vsel %vm223, %v4367, 0
    %v4405 = vsel %vm223, %v4368, 0
    %v4408 = vsel %vm223, %v4369, 0
    %v4411 = vsel %vm223, %v4370, 0
    %v4414 = vsel %vm223, %v4371, 0
    %v4417 = vsel %vm223, %v4372, 0
    %v4420 = vsel %vm223, %v4373, 0
    %v4423 = vsel %vm223, %v4374, 0
    %v4426 = vsel %vm223, %v4375, 0
    %v4429 = vsel %vm223, %v4376, 0
    %v4432 = vsel %vm223, %v4377, 0
    %v4435 = vsel %vm223, %v4378, 0
    %v4438 = vsel %vm223, %v4379, 0
    %v4441 = vsel %vm223, %v4380, 0
    %v4444 = vsel %vm223, %v4381, 0
    %v4447 = vsel %vm223, %v4382, 0
    %v4450 = vsel %vm223, %v4383, 0
    %v4453 = vsel %vm223, %v4384, 0
    %v4456 = vsel %vm223, %v4385, 0
    %v4459 = vsel %vm223, %v4386, 0
    %v4462 = vsel %vm223, %v4387, 0
    %v4465 = vsel %vm223, %v4388, 0
    %v4468 = vsel %vm223, %v4389, 0
    %v4471 = vsel %vm223, %v4390, 0
    %v4474 = vsel %vm223, %v4391, 0
    %v4477 = vsel %vm223, %v4392, 0
    %v4480 = vsel %vm223, %v4393, 0
    %v4483 = vsel %vm223, %v4394, 0
    %v4486 = vsel %vm223, %v4395, 0
    %v4489 = vsel %vm223, %v4396, 0
    %v4492 = vsel %vm223, %v4397, 0
    %v4495 = vsel %vm223, %v4398, 0
    %v4498 = vsel %vm320, %v4400, 0
    %4500 = vmatprep.subr.bf16.mxu0 0
    %4501 = vmatpush1.bf16.msra.mxu0 %v4498
    %4502 = vmatprep.subr.bf16.mxu0 0
    %4503 = vmatpush1.bf16.msra.mxu0 0
    %4504 = vmatprep.subr.bf16.mxu0 0
    %4505 = vmatpush1.bf16.msra.mxu0 0
    %4506 = vmatprep.subr.bf16.mxu0 0
    %4507 = vmatpush1.bf16.msra.mxu0 0
    %4508 = vmatprep.subr.bf16.mxu0 0
    %4509 = vmatpush1.bf16.msra.mxu0 0
    %4510 = vmatprep.subr.bf16.mxu0 0
    %4511 = vmatpush1.bf16.msra.mxu0 0
    %4512 = vmatprep.subr.bf16.mxu0 0
    %4513 = vmatpush1.bf16.msra.mxu0 0
    %4514 = vmatprep.subr.bf16.mxu0 0
    %4515 = vmatpush1.bf16.msra.mxu0 0
    %4516 = vmatprep.subr.bf16.mxu0 0
    %4517 = vmatpush1.bf16.msra.mxu0 0
    %4518 = vmatprep.subr.bf16.mxu0 0
    %4519 = vmatpush1.bf16.msra.mxu0 0
    %4520 = vmatprep.subr.bf16.mxu0 0
    %4521 = vmatpush1.bf16.msra.mxu0 0
    %4522 = vmatprep.subr.bf16.mxu0 0
    %4523 = vmatpush1.bf16.msra.mxu0 0
    %4524 = vmatprep.subr.bf16.mxu0 0
    %4525 = vmatpush1.bf16.msra.mxu0 0
    %4526 = vmatprep.subr.bf16.mxu0 0
    %4527 = vmatpush1.bf16.msra.mxu0 0
    %4528 = vmatprep.subr.bf16.mxu0 0
    %4529 = vmatpush1.bf16.msra.mxu0 0
    %4530 = vmatprep.subr.bf16.mxu0 0
    %4531 = vmatpush1.bf16.msra.mxu0 0
    %4532 = vmatprep.mubr.bf16.mxu0 0
    %4533 = vmatmul.mubr.bf16.gmra.mrb[0].mxu0 %v4402
    %v4534 = vpop.f32.mrb[0].mxu0
    %v4535 = vadd.f32 0.0, %v4534
    %v4536 = vpop.f32.mrb[0].mxu0
    %v4537 = vpop.f32.mrb[0].mxu0
    %v4538 = vadd.f32 0.0, %v4537
    %v4539 = vpop.f32.mrb[0].mxu0
    %4540 = vmatprep.mubr.bf16.mxu0 0
    %4541 = vmatmul.mubr.bf16.gmra.mrb[0].mxu0 %v4405
    %v4542 = vpop.f32.mrb[0].mxu0
    %v4543 = vadd.f32 0.0, %v4542
    %v4544 = vpop.f32.mrb[0].mxu0
    %v4545 = vpop.f32.mrb[0].mxu0
    %v4546 = vadd.f32 0.0, %v4545
    %v4547 = vpop.f32.mrb[0].mxu0
    %4548 = vmatprep.mubr.bf16.mxu0 0
    %4549 = vmatmul.mubr.bf16.gmra.mrb[0].mxu0 %v4408
    %v4550 = vpop.f32.mrb[0].mxu0
    %v4551 = vadd.f32 0.0, %v4550
    %v4552 = vpop.f32.mrb[0].mxu0
    %v4553 = vpop.f32.mrb[0].mxu0
    %v4554 = vadd.f32 0.0, %v4553
    %v4555 = vpop.f32.mrb[0].mxu0
    %4556 = vmatprep.mubr.bf16.mxu0 0
    %4557 = vmatmul.mubr.bf16.gmra.mrb[0].mxu0 %v4411
    %v4558 = vpop.f32.mrb[0].mxu0
    %v4559 = vadd.f32 0.0, %v4558
    %v4560 = vpop.f32.mrb[0].mxu0
    %v4561 = vpop.f32.mrb[0].mxu0
    %v4562 = vadd.f32 0.0, %v4561
    %v4563 = vpop.f32.mrb[0].mxu0
    %4564 = vmatprep.mubr.bf16.mxu0 0
    %4565 = vmatmul.mubr.bf16.gmra.mrb[0].mxu0 %v4414
    %v4566 = vpop.f32.mrb[0].mxu0
    %v4567 = vadd.f32 0.0, %v4566
    %v4568 = vpop.f32.mrb[0].mxu0
    %v4569 = vpop.f32.mrb[0].mxu0
    %v4570 = vadd.f32 0.0, %v4569
    %v4571 = vpop.f32.mrb[0].mxu0
    %4572 = vmatprep.mubr.bf16.mxu0 0
    %4573 = vmatmul.mubr.bf16.gmra.mrb[0].mxu0 %v4417
    %v4574 = vpop.f32.mrb[0].mxu0
    %v4575 = vadd.f32 0.0, %v4574
    %v4576 = vpop.f32.mrb[0].mxu0
    %v4577 = vpop.f32.mrb[0].mxu0
    %v4578 = vadd.f32 0.0, %v4577
    %v4579 = vpop.f32.mrb[0].mxu0
    %4580 = vmatprep.mubr.bf16.mxu0 0
    %4581 = vmatmul.mubr.bf16.gmra.mrb[0].mxu0 %v4420
    %v4582 = vpop.f32.mrb[0].mxu0
    %v4583 = vadd.f32 0.0, %v4582
    %v4584 = vpop.f32.mrb[0].mxu0
    %v4585 = vpop.f32.mrb[0].mxu0
    %v4586 = vadd.f32 0.0, %v4585
    %v4587 = vpop.f32.mrb[0].mxu0
    %4588 = vmatprep.mubr.bf16.mxu0 0
    %4589 = vmatmul.mubr.bf16.gmra.mrb[0].mxu0 %v4423
    %v4590 = vpop.f32.mrb[0].mxu0
    %v4591 = vadd.f32 0.0, %v4590
    %v4592 = vpop.f32.mrb[0].mxu0
    %v4593 = vpop.f32.mrb[0].mxu0
    %v4594 = vadd.f32 0.0, %v4593
    %v4595 = vpop.f32.mrb[0].mxu0
    %4596 = vmatprep.mubr.bf16.mxu0 0
    %4597 = vmatmul.mubr.bf16.gmra.mrb[0].mxu0 %v4426
    %v4598 = vpop.f32.mrb[0].mxu0
    %v4599 = vadd.f32 0.0, %v4598
    %v4600 = vpop.f32.mrb[0].mxu0
    %v4601 = vpop.f32.mrb[0].mxu0
    %v4602 = vadd.f32 0.0, %v4601
    %v4603 = vpop.f32.mrb[0].mxu0
    %4604 = vmatprep.mubr.bf16.mxu0 0
    %4605 = vmatmul.mubr.bf16.gmra.mrb[0].mxu0 %v4429
    %v4606 = vpop.f32.mrb[0].mxu0
    %v4607 = vadd.f32 0.0, %v4606
    %v4608 = vpop.f32.mrb[0].mxu0
    %v4609 = vpop.f32.mrb[0].mxu0
    %v4610 = vadd.f32 0.0, %v4609
    %v4611 = vpop.f32.mrb[0].mxu0
    %4612 = vmatprep.mubr.bf16.mxu0 0
    %4613 = vmatmul.mubr.bf16.gmra.mrb[0].mxu0 %v4432
    %v4614 = vpop.f32.mrb[0].mxu0
    %v4615 = vadd.f32 0.0, %v4614
    %v4616 = vpop.f32.mrb[0].mxu0
    %v4617 = vpop.f32.mrb[0].mxu0
    %v4618 = vadd.f32 0.0, %v4617
    %v4619 = vpop.f32.mrb[0].mxu0
    %4620 = vmatprep.mubr.bf16.mxu0 0
    %4621 = vmatmul.mubr.bf16.gmra.mrb[0].mxu0 %v4435
    %v4622 = vpop.f32.mrb[0].mxu0
    %v4623 = vadd.f32 0.0, %v4622
    %v4624 = vpop.f32.mrb[0].mxu0
    %v4625 = vpop.f32.mrb[0].mxu0
    %v4626 = vadd.f32 0.0, %v4625
    %v4627 = vpop.f32.mrb[0].mxu0
    %4628 = vmatprep.mubr.bf16.mxu0 0
    %4629 = vmatmul.mubr.bf16.gmra.mrb[0].mxu0 %v4438
    %v4630 = vpop.f32.mrb[0].mxu0
    %v4631 = vadd.f32 0.0, %v4630
    %v4632 = vpop.f32.mrb[0].mxu0
    %v4633 = vpop.f32.mrb[0].mxu0
    %v4634 = vadd.f32 0.0, %v4633
    %v4635 = vpop.f32.mrb[0].mxu0
    %4636 = vmatprep.mubr.bf16.mxu0 0
    %4637 = vmatmul.mubr.bf16.gmra.mrb[0].mxu0 %v4441
    %v4638 = vpop.f32.mrb[0].mxu0
    %v4639 = vadd.f32 0.0, %v4638
    %v4640 = vpop.f32.mrb[0].mxu0
    %v4641 = vpop.f32.mrb[0].mxu0
    %v4642 = vadd.f32 0.0, %v4641
    %v4643 = vpop.f32.mrb[0].mxu0
    %4644 = vmatprep.mubr.bf16.mxu0 0
    %4645 = vmatmul.mubr.bf16.gmra.mrb[0].mxu0 %v4444
    %v4646 = vpop.f32.mrb[0].mxu0
    %v4647 = vadd.f32 0.0, %v4646
    %v4648 = vpop.f32.mrb[0].mxu0
    %v4649 = vpop.f32.mrb[0].mxu0
    %v4650 = vadd.f32 0.0, %v4649
    %v4651 = vpop.f32.mrb[0].mxu0
    %4652 = vmatprep.mubr.bf16.mxu0 0
    %4653 = vmatmul.mubr.bf16.gmra.mrb[0].mxu0 %v4447
    %v4654 = vpop.f32.mrb[0].mxu0
    %v4655 = vadd.f32 0.0, %v4654
    %v4656 = vpop.f32.mrb[0].mxu0
    %v4657 = vpop.f32.mrb[0].mxu0
    %v4658 = vadd.f32 0.0, %v4657
    %v4659 = vpop.f32.mrb[0].mxu0
    %4660 = vmatprep.mubr.bf16.mxu0 0
    %4661 = vmatmul.mubr.bf16.gmra.mrb[0].mxu0 %v4450
    %v4662 = vpop.f32.mrb[0].mxu0
    %v4663 = vadd.f32 0.0, %v4662
    %v4664 = vpop.f32.mrb[0].mxu0
    %v4665 = vpop.f32.mrb[0].mxu0
    %v4666 = vadd.f32 0.0, %v4665
    %v4667 = vpop.f32.mrb[0].mxu0
    %4668 = vmatprep.mubr.bf16.mxu0 0
    %4669 = vmatmul.mubr.bf16.gmra.mrb[0].mxu0 %v4453
    %v4670 = vpop.f32.mrb[0].mxu0
    %v4671 = vadd.f32 0.0, %v4670
    %v4672 = vpop.f32.mrb[0].mxu0
    %v4673 = vpop.f32.mrb[0].mxu0
    %v4674 = vadd.f32 0.0, %v4673
    %v4675 = vpop.f32.mrb[0].mxu0
    %4676 = vmatprep.mubr.bf16.mxu0 0
    %4677 = vmatmul.mubr.bf16.gmra.mrb[0].mxu0 %v4456
    %v4678 = vpop.f32.mrb[0].mxu0
    %v4679 = vadd.f32 0.0, %v4678
    %v4680 = vpop.f32.mrb[0].mxu0
    %v4681 = vpop.f32.mrb[0].mxu0
    %v4682 = vadd.f32 0.0, %v4681
    %v4683 = vpop.f32.mrb[0].mxu0
    %4684 = vmatprep.mubr.bf16.mxu0 0
    %4685 = vmatmul.mubr.bf16.gmra.mrb[0].mxu0 %v4459
    %v4686 = vpop.f32.mrb[0].mxu0
    %v4687 = vadd.f32 0.0, %v4686
    %v4688 = vpop.f32.mrb[0].mxu0
    %v4689 = vpop.f32.mrb[0].mxu0
    %v4690 = vadd.f32 0.0, %v4689
    %v4691 = vpop.f32.mrb[0].mxu0
    %4692 = vmatprep.mubr.bf16.mxu0 0
    %4693 = vmatmul.mubr.bf16.gmra.mrb[0].mxu0 %v4462
    %v4694 = vpop.f32.mrb[0].mxu0
    %v4695 = vadd.f32 0.0, %v4694
    %v4696 = vpop.f32.mrb[0].mxu0
    %v4697 = vpop.f32.mrb[0].mxu0
    %v4698 = vadd.f32 0.0, %v4697
    %v4699 = vpop.f32.mrb[0].mxu0
    %4700 = vmatprep.mubr.bf16.mxu0 0
    %4701 = vmatmul.mubr.bf16.gmra.mrb[0].mxu0 %v4465
    %v4702 = vpop.f32.mrb[0].mxu0
    %v4703 = vadd.f32 0.0, %v4702
    %v4704 = vpop.f32.mrb[0].mxu0
    %v4705 = vpop.f32.mrb[0].mxu0
    %v4706 = vadd.f32 0.0, %v4705
    %v4707 = vpop.f32.mrb[0].mxu0
    %4708 = vmatprep.mubr.bf16.mxu0 0
    %4709 = vmatmul.mubr.bf16.gmra.mrb[0].mxu0 %v4468
    %v4710 = vpop.f32.mrb[0].mxu0
    %v4711 = vadd.f32 0.0, %v4710
    %v4712 = vpop.f32.mrb[0].mxu0
    %v4713 = vpop.f32.mrb[0].mxu0
    %v4714 = vadd.f32 0.0, %v4713
    %v4715 = vpop.f32.mrb[0].mxu0
    %4716 = vmatprep.mubr.bf16.mxu0 0
    %4717 = vmatmul.mubr.bf16.gmra.mrb[0].mxu0 %v4471
    %v4718 = vpop.f32.mrb[0].mxu0
    %v4719 = vadd.f32 0.0, %v4718
    %v4720 = vpop.f32.mrb[0].mxu0
    %v4721 = vpop.f32.mrb[0].mxu0
    %v4722 = vadd.f32 0.0, %v4721
    %v4723 = vpop.f32.mrb[0].mxu0
    %4724 = vmatprep.mubr.bf16.mxu0 0
    %4725 = vmatmul.mubr.bf16.gmra.mrb[0].mxu0 %v4474
    %v4726 = vpop.f32.mrb[0].mxu0
    %v4727 = vadd.f32 0.0, %v4726
    %v4728 = vpop.f32.mrb[0].mxu0
    %v4729 = vpop.f32.mrb[0].mxu0
    %v4730 = vadd.f32 0.0, %v4729
    %v4731 = vpop.f32.mrb[0].mxu0
    %4732 = vmatprep.mubr.bf16.mxu0 0
    %4733 = vmatmul.mubr.bf16.gmra.mrb[0].mxu0 %v4477
    %v4734 = vpop.f32.mrb[0].mxu0
    %v4735 = vadd.f32 0.0, %v4734
    %v4736 = vpop.f32.mrb[0].mxu0
    %v4737 = vpop.f32.mrb[0].mxu0
    %v4738 = vadd.f32 0.0, %v4737
    %v4739 = vpop.f32.mrb[0].mxu0
    %4740 = vmatprep.mubr.bf16.mxu0 0
    %4741 = vmatmul.mubr.bf16.gmra.mrb[0].mxu0 %v4480
    %v4742 = vpop.f32.mrb[0].mxu0
    %v4743 = vadd.f32 0.0, %v4742
    %v4744 = vpop.f32.mrb[0].mxu0
    %v4745 = vpop.f32.mrb[0].mxu0
    %v4746 = vadd.f32 0.0, %v4745
    %v4747 = vpop.f32.mrb[0].mxu0
    %4748 = vmatprep.mubr.bf16.mxu0 0
    %4749 = vmatmul.mubr.bf16.gmra.mrb[0].mxu0 %v4483
    %v4750 = vpop.f32.mrb[0].mxu0
    %v4751 = vadd.f32 0.0, %v4750
    %v4752 = vpop.f32.mrb[0].mxu0
    %v4753 = vpop.f32.mrb[0].mxu0
    %v4754 = vadd.f32 0.0, %v4753
    %v4755 = vpop.f32.mrb[0].mxu0
    %4756 = vmatprep.mubr.bf16.mxu0 0
    %4757 = vmatmul.mubr.bf16.gmra.mrb[0].mxu0 %v4486
    %v4758 = vpop.f32.mrb[0].mxu0
    %v4759 = vadd.f32 0.0, %v4758
    %v4760 = vpop.f32.mrb[0].mxu0
    %v4761 = vpop.f32.mrb[0].mxu0
    %v4762 = vadd.f32 0.0, %v4761
    %v4763 = vpop.f32.mrb[0].mxu0
    %4764 = vmatprep.mubr.bf16.mxu0 0
    %4765 = vmatmul.mubr.bf16.gmra.mrb[0].mxu0 %v4489
    %v4766 = vpop.f32.mrb[0].mxu0
    %v4767 = vadd.f32 0.0, %v4766
    %v4768 = vpop.f32.mrb[0].mxu0
    %v4769 = vpop.f32.mrb[0].mxu0
    %v4770 = vadd.f32 0.0, %v4769
    %v4771 = vpop.f32.mrb[0].mxu0
    %4772 = vmatprep.mubr.bf16.mxu0 0
    %4773 = vmatmul.mubr.bf16.gmra.mrb[0].mxu0 %v4492
    %v4774 = vpop.f32.mrb[0].mxu0
    %v4775 = vadd.f32 0.0, %v4774
    %v4776 = vpop.f32.mrb[0].mxu0
    %v4777 = vpop.f32.mrb[0].mxu0
    %v4778 = vadd.f32 0.0, %v4777
    %v4779 = vpop.f32.mrb[0].mxu0
    %4780 = vmatprep.mubr.bf16.mxu0 0
    %4781 = vmatmul.mubr.bf16.gmra.mrb[0].mxu0 %v4495
    %v4782 = vpop.f32.mrb[0].mxu0
    %v4783 = vadd.f32 0.0, %v4782
    %v4784 = vpop.f32.mrb[0].mxu0
    %v4785 = vpop.f32.mrb[0].mxu0
    %v4786 = vadd.f32 0.0, %v4785
    %v4787 = vpop.f32.mrb[0].mxu0
    %4788 = vdwg.mxu0
    %v4789 = vadd.f32 %v4239, %v4535
    %v4790 = vadd.f32 %v4240, %v4538
    %v4791 = vadd.f32 %v4241, %v4543
    %v4792 = vadd.f32 %v4242, %v4546
    %v4793 = vadd.f32 %v4243, %v4551
    %v4794 = vadd.f32 %v4244, %v4554
    %v4795 = vadd.f32 %v4245, %v4559
    %v4796 = vadd.f32 %v4246, %v4562
    %v4797 = vadd.f32 %v4247, %v4567
    %v4798 = vadd.f32 %v4248, %v4570
    %v4799 = vadd.f32 %v4249, %v4575
    %v4800 = vadd.f32 %v4250, %v4578
    %v4801 = vadd.f32 %v4251, %v4583
    %v4802 = vadd.f32 %v4252, %v4586
    %v4803 = vadd.f32 %v4253, %v4591
    %v4804 = vadd.f32 %v4254, %v4594
    %v4805 = vadd.f32 %v4255, %v4599
    %v4806 = vadd.f32 %v4256, %v4602
    %v4807 = vadd.f32 %v4257, %v4607
    %v4808 = vadd.f32 %v4258, %v4610
    %v4809 = vadd.f32 %v4259, %v4615
    %v4810 = vadd.f32 %v4260, %v4618
    %v4811 = vadd.f32 %v4261, %v4623
    %v4812 = vadd.f32 %v4262, %v4626
    %v4813 = vadd.f32 %v4263, %v4631
    %v4814 = vadd.f32 %v4264, %v4634
    %v4815 = vadd.f32 %v4265, %v4639
    %v4816 = vadd.f32 %v4266, %v4642
    %v4817 = vadd.f32 %v4267, %v4647
    %v4818 = vadd.f32 %v4268, %v4650
    %v4819 = vadd.f32 %v4269, %v4655
    %v4820 = vadd.f32 %v4270, %v4658
    %v4821 = vadd.f32 %v4271, %v4663
    %v4822 = vadd.f32 %v4272, %v4666
    %v4823 = vadd.f32 %v4273, %v4671
    %v4824 = vadd.f32 %v4274, %v4674
    %v4825 = vadd.f32 %v4275, %v4679
    %v4826 = vadd.f32 %v4276, %v4682
    %v4827 = vadd.f32 %v4277, %v4687
    %v4828 = vadd.f32 %v4278, %v4690
    %v4829 = vadd.f32 %v4279, %v4695
    %v4830 = vadd.f32 %v4280, %v4698
    %v4831 = vadd.f32 %v4281, %v4703
    %v4832 = vadd.f32 %v4282, %v4706
    %v4833 = vadd.f32 %v4283, %v4711
    %v4834 = vadd.f32 %v4284, %v4714
    %v4835 = vadd.f32 %v4285, %v4719
    %v4836 = vadd.f32 %v4286, %v4722
    %v4837 = vadd.f32 %v4287, %v4727
    %v4838 = vadd.f32 %v4288, %v4730
    %v4839 = vadd.f32 %v4289, %v4735
    %v4840 = vadd.f32 %v4290, %v4738
    %v4841 = vadd.f32 %v4291, %v4743
    %v4842 = vadd.f32 %v4292, %v4746
    %v4843 = vadd.f32 %v4293, %v4751
    %v4844 = vadd.f32 %v4294, %v4754
    %v4845 = vadd.f32 %v4295, %v4759
    %v4846 = vadd.f32 %v4296, %v4762
    %v4847 = vadd.f32 %v4297, %v4767
    %v4848 = vadd.f32 %v4298, %v4770
    %v4849 = vadd.f32 %v4299, %v4775
    %v4850 = vadd.f32 %v4300, %v4778
    %v4851 = vadd.f32 %v4301, %v4783
    %v4852 = vadd.f32 %v4302, %v4786
    %v4853 = vld [vmem:[%s2] sm:$0x1]
    %v4855 = vlaneseq
    %v4856 = vshrl.u32 %v4855, 7
    %v4857 = vsub.s32 0, %v4856
    %v4858 = vrot.slane %v4853, %v4857
    %v4860 = vadd.f32 %v4789, %v4858
    %v4861 = vadd.f32 %v4790, %v4858
    %v4862 = vadd.f32 %v4791, %v4858
    %v4863 = vadd.f32 %v4792, %v4858
    %v4864 = vadd.f32 %v4793, %v4858
    %v4865 = vadd.f32 %v4794, %v4858
    %v4866 = vadd.f32 %v4795, %v4858
    %v4867 = vadd.f32 %v4796, %v4858
    %v4868 = vadd.f32 %v4797, %v4858
    %v4869 = vadd.f32 %v4798, %v4858
    %v4870 = vadd.f32 %v4799, %v4858
    %v4871 = vadd.f32 %v4800, %v4858
    %v4872 = vadd.f32 %v4801, %v4858
    %v4873 = vadd.f32 %v4802, %v4858
    %v4874 = vadd.f32 %v4803, %v4858
    %v4875 = vadd.f32 %v4804, %v4858
    %v4876 = vadd.f32 %v4805, %v4858
    %v4877 = vadd.f32 %v4806, %v4858
    %v4878 = vadd.f32 %v4807, %v4858
    %v4879 = vadd.f32 %v4808, %v4858
    %v4880 = vadd.f32 %v4809, %v4858
    %v4881 = vadd.f32 %v4810, %v4858
    %v4882 = vadd.f32 %v4811, %v4858
    %v4883 = vadd.f32 %v4812, %v4858
    %v4884 = vadd.f32 %v4813, %v4858
    %v4885 = vadd.f32 %v4814, %v4858
    %v4886 = vadd.f32 %v4815, %v4858
    %v4887 = vadd.f32 %v4816, %v4858
    %v4888 = vadd.f32 %v4817, %v4858
    %v4889 = vadd.f32 %v4818, %v4858
    %v4890 = vadd.f32 %v4819, %v4858
    %v4891 = vadd.f32 %v4820, %v4858
    %v4892 = vadd.f32 %v4821, %v4858
    %v4893 = vadd.f32 %v4822, %v4858
    %v4894 = vadd.f32 %v4823, %v4858
    %v4895 = vadd.f32 %v4824, %v4858
    %v4896 = vadd.f32 %v4825, %v4858
    %v4897 = vadd.f32 %v4826, %v4858
    %v4898 = vadd.f32 %v4827, %v4858
    %v4899 = vadd.f32 %v4828, %v4858
    %v4900 = vadd.f32 %v4829, %v4858
    %v4901 = vadd.f32 %v4830, %v4858
    %v4902 = vadd.f32 %v4831, %v4858
    %v4903 = vadd.f32 %v4832, %v4858
    %v4904 = vadd.f32 %v4833, %v4858
    %v4905 = vadd.f32 %v4834, %v4858
    %v4906 = vadd.f32 %v4835, %v4858
    %v4907 = vadd.f32 %v4836, %v4858
    %v4908 = vadd.f32 %v4837, %v4858
    %v4909 = vadd.f32 %v4838, %v4858
    %v4910 = vadd.f32 %v4839, %v4858
    %v4911 = vadd.f32 %v4840, %v4858
    %v4912 = vadd.f32 %v4841, %v4858
    %v4913 = vadd.f32 %v4842, %v4858
    %v4914 = vadd.f32 %v4843, %v4858
    %v4915 = vadd.f32 %v4844, %v4858
    %v4916 = vadd.f32 %v4845, %v4858
    %v4917 = vadd.f32 %v4846, %v4858
    %v4918 = vadd.f32 %v4847, %v4858
    %v4919 = vadd.f32 %v4848, %v4858
    %v4920 = vadd.f32 %v4849, %v4858
    %v4921 = vadd.f32 %v4850, %v4858
    %v4922 = vadd.f32 %v4851, %v4858
    %v4923 = vadd.f32 %v4852, %v4858
    %v4924 = vmax.f32 %v4860, 0.0
    %v4925 = vmax.f32 %v4861, 0.0
    %v4926 = vmax.f32 %v4862, 0.0
    %v4927 = vmax.f32 %v4863, 0.0
    %v4928 = vmax.f32 %v4864, 0.0
    %v4929 = vmax.f32 %v4865, 0.0
    %v4930 = vmax.f32 %v4866, 0.0
    %v4931 = vmax.f32 %v4867, 0.0
    %v4932 = vmax.f32 %v4868, 0.0
    %v4933 = vmax.f32 %v4869, 0.0
    %v4934 = vmax.f32 %v4870, 0.0
    %v4935 = vmax.f32 %v4871, 0.0
    %v4936 = vmax.f32 %v4872, 0.0
    %v4937 = vmax.f32 %v4873, 0.0
    %v4938 = vmax.f32 %v4874, 0.0
    %v4939 = vmax.f32 %v4875, 0.0
    %v4940 = vmax.f32 %v4876, 0.0
    %v4941 = vmax.f32 %v4877, 0.0
    %v4942 = vmax.f32 %v4878, 0.0
    %v4943 = vmax.f32 %v4879, 0.0
    %v4944 = vmax.f32 %v4880, 0.0
    %v4945 = vmax.f32 %v4881, 0.0
    %v4946 = vmax.f32 %v4882, 0.0
    %v4947 = vmax.f32 %v4883, 0.0
    %v4948 = vmax.f32 %v4884, 0.0
    %v4949 = vmax.f32 %v4885, 0.0
    %v4950 = vmax.f32 %v4886, 0.0
    %v4951 = vmax.f32 %v4887, 0.0
    %v4952 = vmax.f32 %v4888, 0.0
    %v4953 = vmax.f32 %v4889, 0.0
    %v4954 = vmax.f32 %v4890, 0.0
    %v4955 = vmax.f32 %v4891, 0.0
    %v4956 = vmax.f32 %v4892, 0.0
    %v4957 = vmax.f32 %v4893, 0.0
    %v4958 = vmax.f32 %v4894, 0.0
    %v4959 = vmax.f32 %v4895, 0.0
    %v4960 = vmax.f32 %v4896, 0.0
    %v4961 = vmax.f32 %v4897, 0.0
    %v4962 = vmax.f32 %v4898, 0.0
    %v4963 = vmax.f32 %v4899, 0.0
    %v4964 = vmax.f32 %v4900, 0.0
    %v4965 = vmax.f32 %v4901, 0.0
    %v4966 = vmax.f32 %v4902, 0.0
    %v4967 = vmax.f32 %v4903, 0.0
    %v4968 = vmax.f32 %v4904, 0.0
    %v4969 = vmax.f32 %v4905, 0.0
    %v4970 = vmax.f32 %v4906, 0.0
    %v4971 = vmax.f32 %v4907, 0.0
    %v4972 = vmax.f32 %v4908, 0.0
    %v4973 = vmax.f32 %v4909, 0.0
    %v4974 = vmax.f32 %v4910, 0.0
    %v4975 = vmax.f32 %v4911, 0.0
    %v4976 = vmax.f32 %v4912, 0.0
    %v4977 = vmax.f32 %v4913, 0.0
    %v4978 = vmax.f32 %v4914, 0.0
    %v4979 = vmax.f32 %v4915, 0.0
    %v4980 = vmax.f32 %v4916, 0.0
    %v4981 = vmax.f32 %v4917, 0.0
    %v4982 = vmax.f32 %v4918, 0.0
    %v4983 = vmax.f32 %v4919, 0.0
    %v4984 = vmax.f32 %v4920, 0.0
    %v4985 = vmax.f32 %v4921, 0.0
    %v4986 = vmax.f32 %v4922, 0.0
    %v4987 = vmax.f32 %v4923, 0.0
    %v4988 = vlaneseq
    %v4989 = vshrl.u32 %v4988, 7
    %v4990 = vlaneseq
    %v4991 = vand.u32 %v4990, 127
    %v4992 = vadd.s32 %v4991, 128
    %v4993 = vadd.s32 %v4991, 256
    %v4994 = vadd.s32 %v4991, 384
    %v4995 = vmul.u32 %v4989, 256
    %vm4996 = vcmp.ge.s32.totalorder %v4991, %v4995
    %vm4997 = vcmp.ge.s32.totalorder %v4992, %v4995
    %vm4998 = vcmp.ge.s32.totalorder %v4993, %v4995
    %vm4999 = vcmp.ge.s32.totalorder %v4994, %v4995
    %v5000 = vadd.s32 %v4995, 256
    %vm5001 = vcmp.lt.s32.totalorder %v4991, %v5000
    %vm5002 = vcmp.lt.s32.totalorder %v4992, %v5000
    %vm5003 = vcmp.lt.s32.totalorder %v4993, %v5000
    %vm5004 = vcmp.lt.s32.totalorder %v4994, %v5000
    %vm5005 = vmand %vm4996, %vm5001
    %vm5006 = vmand %vm4997, %vm5002
    %vm5007 = vmand %vm4998, %vm5003
    %vm5008 = vmand %vm4999, %vm5004
    %v5009 = vsel %vm5005, 0.00390625, 0.0
    %v5010 = vsel %vm5006, 0.00390625, 0.0
    %v5011 = vsel %vm5007, 0.00390625, 0.0
    %v5012 = vsel %vm5008, 0.00390625, 0.0
    %v5013 = vpack.c.bf16 %v5009, %v5009
    %v5014 = vpack.c.bf16 %v5010, %v5010
    %v5015 = vpack.c.bf16 %v5011, %v5011
    %v5016 = vpack.c.bf16 %v5012, %v5012
    %v5017 = vpack.c.bf16 %v4925, %v4924
    %v5018 = vpack.c.bf16 %v4927, %v4926
    %v5019 = vpack.c.bf16 %v4929, %v4928
    %v5020 = vpack.c.bf16 %v4931, %v4930
    %v5021 = vpack.c.bf16 %v4933, %v4932
    %v5022 = vpack.c.bf16 %v4935, %v4934
    %v5023 = vpack.c.bf16 %v4937, %v4936
    %v5024 = vpack.c.bf16 %v4939, %v4938
    %v5025 = vpack.c.bf16 %v4941, %v4940
    %v5026 = vpack.c.bf16 %v4943, %v4942
    %v5027 = vpack.c.bf16 %v4945, %v4944
    %v5028 = vpack.c.bf16 %v4947, %v4946
    %v5029 = vpack.c.bf16 %v4949, %v4948
    %v5030 = vpack.c.bf16 %v4951, %v4950
    %v5031 = vpack.c.bf16 %v4953, %v4952
    %v5032 = vpack.c.bf16 %v4955, %v4954
    %v5033 = vpack.c.bf16 %v4957, %v4956
    %v5034 = vpack.c.bf16 %v4959, %v4958
    %v5035 = vpack.c.bf16 %v4961, %v4960
    %v5036 = vpack.c.bf16 %v4963, %v4962
    %v5037 = vpack.c.bf16 %v4965, %v4964
    %v5038 = vpack.c.bf16 %v4967, %v4966
    %v5039 = vpack.c.bf16 %v4969, %v4968
    %v5040 = vpack.c.bf16 %v4971, %v4970
    %v5041 = vpack.c.bf16 %v4973, %v4972
    %v5042 = vpack.c.bf16 %v4975, %v4974
    %v5043 = vpack.c.bf16 %v4977, %v4976
    %v5044 = vpack.c.bf16 %v4979, %v4978
    %v5045 = vpack.c.bf16 %v4981, %v4980
    %v5046 = vpack.c.bf16 %v4983, %v4982
    %v5047 = vpack.c.bf16 %v4985, %v4984
    %v5048 = vpack.c.bf16 %v4987, %v4986
    %5049 = vmatprep.subr.bf16.mxu0 0
    %5050 = vmatpush1.bf16.msra.mxu0 %v5017
    %5051 = vmatprep.subr.bf16.mxu0 0
    %5052 = vmatpush1.bf16.msra.mxu0 %v5018
    %5053 = vmatprep.subr.bf16.mxu0 0
    %5054 = vmatpush1.bf16.msra.mxu0 %v5019
    %5055 = vmatprep.subr.bf16.mxu0 0
    %5056 = vmatpush1.bf16.msra.mxu0 %v5020
    %5057 = vmatprep.subr.bf16.mxu0 0
    %5058 = vmatpush1.bf16.msra.mxu0 %v5021
    %5059 = vmatprep.subr.bf16.mxu0 0
    %5060 = vmatpush1.bf16.msra.mxu0 %v5022
    %5061 = vmatprep.subr.bf16.mxu0 0
    %5062 = vmatpush1.bf16.msra.mxu0 %v5023
    %5063 = vmatprep.subr.bf16.mxu0 0
    %5064 = vmatpush1.bf16.msra.mxu0 %v5024
    %5065 = vmatprep.subr.bf16.mxu0 0
    %5066 = vmatpush1.bf16.msra.mxu0 %v5025
    %5067 = vmatprep.subr.bf16.mxu0 0
    %5068 = vmatpush1.bf16.msra.mxu0 %v5026
    %5069 = vmatprep.subr.bf16.mxu0 0
    %5070 = vmatpush1.bf16.msra.mxu0 %v5027
    %5071 = vmatprep.subr.bf16.mxu0 0
    %5072 = vmatpush1.bf16.msra.mxu0 %v5028
    %5073 = vmatprep.subr.bf16.mxu0 0
    %5074 = vmatpush1.bf16.msra.mxu0 %v5029
    %5075 = vmatprep.subr.bf16.mxu0 0
    %5076 = vmatpush1.bf16.msra.mxu0 %v5030
    %5077 = vmatprep.subr.bf16.mxu0 0
    %5078 = vmatpush1.bf16.msra.mxu0 %v5031
    %5079 = vmatprep.subr.bf16.mxu0 0
    %5080 = vmatpush1.bf16.msra.mxu0 %v5032
    %5081 = vmatprep.mubr.bf16.mxu0 %v5014
    %5082 = vmatmul.mubr.bf16.gmra.mrb[0].mxu0 %v5013
    %v5083 = vpop.f32.mrb[0].mxu0
    %v5084 = vadd.f32 0.0, %v5083
    %v5085 = vpop.f32.mrb[0].mxu0
    %v5086 = vpop.f32.mrb[0].mxu0
    %v5087 = vpop.f32.mrb[0].mxu0
    %5088 = vdwg.mxu0
    %5089 = vmatprep.subr.bf16.mxu0 0
    %5090 = vmatpush1.bf16.msra.mxu0 %v5033
    %5091 = vmatprep.subr.bf16.mxu0 0
    %5092 = vmatpush1.bf16.msra.mxu0 %v5034
    %5093 = vmatprep.subr.bf16.mxu0 0
    %5094 = vmatpush1.bf16.msra.mxu0 %v5035
    %5095 = vmatprep.subr.bf16.mxu0 0
    %5096 = vmatpush1.bf16.msra.mxu0 %v5036
    %5097 = vmatprep.subr.bf16.mxu0 0
    %5098 = vmatpush1.bf16.msra.mxu0 %v5037
    %5099 = vmatprep.subr.bf16.mxu0 0
    %5100 = vmatpush1.bf16.msra.mxu0 %v5038
    %5101 = vmatprep.subr.bf16.mxu0 0
    %5102 = vmatpush1.bf16.msra.mxu0 %v5039
    %5103 = vmatprep.subr.bf16.mxu0 0
    %5104 = vmatpush1.bf16.msra.mxu0 %v5040
    %5105 = vmatprep.subr.bf16.mxu0 0
    %5106 = vmatpush1.bf16.msra.mxu0 %v5041
    %5107 = vmatprep.subr.bf16.mxu0 0
    %5108 = vmatpush1.bf16.msra.mxu0 %v5042
    %5109 = vmatprep.subr.bf16.mxu0 0
    %5110 = vmatpush1.bf16.msra.mxu0 %v5043
    %5111 = vmatprep.subr.bf16.mxu0 0
    %5112 = vmatpush1.bf16.msra.mxu0 %v5044
    %5113 = vmatprep.subr.bf16.mxu0 0
    %5114 = vmatpush1.bf16.msra.mxu0 %v5045
    %5115 = vmatprep.subr.bf16.mxu0 0
    %5116 = vmatpush1.bf16.msra.mxu0 %v5046
    %5117 = vmatprep.subr.bf16.mxu0 0
    %5118 = vmatpush1.bf16.msra.mxu0 %v5047
    %5119 = vmatprep.subr.bf16.mxu0 0
    %5120 = vmatpush1.bf16.msra.mxu0 %v5048
    %5121 = vmatprep.mubr.bf16.mxu0 %v5016
    %5122 = vmatmul.mubr.bf16.gmra.mrb[0].mxu0 %v5015
    %v5123 = vpop.f32.mrb[0].mxu0
    %v5124 = vadd.f32 %v5084, %v5123
    %v5125 = vpop.f32.mrb[0].mxu0
    %v5126 = vpop.f32.mrb[0].mxu0
    %v5127 = vpop.f32.mrb[0].mxu0
    %5128 = vdwg.mxu0
    %v5129 = vpack.c.bf16 %v5124, %v5124
    %v5130 = vld [vmem:[%s3] sm:$0xf]
    %v5131 = vld [vmem:[%s3 + $0x4] sm:$0xf]
    %v5132 = vld [vmem:[%s3 + $0x8] sm:$0xf]
    %v5133 = vld [vmem:[%s3 + $0xc] sm:$0xf]
    %v5134 = vld [vmem:[%s4] sm:$0x1]
    %v5136 = vlaneseq
    %v5137 = vshrl.u32 %v5136, 7
    %v5138 = vsub.s32 0, %v5137
    %v5139 = vrot.slane %v5134, %v5138
    %v5145 = vunpack.c.l.b16 %v5130
    %v5146 = vunpack.c.l.b16 %v5131
    %v5147 = vunpack.c.l.b16 %v5132
    %v5148 = vunpack.c.l.b16 %v5133
    %v5149 = vpack.c.b16 %v5146, %v5145
    %v5150 = vpack.c.b16 %v5148, %v5147
    %vm5153 = vcmask 261120
    %v5155 = vsel %vm5153, %v5129, 0
    %5157 = vmatprep.subr.bf16.mxu0 0
    %5158 = vmatpush1.bf16.msra.mxu0 %v5149
    %5159 = vmatprep.subr.bf16.mxu0 0
    %5160 = vmatpush1.bf16.msra.mxu0 %v5150
    %5161 = vmatprep.subr.bf16.mxu0 0
    %5162 = vmatpush1.bf16.msra.mxu0 0
    %5163 = vmatprep.subr.bf16.mxu0 0
    %5164 = vmatpush1.bf16.msra.mxu0 0
    %5165 = vmatprep.subr.bf16.mxu0 0
    %5166 = vmatpush1.bf16.msra.mxu0 0
    %5167 = vmatprep.subr.bf16.mxu0 0
    %5168 = vmatpush1.bf16.msra.mxu0 0
    %5169 = vmatprep.subr.bf16.mxu0 0
    %5170 = vmatpush1.bf16.msra.mxu0 0
    %5171 = vmatprep.subr.bf16.mxu0 0
    %5172 = vmatpush1.bf16.msra.mxu0 0
    %5173 = vmatprep.subr.bf16.mxu0 0
    %5174 = vmatpush1.bf16.msra.mxu0 0
    %5175 = vmatprep.subr.bf16.mxu0 0
    %5176 = vmatpush1.bf16.msra.mxu0 0
    %5177 = vmatprep.subr.bf16.mxu0 0
    %5178 = vmatpush1.bf16.msra.mxu0 0
    %5179 = vmatprep.subr.bf16.mxu0 0
    %5180 = vmatpush1.bf16.msra.mxu0 0
    %5181 = vmatprep.subr.bf16.mxu0 0
    %5182 = vmatpush1.bf16.msra.mxu0 0
    %5183 = vmatprep.subr.bf16.mxu0 0
    %5184 = vmatpush1.bf16.msra.mxu0 0
    %5185 = vmatprep.subr.bf16.mxu0 0
    %5186 = vmatpush1.bf16.msra.mxu0 0
    %5187 = vmatprep.subr.bf16.mxu0 0
    %5188 = vmatpush1.bf16.msra.mxu0 0
    %5189 = vmatprep.mubr.bf16.mxu0 0
    %5190 = vmatmul.mubr.bf16.gmra.mrb[0].mxu0 %v5155
    %v5191 = vpop.f32.mrb[0].mxu0
    %v5192 = vadd.f32 %v5139, %v5191
    %v5193 = vpop.f32.mrb[0].mxu0
    %v5194 = vpop.f32.mrb[0].mxu0
    %v5195 = vpop.f32.mrb[0].mxu0
    %5196 = vdwg.mxu0
    %v5197 = vmax.f32 %v5192, 0.0
    %v5198 = vpack.c.bf16 %v5197, %v5197
    %v5199 = vld [vmem:[%s5] sm:$0xf]
    %v5200 = vld [vmem:[%s5 + $0x4] sm:$0xf]
    %v5201 = vld [vmem:[%s5 + $0x8] sm:$0xf]
    %v5202 = vld [vmem:[%s5 + $0xc] sm:$0xf]
    %v5203 = vld [vmem:[%s6] sm:$0x1]
    %v5205 = vlaneseq
    %v5206 = vshrl.u32 %v5205, 7
    %v5207 = vsub.s32 0, %v5206
    %v5208 = vrot.slane %v5203, %v5207
    %v5214 = vunpack.c.l.b16 %v5199
    %v5215 = vunpack.c.l.b16 %v5200
    %v5216 = vunpack.c.l.b16 %v5201
    %v5217 = vunpack.c.l.b16 %v5202
    %v5218 = vpack.c.b16 %v5215, %v5214
    %v5219 = vpack.c.b16 %v5217, %v5216
    %v5223 = vsel %vm5153, %v5198, 0
    %5225 = vmatprep.subr.bf16.mxu0 0
    %5226 = vmatpush1.bf16.msra.mxu0 %v5218
    %5227 = vmatprep.subr.bf16.mxu0 0
    %5228 = vmatpush1.bf16.msra.mxu0 %v5219
    %5229 = vmatprep.subr.bf16.mxu0 0
    %5230 = vmatpush1.bf16.msra.mxu0 0
    %5231 = vmatprep.subr.bf16.mxu0 0
    %5232 = vmatpush1.bf16.msra.mxu0 0
    %5233 = vmatprep.subr.bf16.mxu0 0
    %5234 = vmatpush1.bf16.msra.mxu0 0
    %5235 = vmatprep.subr.bf16.mxu0 0
    %5236 = vmatpush1.bf16.msra.mxu0 0
    %5237 = vmatprep.subr.bf16.mxu0 0
    %5238 = vmatpush1.bf16.msra.mxu0 0
    %5239 = vmatprep.subr.bf16.mxu0 0
    %5240 = vmatpush1.bf16.msra.mxu0 0
    %5241 = vmatprep.subr.bf16.mxu0 0
    %5242 = vmatpush1.bf16.msra.mxu0 0
    %5243 = vmatprep.subr.bf16.mxu0 0
    %5244 = vmatpush1.bf16.msra.mxu0 0
    %5245 = vmatprep.subr.bf16.mxu0 0
    %5246 = vmatpush1.bf16.msra.mxu0 0
    %5247 = vmatprep.subr.bf16.mxu0 0
    %5248 = vmatpush1.bf16.msra.mxu0 0
    %5249 = vmatprep.subr.bf16.mxu0 0
    %5250 = vmatpush1.bf16.msra.mxu0 0
    %5251 = vmatprep.subr.bf16.mxu0 0
    %5252 = vmatpush1.bf16.msra.mxu0 0
    %5253 = vmatprep.subr.bf16.mxu0 0
    %5254 = vmatpush1.bf16.msra.mxu0 0
    %5255 = vmatprep.subr.bf16.mxu0 0
    %5256 = vmatpush1.bf16.msra.mxu0 0
    %5257 = vmatprep.mubr.bf16.mxu0 0
    %5258 = vmatmul.mubr.bf16.gmra.mrb[0].mxu0 %v5223
    %v5259 = vpop.f32.mrb[0].mxu0
    %v5260 = vadd.f32 %v5208, %v5259
    %v5261 = vpop.f32.mrb[0].mxu0
    %v5262 = vpop.f32.mrb[0].mxu0
    %v5263 = vpop.f32.mrb[0].mxu0
    %5264 = vdwg.mxu0
    %v5265 = vmul.f32 %v5260, %v5260
    %v5266 = vsel %vm320, %v5265, 0.0
    %5267 = vadd.xlane.f32.xlu0 %v5266
    %v5268 = vpop.xlane.xlu0 %5267
    %v5269 = vmax.f32 %v5268, 1e-24
    %v5270 = vrsqrt.pop %v5269
    %v5271 = vmul.f32 %v5260, %v5270
    %5272 = vst [vmem:[#allocation2] sm:$0x3] %v5271
    // Predicated region
    $region30: #{tpu_custom_call.1} parent=1 // pred_check
      _
    $region31: #{tpu_custom_call.1} parent=1 // pred_check_branch
      %5274 = sbr.rel (0) target = $region33
    $region32: #{tpu_custom_call.1} parent=1 // pred_region
      %s5276 = ssub.s32 32, 32
      %5277 = vsyncadd [#allocation3], %s5276
      %s5279 = sshll.u32 [#allocation2], 4
      %s5280 = int_to_ptr.vmem [resolvable:$true] %s5279
      %5282 = dma.vmem_to_hbm [thread:$0]  %s5280, 32, %s7, [#allocation3]
    $region33: #{tpu_custom_call.1} parent=1 // pred_fallthru
      _
    // Predicated region
    $region34: #{tpu_custom_call.1} parent=1 // pred_check
      _
    $region35: #{tpu_custom_call.1} parent=1 // pred_check_branch
      %5284 = sbr.rel (0) target = $region37
    $region36: #{tpu_custom_call.1} parent=1 // pred_region
      %5285 = dma.done [#allocation3], 32
    $region37: #{tpu_custom_call.1} parent=1 // pred_fallthru
      _
    %5286 = vsyncpa [#allocation3], 1

</llo_original>
